<compile_context>
chip_gen: v7x
topology: tpu7x:2x2x1
jax: 0.10.0
libtpu: 0.0.40
codegen_flags: <defaults>
</compile_context>

<pallas_src>
import functools
import math

import jax
import jax.numpy as jnp
from jax.experimental import pallas as pl
from jax.experimental.pallas import tpu as pltpu

_LN_EPS = 1e-5
_SQRT1_2 = 0.7071067811865476


def _erf(z, recip):
    # Abramowitz & Stegun 7.1.26 rational approximation, |error| <= 1.5e-7.
    a1, a2, a3, a4, a5 = (0.254829592, -0.284496736, 1.421413741,
                          -1.453152027, 1.061405429)
    p = 0.3275911
    sgn = jnp.where(z >= 0.0, 1.0, -1.0)
    az = jnp.abs(z)
    t = recip(1.0 + p * az)
    poly = ((((a5 * t + a4) * t + a3) * t + a2) * t + a1) * t
    return sgn * (1.0 - poly * jnp.exp(-az * az))


def _gelu(x, recip=lambda v: 1.0 / v):
    # Exact (erf) GELU, matching PyTorch nn.GELU() default.
    return 0.5 * x * (1.0 + _erf(x * _SQRT1_2, recip))


def _layernorm(x, gamma, beta):
    # Single-pass statistics: one lane-reduce pass for sum and sum-of-squares.
    inv_n = 1.0 / x.shape[-1]
    s1 = jnp.sum(x, axis=-1, keepdims=True)
    s2 = jnp.sum(x * x, axis=-1, keepdims=True)
    mu = s1 * inv_n
    var = s2 * inv_n - mu * mu
    return (x - mu) * jax.lax.rsqrt(var + _LN_EPS) * gamma + beta


def _mixer_block_kernel(x_ref, g1_ref, be1_ref, w1_ref, b1_ref, w2_ref, b2_ref,
                        g2_ref, be2_ref, w3_ref, b3_ref, w4_ref, b4_ref, o_ref,
                        *, mm_dtype):
    BB, S, C = x_ref.shape
    recip = lambda v: pl.reciprocal(v, approx=True)   # EUP slot, off the VPU

    # Load the batch block once; all further work stays in VMEM/vregs.
    x = x_ref[...].astype(jnp.float32)                         # (BB, S, C)
    # TODO(synk): if x is bf16, only upcast inside the LN stats to save VMEM.

    # ---- LayerNorm 1 (over channels), f32 ----
    n1 = _layernorm(x, g1_ref[...], be1_ref[...])              # (BB, S, C)
    n1_mm = n1.astype(mm_dtype)

    w1 = w1_ref[...]                                           # (4S, S)  mm_dtype
    w2 = w2_ref[...]                                           # (S, 4S)  mm_dtype
    b1 = b1_ref[...]                                           # (4S, 1)  f32
    b2 = b2_ref[...]                                           # (S, 1)   f32

    # ---- token (patch) mixing MLP, weight-stationary: C stays in lanes ----
    x1_rows = []
    for b in range(BB):                       # BB is a small static constant
        h = jnp.dot(w1, n1_mm[b], preferred_element_type=jnp.float32)   # (4S, C)
        h = _gelu(h + b1, recip)
        t = jnp.dot(w2, h.astype(mm_dtype),
                    preferred_element_type=jnp.float32)                 # (S, C)
        x1_rows.append(x[b] + t + b2)                                   # residual 1
    x1 = jnp.concatenate(x1_rows, axis=0)                      # (BB*S, C) f32

    # ---- LayerNorm 2 (over channels), f32 ----
    n2 = _layernorm(x1, g2_ref[...], be2_ref[...])             # (BB*S, C)

    # ---- channel mixing MLP, stacked-M over all BB*S rows ----
    h2 = jnp.dot(n2.astype(mm_dtype), w3_ref[...],
                 preferred_element_type=jnp.float32) + b3_ref[...]      # (BB*S, 4C)
    h2 = _gelu(h2, recip)
    t2 = jnp.dot(h2.astype(mm_dtype), w4_ref[...],
                 preferred_element_type=jnp.float32) + b4_ref[...]      # (BB*S, C)

    o_ref[...] = (x1 + t2).reshape(BB, S, C).astype(o_ref.dtype)        # residual 2


def _device_vmem_budget(frac=0.8, default_cap=128 * 1024 * 1024):
    """~80% of this chip's physical VMEM (v5e/v6e: 128 MiB, v7x: 64 MiB)."""
    cap = default_cap
    try:
        info = pltpu.get_tpu_info()
        for attr in ("vmem_capacity_bytes", "vmem_size_bytes", "vmem_bytes"):
            v = getattr(info, attr, None)
            if v:
                cap = int(v)
                break
    except Exception:
        pass
    return int(cap * frac)


def _pick_batch_block(B, S, C, H1, H2, x_bytes, w_bytes, budget,
                      max_batch_block=32):
    """Largest divisor of B whose per-step working set fits the VMEM budget."""
    # Resident weights + biases, charged at 2x (worst case: double-buffered).
    weight_bytes = 2 * (w_bytes * (H1 * S + S * H1 + C * H2 + H2 * C)
                        + 4 * (H1 + S + H2 + 5 * C))
    avail = max(budget - weight_bytes, 0)
    per_sample = (
        2 * 2 * S * C * x_bytes          # in/out blocks, double-buffered
        + 10 * 4 * S * C                 # f32 copies: x, n1, x1, n2, t2, slack
        + 3 * w_bytes * S * C            # mm-dtype activation copies
        + (4 + w_bytes) * S * H2         # channel-mix hidden (f32 + mm dtype)
        + (4 + w_bytes) * C * H1         # token-mix hidden, one sample at a time
    )
    bb = max(1, min(B, max_batch_block, avail // max(per_sample, 1)))
    # Keep the 1-D "parallel" grid >= 2 so v7x's two TensorCores both get work.
    if B >= 2:
        bb = min(bb, B // 2)
    bb = max(bb, 1)
    while B % bb:
        bb -= 1
    # Prefer an even number of grid steps (balanced megacore split).
    if (B // bb) % 2 and B % 2 == 0:
        cand = bb
        while cand > 1 and (B % cand or (B // cand) % 2):
            cand -= 1
        if B % cand == 0 and (B // cand) % 2 == 0:
            bb = cand
    return bb


def mlp_mixer_block(x, params, *, mm_dtype=jnp.bfloat16, batch_block=None):
    """x: (B, S, C). params: PyTorch-layout weights (see __main__)."""
    B, S, C = x.shape
    H1 = params["w1"].shape[0]   # 4*S
    H2 = params["w3"].shape[0]   # 4*C
    f32 = jnp.float32

    # Kernel-side operand layout (tiny one-time transforms; in production do
    # this once offline).  Weights ship in mm_dtype, biases/LN params in f32.
    g1 = params["ln1_w"].reshape(1, C).astype(f32)
    be1 = params["ln1_b"].reshape(1, C).astype(f32)
    w1 = params["w1"].astype(mm_dtype)                    # (4S, S)
    b1 = params["b1"].reshape(H1, 1).astype(f32)
    w2 = params["w2"].astype(mm_dtype)                    # (S, 4S)
    b2 = params["b2"].reshape(S, 1).astype(f32)
    g2 = params["ln2_w"].reshape(1, C).astype(f32)
    be2 = params["ln2_b"].reshape(1, C).astype(f32)
    w3t = params["w3"].T.astype(mm_dtype)                 # (C, 4C)
    b3 = params["b3"].reshape(1, H2).astype(f32)
    w4t = params["w4"].T.astype(mm_dtype)                 # (4C, C)
    b4 = params["b4"].reshape(1, C).astype(f32)

    budget = _device_vmem_budget()
    BB = batch_block if batch_block is not None else _pick_batch_block(
        B, S, C, H1, H2, x.dtype.itemsize, jnp.dtype(mm_dtype).itemsize, budget)
    assert B % BB == 0, (B, BB)

    kernel = functools.partial(_mixer_block_kernel, mm_dtype=mm_dtype)

    def build(single_buffer_weights):
        def const_spec(shape):
            nd = len(shape)
            idx = lambda i, _n=nd: (0,) * _n
            if single_buffer_weights and hasattr(pl, "Buffered"):
                # Constant index_map -> weights are fetched once; a single
                # buffer halves their resident VMEM footprint.
                return pl.BlockSpec(shape, idx, pipeline_mode=pl.Buffered(1))
            return pl.BlockSpec(shape, idx)

        return pl.pallas_call(
            kernel,
            out_shape=jax.ShapeDtypeStruct((B, S, C), x.dtype),
            grid=(B // BB,),
            in_specs=[
                pl.BlockSpec((BB, S, C), lambda i: (i, 0, 0)),   # x batch-block
                const_spec((1, C)), const_spec((1, C)),          # ln1 gamma/beta
                const_spec((H1, S)), const_spec((H1, 1)),        # token-mix W1, b1
                const_spec((S, H1)), const_spec((S, 1)),         # token-mix W2, b2
                const_spec((1, C)), const_spec((1, C)),          # ln2 gamma/beta
                const_spec((C, H2)), const_spec((1, H2)),        # channel-mix W3^T, b3
                const_spec((H2, C)), const_spec((1, C)),         # channel-mix W4^T, b4
            ],
            out_specs=pl.BlockSpec((BB, S, C), lambda i: (i, 0, 0)),
            compiler_params=pltpu.CompilerParams(
                dimension_semantics=("parallel",),               # v7x: 2 TCs split it
                vmem_limit_bytes=int(budget),
            ),
        )

    args = (x, g1, be1, w1, b1, w2, b2, g2, be2, w3t, b3, w4t, b4)
    try:
        return build(True)(*args)
    except Exception:
        # Fallback for JAX builds that reject pipeline_mode=pl.Buffered(1).
        return build(False)(*args)


def mlp_mixer_block_ref(x, p, mm_dtype=jnp.bfloat16):
    """Pure-JAX reference following the PyTorch forward, mirroring the
    kernel's dtype strategy (mm_dtype matmul operands, f32 accumulate)."""
    f32 = jnp.float32

    def ln(v, g, b):
        mu = v.mean(-1, keepdims=True)
        var = ((v - mu) ** 2).mean(-1, keepdims=True)
        return (v - mu) * jax.lax.rsqrt(var + _LN_EPS) * g + b

    def lin(v, w, bias):   # PyTorch Linear: v @ W^T + b
        out = jnp.matmul(v.astype(mm_dtype), w.T.astype(mm_dtype),
                         preferred_element_type=f32,
                         precision=jax.lax.Precision.HIGHEST)
        return out + bias.astype(f32)

    x = x.astype(f32)
    t = ln(x, p["ln1_w"], p["ln1_b"])
    t = jnp.swapaxes(t, 1, 2)                                  # (B, C, S)
    t = _gelu(lin(t, p["w1"], p["b1"]))
    t = lin(t, p["w2"], p["b2"])
    t = jnp.swapaxes(t, 1, 2)                                  # (B, S, C)
    x = x + t
    t = ln(x, p["ln2_w"], p["ln2_b"])
    t = _gelu(lin(t, p["w3"], p["b3"]))
    t = lin(t, p["w4"], p["b4"])
    return x + t


if __name__ == "__main__":
    key = jax.random.PRNGKey(0)
    B, S, C = 2, 8, 32          # batch, seq_len, channels
    H1, H2 = 4 * S, 4 * C       # token-mix hidden, channel-mix hidden
    ks = jax.random.split(key, 13)

    def nrm(k, shape, scale=1.0):
        return scale * jax.random.normal(k, shape, dtype=jnp.float32)

    # Parameters in PyTorch nn.Linear / nn.LayerNorm layout.
    params = {
        "ln1_w": 1.0 + nrm(ks[0], (C,), 0.1),
        "ln1_b": nrm(ks[1], (C,), 0.1),
        "w1":    nrm(ks[2], (H1, S), 1.0 / math.sqrt(S)),
        "b1":    nrm(ks[3], (H1,), 0.1),
        "w2":    nrm(ks[4], (S, H1), 1.0 / math.sqrt(H1)),
        "b2":    nrm(ks[5], (S,), 0.1),
        "ln2_w": 1.0 + nrm(ks[6], (C,), 0.1),
        "ln2_b": nrm(ks[7], (C,), 0.1),
        "w3":    nrm(ks[8], (H2, C), 1.0 / math.sqrt(C)),
        "b3":    nrm(ks[9], (H2,), 0.1),
        "w4":    nrm(ks[10], (C, H2), 1.0 / math.sqrt(H2)),
        "b4":    nrm(ks[11], (C,), 0.1),
    }
    x = nrm(ks[12], (B, S, C))

    # Production path: bf16 MXU operands, f32 LayerNorm/GELU/residual math.
    out = jax.block_until_ready(mlp_mixer_block(x, params))
    ref = jax.block_until_ready(mlp_mixer_block_ref(x, params))
    assert out.shape == (B, S, C), out.shape
    assert jnp.allclose(out, ref, atol=2e-2, rtol=2e-2), "bf16 path mismatch"

    # f32-operand path: checks the fused block structure/semantics directly.
    out32 = jax.block_until_ready(mlp_mixer_block(x, params, mm_dtype=jnp.float32))
    ref32 = jax.block_until_ready(mlp_mixer_block_ref(x, params, mm_dtype=jnp.float32))
    assert jnp.allclose(out32, ref32, atol=2e-2, rtol=2e-2), "f32 path mismatch"

    print("KERNEL_OK")
</pallas_src>

<mosaic_0001>
module attributes {stable_mosaic.version = 11 : i64} {
  func.func @_mixer_block_kernel(%arg0: i32, %arg1: memref<1x8x32xf32, #tpu.memory_space<vmem>>, %arg2: memref<1x32xf32, #tpu.memory_space<vmem>>, %arg3: memref<1x32xf32, #tpu.memory_space<vmem>>, %arg4: memref<32x8xbf16, #tpu.memory_space<vmem>>, %arg5: memref<32x1xf32, #tpu.memory_space<vmem>>, %arg6: memref<8x32xbf16, #tpu.memory_space<vmem>>, %arg7: memref<8x1xf32, #tpu.memory_space<vmem>>, %arg8: memref<1x32xf32, #tpu.memory_space<vmem>>, %arg9: memref<1x32xf32, #tpu.memory_space<vmem>>, %arg10: memref<32x128xbf16, #tpu.memory_space<vmem>>, %arg11: memref<1x128xf32, #tpu.memory_space<vmem>>, %arg12: memref<128x32xbf16, #tpu.memory_space<vmem>>, %arg13: memref<1x32xf32, #tpu.memory_space<vmem>>, %arg14: memref<1x8x32xf32, #tpu.memory_space<vmem>>) attributes {dimension_semantics = [#tpu.dimension_semantics<parallel>], iteration_bounds = array<i64: 2>, scalar_prefetch = 0 : i64, scratch_operands = 0 : i64, tpu.core_type = #tpu.core_type<tc>, window_params = [{transform_indices = @transform_0, window_bounds = array<i64: 1, 8, 32>}, {pipeline_mode = #tpu.pipeline_mode<synchronous>, transform_indices = @transform_1, window_bounds = array<i64: 1, 32>}, {pipeline_mode = #tpu.pipeline_mode<synchronous>, transform_indices = @transform_2, window_bounds = array<i64: 1, 32>}, {pipeline_mode = #tpu.pipeline_mode<synchronous>, transform_indices = @transform_3, window_bounds = array<i64: 32, 8>}, {pipeline_mode = #tpu.pipeline_mode<synchronous>, transform_indices = @transform_4, window_bounds = array<i64: 32, 1>}, {pipeline_mode = #tpu.pipeline_mode<synchronous>, transform_indices = @transform_5, window_bounds = array<i64: 8, 32>}, {pipeline_mode = #tpu.pipeline_mode<synchronous>, transform_indices = @transform_6, window_bounds = array<i64: 8, 1>}, {pipeline_mode = #tpu.pipeline_mode<synchronous>, transform_indices = @transform_7, window_bounds = array<i64: 1, 32>}, {pipeline_mode = #tpu.pipeline_mode<synchronous>, transform_indices = @transform_8, window_bounds = array<i64: 1, 32>}, {pipeline_mode = #tpu.pipeline_mode<synchronous>, transform_indices = @transform_9, window_bounds = array<i64: 32, 128>}, {pipeline_mode = #tpu.pipeline_mode<synchronous>, transform_indices = @transform_10, window_bounds = array<i64: 1, 128>}, {pipeline_mode = #tpu.pipeline_mode<synchronous>, transform_indices = @transform_11, window_bounds = array<i64: 128, 32>}, {pipeline_mode = #tpu.pipeline_mode<synchronous>, transform_indices = @transform_12, window_bounds = array<i64: 1, 32>}, {transform_indices = @transform_13, window_bounds = array<i64: 1, 8, 32>}]} {
    %c0 = arith.constant 0 : index
    %c0_0 = arith.constant 0 : index
    %c0_1 = arith.constant 0 : index
    %0 = vector.load %arg1[%c0, %c0_0, %c0_1] : memref<1x8x32xf32, #tpu.memory_space<vmem>>, vector<1x8x32xf32>
    %c0_2 = arith.constant 0 : index
    %c0_3 = arith.constant 0 : index
    %1 = vector.load %arg2[%c0_2, %c0_3] : memref<1x32xf32, #tpu.memory_space<vmem>>, vector<1x32xf32>
    %c0_4 = arith.constant 0 : index
    %c0_5 = arith.constant 0 : index
    %2 = vector.load %arg3[%c0_4, %c0_5] : memref<1x32xf32, #tpu.memory_space<vmem>>, vector<1x32xf32>
    %cst = arith.constant dense<0.000000e+00> : vector<1x8xf32>
    %3 = vector.multi_reduction <add>, %0, %cst [2] : vector<1x8x32xf32> to vector<1x8xf32>
    %4 = vector.shape_cast %3 : vector<1x8xf32> to vector<1x8x1xf32>
    %5 = arith.mulf %0, %0 : vector<1x8x32xf32>
    %cst_6 = arith.constant dense<0.000000e+00> : vector<1x8xf32>
    %6 = vector.multi_reduction <add>, %5, %cst_6 [2] : vector<1x8x32xf32> to vector<1x8xf32>
    %7 = vector.shape_cast %6 : vector<1x8xf32> to vector<1x8x1xf32>
    %cst_7 = arith.constant 3.125000e-02 : f32
    %8 = vector.broadcast %cst_7 : f32 to vector<1x8x1xf32>
    %9 = arith.mulf %4, %8 : vector<1x8x1xf32>
    %cst_8 = arith.constant 3.125000e-02 : f32
    %10 = vector.broadcast %cst_8 : f32 to vector<1x8x1xf32>
    %11 = arith.mulf %7, %10 : vector<1x8x1xf32>
    %12 = arith.mulf %9, %9 : vector<1x8x1xf32>
    %13 = arith.subf %11, %12 : vector<1x8x1xf32>
    %14 = vector.broadcast %9 : vector<1x8x1xf32> to vector<1x8x32xf32>
    %15 = arith.subf %0, %14 : vector<1x8x32xf32>
    %cst_9 = arith.constant 9.99999974E-6 : f32
    %16 = vector.broadcast %cst_9 : f32 to vector<1x8x1xf32>
    %17 = arith.addf %13, %16 : vector<1x8x1xf32>
    %18 = math.rsqrt %17 : vector<1x8x1xf32>
    %19 = vector.broadcast %18 : vector<1x8x1xf32> to vector<1x8x32xf32>
    %20 = arith.mulf %15, %19 : vector<1x8x32xf32>
    %21 = vector.shape_cast %1 : vector<1x32xf32> to vector<1x1x32xf32>
    %22 = vector.broadcast %21 : vector<1x1x32xf32> to vector<1x8x32xf32>
    %23 = arith.mulf %20, %22 : vector<1x8x32xf32>
    %24 = vector.shape_cast %2 : vector<1x32xf32> to vector<1x1x32xf32>
    %25 = vector.broadcast %24 : vector<1x1x32xf32> to vector<1x8x32xf32>
    %26 = arith.addf %23, %25 : vector<1x8x32xf32>
    %27 = arith.truncf %26 : vector<1x8x32xf32> to vector<1x8x32xbf16>
    %c0_10 = arith.constant 0 : index
    %c0_11 = arith.constant 0 : index
    %28 = vector.load %arg4[%c0_10, %c0_11] : memref<32x8xbf16, #tpu.memory_space<vmem>>, vector<32x8xbf16>
    %c0_12 = arith.constant 0 : index
    %c0_13 = arith.constant 0 : index
    %29 = vector.load %arg6[%c0_12, %c0_13] : memref<8x32xbf16, #tpu.memory_space<vmem>>, vector<8x32xbf16>
    %c0_14 = arith.constant 0 : index
    %c0_15 = arith.constant 0 : index
    %30 = vector.load %arg5[%c0_14, %c0_15] : memref<32x1xf32, #tpu.memory_space<vmem>>, vector<32x1xf32>
    %c0_16 = arith.constant 0 : index
    %c0_17 = arith.constant 0 : index
    %31 = vector.load %arg7[%c0_16, %c0_17] : memref<8x1xf32, #tpu.memory_space<vmem>>, vector<8x1xf32>
    %32 = vector.shape_cast %27 : vector<1x8x32xbf16> to vector<8x32xbf16>
    %cst_18 = arith.constant dense<0.000000e+00> : vector<32x32xf32>
    %33 = tpu.matmul %28, %32, %cst_18 {dimension_numbers = #tpu.dot_dimension_numbers<[1], [0], [0], [1], [0, 0, 1, 1], [], []>} : vector<32x8xbf16>, vector<8x32xbf16>, vector<32x32xf32> -> vector<32x32xf32>
    %34 = vector.broadcast %30 : vector<32x1xf32> to vector<32x32xf32>
    %35 = arith.addf %33, %34 : vector<32x32xf32>
    %cst_19 = arith.constant 5.000000e-01 : f32
    %36 = vector.broadcast %cst_19 : f32 to vector<32x32xf32>
    %37 = arith.mulf %36, %35 : vector<32x32xf32>
    %cst_20 = arith.constant 0.707106769 : f32
    %38 = vector.broadcast %cst_20 : f32 to vector<32x32xf32>
    %39 = arith.mulf %35, %38 : vector<32x32xf32>
    %cst_21 = arith.constant 0.000000e+00 : f32
    %40 = vector.broadcast %cst_21 : f32 to vector<32x32xf32>
    %41 = arith.cmpf oge, %39, %40 : vector<32x32xf32>
    %cst_22 = arith.constant 1.000000e+00 : f32
    %cst_23 = arith.constant -1.000000e+00 : f32
    %42 = vector.broadcast %cst_22 : f32 to vector<32x32xf32>
    %43 = vector.broadcast %cst_23 : f32 to vector<32x32xf32>
    %44 = arith.select %41, %42, %43 : vector<32x32xi1>, vector<32x32xf32>
    %45 = math.absf %39 : vector<32x32xf32>
    %cst_24 = arith.constant 0.327591091 : f32
    %46 = vector.broadcast %cst_24 : f32 to vector<32x32xf32>
    %47 = arith.mulf %46, %45 : vector<32x32xf32>
    %cst_25 = arith.constant 1.000000e+00 : f32
    %48 = vector.broadcast %cst_25 : f32 to vector<32x32xf32>
    %49 = arith.addf %48, %47 : vector<32x32xf32>
    %50 = tpu.reciprocal %49 {approx = true} : vector<32x32xf32> -> vector<32x32xf32>
    %cst_26 = arith.constant 1.06140542 : f32
    %51 = vector.broadcast %cst_26 : f32 to vector<32x32xf32>
    %52 = arith.mulf %51, %50 : vector<32x32xf32>
    %cst_27 = arith.constant -1.45315206 : f32
    %53 = vector.broadcast %cst_27 : f32 to vector<32x32xf32>
    %54 = arith.addf %52, %53 : vector<32x32xf32>
    %55 = arith.mulf %54, %50 : vector<32x32xf32>
    %cst_28 = arith.constant 1.42141378 : f32
    %56 = vector.broadcast %cst_28 : f32 to vector<32x32xf32>
    %57 = arith.addf %55, %56 : vector<32x32xf32>
    %58 = arith.mulf %57, %50 : vector<32x32xf32>
    %cst_29 = arith.constant -0.284496725 : f32
    %59 = vector.broadcast %cst_29 : f32 to vector<32x32xf32>
    %60 = arith.addf %58, %59 : vector<32x32xf32>
    %61 = arith.mulf %60, %50 : vector<32x32xf32>
    %cst_30 = arith.constant 0.254829586 : f32
    %62 = vector.broadcast %cst_30 : f32 to vector<32x32xf32>
    %63 = arith.addf %61, %62 : vector<32x32xf32>
    %64 = arith.mulf %63, %50 : vector<32x32xf32>
    %cst_31 = arith.constant 0.000000e+00 : f32
    %65 = vector.broadcast %cst_31 : f32 to vector<32x32xf32>
    %66 = arith.subf %65, %45 : vector<32x32xf32>
    %67 = arith.mulf %66, %45 : vector<32x32xf32>
    %68 = math.exp %67 : vector<32x32xf32>
    %69 = arith.mulf %64, %68 : vector<32x32xf32>
    %cst_32 = arith.constant 1.000000e+00 : f32
    %70 = vector.broadcast %cst_32 : f32 to vector<32x32xf32>
    %71 = arith.subf %70, %69 : vector<32x32xf32>
    %72 = arith.mulf %44, %71 : vector<32x32xf32>
    %cst_33 = arith.constant 1.000000e+00 : f32
    %73 = vector.broadcast %cst_33 : f32 to vector<32x32xf32>
    %74 = arith.addf %73, %72 : vector<32x32xf32>
    %75 = arith.mulf %37, %74 : vector<32x32xf32>
    %76 = arith.truncf %75 : vector<32x32xf32> to vector<32x32xbf16>
    %cst_34 = arith.constant dense<0.000000e+00> : vector<8x32xf32>
    %77 = tpu.matmul %29, %76, %cst_34 {dimension_numbers = #tpu.dot_dimension_numbers<[1], [0], [0], [1], [0, 0, 1, 1], [], []>} : vector<8x32xbf16>, vector<32x32xbf16>, vector<8x32xf32> -> vector<8x32xf32>
    %78 = vector.shape_cast %0 : vector<1x8x32xf32> to vector<8x32xf32>
    %79 = arith.addf %78, %77 : vector<8x32xf32>
    %80 = vector.broadcast %31 : vector<8x1xf32> to vector<8x32xf32>
    %81 = arith.addf %79, %80 : vector<8x32xf32>
    %c0_35 = arith.constant 0 : index
    %c0_36 = arith.constant 0 : index
    %82 = vector.load %arg8[%c0_35, %c0_36] : memref<1x32xf32, #tpu.memory_space<vmem>>, vector<1x32xf32>
    %c0_37 = arith.constant 0 : index
    %c0_38 = arith.constant 0 : index
    %83 = vector.load %arg9[%c0_37, %c0_38] : memref<1x32xf32, #tpu.memory_space<vmem>>, vector<1x32xf32>
    %cst_39 = arith.constant dense<0.000000e+00> : vector<8xf32>
    %84 = vector.multi_reduction <add>, %81, %cst_39 [1] : vector<8x32xf32> to vector<8xf32>
    %85 = vector.shape_cast %84 : vector<8xf32> to vector<8x1xf32>
    %86 = arith.mulf %81, %81 : vector<8x32xf32>
    %cst_40 = arith.constant dense<0.000000e+00> : vector<8xf32>
    %87 = vector.multi_reduction <add>, %86, %cst_40 [1] : vector<8x32xf32> to vector<8xf32>
    %88 = vector.shape_cast %87 : vector<8xf32> to vector<8x1xf32>
    %cst_41 = arith.constant 3.125000e-02 : f32
    %89 = vector.broadcast %cst_41 : f32 to vector<8x1xf32>
    %90 = arith.mulf %85, %89 : vector<8x1xf32>
    %cst_42 = arith.constant 3.125000e-02 : f32
    %91 = vector.broadcast %cst_42 : f32 to vector<8x1xf32>
    %92 = arith.mulf %88, %91 : vector<8x1xf32>
    %93 = arith.mulf %90, %90 : vector<8x1xf32>
    %94 = arith.subf %92, %93 : vector<8x1xf32>
    %95 = vector.broadcast %90 : vector<8x1xf32> to vector<8x32xf32>
    %96 = arith.subf %81, %95 : vector<8x32xf32>
    %cst_43 = arith.constant 9.99999974E-6 : f32
    %97 = vector.broadcast %cst_43 : f32 to vector<8x1xf32>
    %98 = arith.addf %94, %97 : vector<8x1xf32>
    %99 = math.rsqrt %98 : vector<8x1xf32>
    %100 = vector.broadcast %99 : vector<8x1xf32> to vector<8x32xf32>
    %101 = arith.mulf %96, %100 : vector<8x32xf32>
    %102 = vector.broadcast %82 : vector<1x32xf32> to vector<8x32xf32>
    %103 = arith.mulf %101, %102 : vector<8x32xf32>
    %104 = vector.broadcast %83 : vector<1x32xf32> to vector<8x32xf32>
    %105 = arith.addf %103, %104 : vector<8x32xf32>
    %106 = arith.truncf %105 : vector<8x32xf32> to vector<8x32xbf16>
    %c0_44 = arith.constant 0 : index
    %c0_45 = arith.constant 0 : index
    %107 = vector.load %arg10[%c0_44, %c0_45] : memref<32x128xbf16, #tpu.memory_space<vmem>>, vector<32x128xbf16>
    %cst_46 = arith.constant dense<0.000000e+00> : vector<8x128xf32>
    %108 = tpu.matmul %106, %107, %cst_46 {dimension_numbers = #tpu.dot_dimension_numbers<[1], [0], [0], [1], [0, 0, 1, 1], [], []>} : vector<8x32xbf16>, vector<32x128xbf16>, vector<8x128xf32> -> vector<8x128xf32>
    %c0_47 = arith.constant 0 : index
    %c0_48 = arith.constant 0 : index
    %109 = vector.load %arg11[%c0_47, %c0_48] : memref<1x128xf32, #tpu.memory_space<vmem>>, vector<1x128xf32>
    %110 = vector.broadcast %109 : vector<1x128xf32> to vector<8x128xf32>
    %111 = arith.addf %108, %110 : vector<8x128xf32>
    %cst_49 = arith.constant 5.000000e-01 : f32
    %112 = vector.broadcast %cst_49 : f32 to vector<8x128xf32>
    %113 = arith.mulf %112, %111 : vector<8x128xf32>
    %cst_50 = arith.constant 0.707106769 : f32
    %114 = vector.broadcast %cst_50 : f32 to vector<8x128xf32>
    %115 = arith.mulf %111, %114 : vector<8x128xf32>
    %cst_51 = arith.constant 0.000000e+00 : f32
    %116 = vector.broadcast %cst_51 : f32 to vector<8x128xf32>
    %117 = arith.cmpf oge, %115, %116 : vector<8x128xf32>
    %cst_52 = arith.constant 1.000000e+00 : f32
    %cst_53 = arith.constant -1.000000e+00 : f32
    %118 = vector.broadcast %cst_52 : f32 to vector<8x128xf32>
    %119 = vector.broadcast %cst_53 : f32 to vector<8x128xf32>
    %120 = arith.select %117, %118, %119 : vector<8x128xi1>, vector<8x128xf32>
    %121 = math.absf %115 : vector<8x128xf32>
    %cst_54 = arith.constant 0.327591091 : f32
    %122 = vector.broadcast %cst_54 : f32 to vector<8x128xf32>
    %123 = arith.mulf %122, %121 : vector<8x128xf32>
    %cst_55 = arith.constant 1.000000e+00 : f32
    %124 = vector.broadcast %cst_55 : f32 to vector<8x128xf32>
    %125 = arith.addf %124, %123 : vector<8x128xf32>
    %126 = tpu.reciprocal %125 {approx = true} : vector<8x128xf32> -> vector<8x128xf32>
    %cst_56 = arith.constant 1.06140542 : f32
    %127 = vector.broadcast %cst_56 : f32 to vector<8x128xf32>
    %128 = arith.mulf %127, %126 : vector<8x128xf32>
    %cst_57 = arith.constant -1.45315206 : f32
    %129 = vector.broadcast %cst_57 : f32 to vector<8x128xf32>
    %130 = arith.addf %128, %129 : vector<8x128xf32>
    %131 = arith.mulf %130, %126 : vector<8x128xf32>
    %cst_58 = arith.constant 1.42141378 : f32
    %132 = vector.broadcast %cst_58 : f32 to vector<8x128xf32>
    %133 = arith.addf %131, %132 : vector<8x128xf32>
    %134 = arith.mulf %133, %126 : vector<8x128xf32>
    %cst_59 = arith.constant -0.284496725 : f32
    %135 = vector.broadcast %cst_59 : f32 to vector<8x128xf32>
    %136 = arith.addf %134, %135 : vector<8x128xf32>
    %137 = arith.mulf %136, %126 : vector<8x128xf32>
    %cst_60 = arith.constant 0.254829586 : f32
    %138 = vector.broadcast %cst_60 : f32 to vector<8x128xf32>
    %139 = arith.addf %137, %138 : vector<8x128xf32>
    %140 = arith.mulf %139, %126 : vector<8x128xf32>
    %cst_61 = arith.constant 0.000000e+00 : f32
    %141 = vector.broadcast %cst_61 : f32 to vector<8x128xf32>
    %142 = arith.subf %141, %121 : vector<8x128xf32>
    %143 = arith.mulf %142, %121 : vector<8x128xf32>
    %144 = math.exp %143 : vector<8x128xf32>
    %145 = arith.mulf %140, %144 : vector<8x128xf32>
    %cst_62 = arith.constant 1.000000e+00 : f32
    %146 = vector.broadcast %cst_62 : f32 to vector<8x128xf32>
    %147 = arith.subf %146, %145 : vector<8x128xf32>
    %148 = arith.mulf %120, %147 : vector<8x128xf32>
    %cst_63 = arith.constant 1.000000e+00 : f32
    %149 = vector.broadcast %cst_63 : f32 to vector<8x128xf32>
    %150 = arith.addf %149, %148 : vector<8x128xf32>
    %151 = arith.mulf %113, %150 : vector<8x128xf32>
    %152 = arith.truncf %151 : vector<8x128xf32> to vector<8x128xbf16>
    %c0_64 = arith.constant 0 : index
    %c0_65 = arith.constant 0 : index
    %153 = vector.load %arg12[%c0_64, %c0_65] : memref<128x32xbf16, #tpu.memory_space<vmem>>, vector<128x32xbf16>
    %cst_66 = arith.constant dense<0.000000e+00> : vector<8x32xf32>
    %154 = tpu.matmul %152, %153, %cst_66 {dimension_numbers = #tpu.dot_dimension_numbers<[1], [0], [0], [1], [0, 0, 1, 1], [], []>} : vector<8x128xbf16>, vector<128x32xbf16>, vector<8x32xf32> -> vector<8x32xf32>
    %c0_67 = arith.constant 0 : index
    %c0_68 = arith.constant 0 : index
    %155 = vector.load %arg13[%c0_67, %c0_68] : memref<1x32xf32, #tpu.memory_space<vmem>>, vector<1x32xf32>
    %156 = vector.broadcast %155 : vector<1x32xf32> to vector<8x32xf32>
    %157 = arith.addf %154, %156 : vector<8x32xf32>
    %158 = arith.addf %81, %157 : vector<8x32xf32>
    %159 = vector.shape_cast %158 : vector<8x32xf32> to vector<1x8x32xf32>
    %c0_69 = arith.constant 0 : index
    %c0_70 = arith.constant 0 : index
    %c0_71 = arith.constant 0 : index
    %160 = vector.load %arg14[%c0_69, %c0_70, %c0_71] : memref<1x8x32xf32, #tpu.memory_space<vmem>>, vector<1x8x32xf32>
    tpu.vector_store %arg14[%c0_69, %c0_70, %c0_71], %159 {strides = array<i32>} : memref<1x8x32xf32, #tpu.memory_space<vmem>>, vector<1x8x32xf32>,
    return
  }
  func.func @transform_0(%arg0: i32) -> (i32, i32, i32) {
    %c0_i32 = arith.constant 0 : i32
    %c0_i32_0 = arith.constant 0 : i32
    %c0_i32_1 = arith.constant 0 : i32
    return %arg0, %c0_i32, %c0_i32_0 : i32, i32, i32
  }
  func.func @transform_1(%arg0: i32) -> (i32, i32) {
    %c0_i32 = arith.constant 0 : i32
    %c0_i32_0 = arith.constant 0 : i32
    %c0_i32_1 = arith.constant 0 : i32
    return %c0_i32, %c0_i32_0 : i32, i32
  }
  func.func @transform_2(%arg0: i32) -> (i32, i32) {
    %c0_i32 = arith.constant 0 : i32
    %c0_i32_0 = arith.constant 0 : i32
    %c0_i32_1 = arith.constant 0 : i32
    return %c0_i32, %c0_i32_0 : i32, i32
  }
  func.func @transform_3(%arg0: i32) -> (i32, i32) {
    %c0_i32 = arith.constant 0 : i32
    %c0_i32_0 = arith.constant 0 : i32
    %c0_i32_1 = arith.constant 0 : i32
    return %c0_i32, %c0_i32_0 : i32, i32
  }
  func.func @transform_4(%arg0: i32) -> (i32, i32) {
    %c0_i32 = arith.constant 0 : i32
    %c0_i32_0 = arith.constant 0 : i32
    %c0_i32_1 = arith.constant 0 : i32
    return %c0_i32, %c0_i32_0 : i32, i32
  }
  func.func @transform_5(%arg0: i32) -> (i32, i32) {
    %c0_i32 = arith.constant 0 : i32
    %c0_i32_0 = arith.constant 0 : i32
    %c0_i32_1 = arith.constant 0 : i32
    return %c0_i32, %c0_i32_0 : i32, i32
  }
  func.func @transform_6(%arg0: i32) -> (i32, i32) {
    %c0_i32 = arith.constant 0 : i32
    %c0_i32_0 = arith.constant 0 : i32
    %c0_i32_1 = arith.constant 0 : i32
    return %c0_i32, %c0_i32_0 : i32, i32
  }
  func.func @transform_7(%arg0: i32) -> (i32, i32) {
    %c0_i32 = arith.constant 0 : i32
    %c0_i32_0 = arith.constant 0 : i32
    %c0_i32_1 = arith.constant 0 : i32
    return %c0_i32, %c0_i32_0 : i32, i32
  }
  func.func @transform_8(%arg0: i32) -> (i32, i32) {
    %c0_i32 = arith.constant 0 : i32
    %c0_i32_0 = arith.constant 0 : i32
    %c0_i32_1 = arith.constant 0 : i32
    return %c0_i32, %c0_i32_0 : i32, i32
  }
  func.func @transform_9(%arg0: i32) -> (i32, i32) {
    %c0_i32 = arith.constant 0 : i32
    %c0_i32_0 = arith.constant 0 : i32
    %c0_i32_1 = arith.constant 0 : i32
    return %c0_i32, %c0_i32_0 : i32, i32
  }
  func.func @transform_10(%arg0: i32) -> (i32, i32) {
    %c0_i32 = arith.constant 0 : i32
    %c0_i32_0 = arith.constant 0 : i32
    %c0_i32_1 = arith.constant 0 : i32
    return %c0_i32, %c0_i32_0 : i32, i32
  }
  func.func @transform_11(%arg0: i32) -> (i32, i32) {
    %c0_i32 = arith.constant 0 : i32
    %c0_i32_0 = arith.constant 0 : i32
    %c0_i32_1 = arith.constant 0 : i32
    return %c0_i32, %c0_i32_0 : i32, i32
  }
  func.func @transform_12(%arg0: i32) -> (i32, i32) {
    %c0_i32 = arith.constant 0 : i32
    %c0_i32_0 = arith.constant 0 : i32
    %c0_i32_1 = arith.constant 0 : i32
    return %c0_i32, %c0_i32_0 : i32, i32
  }
  func.func @transform_13(%arg0: i32) -> (i32, i32, i32) {
    %c0_i32 = arith.constant 0 : i32
    %c0_i32_0 = arith.constant 0 : i32
    %c0_i32_1 = arith.constant 0 : i32
    return %arg0, %c0_i32, %c0_i32_0 : i32, i32, i32
  }
}

module attributes {stable_mosaic.version = 11 : i64} {
  func.func @_mixer_block_kernel(%arg0: i32, %arg1: memref<1x8x32xf32, #tpu.memory_space<vmem>>, %arg2: memref<1x32xf32, #tpu.memory_space<vmem>>, %arg3: memref<1x32xf32, #tpu.memory_space<vmem>>, %arg4: memref<32x8xbf16, #tpu.memory_space<vmem>>, %arg5: memref<32x1xf32, #tpu.memory_space<vmem>>, %arg6: memref<8x32xbf16, #tpu.memory_space<vmem>>, %arg7: memref<8x1xf32, #tpu.memory_space<vmem>>, %arg8: memref<1x32xf32, #tpu.memory_space<vmem>>, %arg9: memref<1x32xf32, #tpu.memory_space<vmem>>, %arg10: memref<32x128xbf16, #tpu.memory_space<vmem>>, %arg11: memref<1x128xf32, #tpu.memory_space<vmem>>, %arg12: memref<128x32xbf16, #tpu.memory_space<vmem>>, %arg13: memref<1x32xf32, #tpu.memory_space<vmem>>, %arg14: memref<1x8x32xf32, #tpu.memory_space<vmem>>) attributes {dimension_semantics = [#tpu.dimension_semantics<parallel>], iteration_bounds = array<i64: 2>, scalar_prefetch = 0 : i64, scratch_operands = 0 : i64, tpu.core_type = #tpu.core_type<tc>, window_params = [{transform_indices = @transform_0, window_bounds = array<i64: 1, 8, 32>}, {pipeline_mode = #tpu.pipeline_mode<synchronous>, transform_indices = @transform_1, window_bounds = array<i64: 1, 32>}, {pipeline_mode = #tpu.pipeline_mode<synchronous>, transform_indices = @transform_2, window_bounds = array<i64: 1, 32>}, {pipeline_mode = #tpu.pipeline_mode<synchronous>, transform_indices = @transform_3, window_bounds = array<i64: 32, 8>}, {pipeline_mode = #tpu.pipeline_mode<synchronous>, transform_indices = @transform_4, window_bounds = array<i64: 32, 1>}, {pipeline_mode = #tpu.pipeline_mode<synchronous>, transform_indices = @transform_5, window_bounds = array<i64: 8, 32>}, {pipeline_mode = #tpu.pipeline_mode<synchronous>, transform_indices = @transform_6, window_bounds = array<i64: 8, 1>}, {pipeline_mode = #tpu.pipeline_mode<synchronous>, transform_indices = @transform_7, window_bounds = array<i64: 1, 32>}, {pipeline_mode = #tpu.pipeline_mode<synchronous>, transform_indices = @transform_8, window_bounds = array<i64: 1, 32>}, {pipeline_mode = #tpu.pipeline_mode<synchronous>, transform_indices = @transform_9, window_bounds = array<i64: 32, 128>}, {pipeline_mode = #tpu.pipeline_mode<synchronous>, transform_indices = @transform_10, window_bounds = array<i64: 1, 128>}, {pipeline_mode = #tpu.pipeline_mode<synchronous>, transform_indices = @transform_11, window_bounds = array<i64: 128, 32>}, {pipeline_mode = #tpu.pipeline_mode<synchronous>, transform_indices = @transform_12, window_bounds = array<i64: 1, 32>}, {transform_indices = @transform_13, window_bounds = array<i64: 1, 8, 32>}]} {
    %c0 = arith.constant 0 : index
    %c0_0 = arith.constant 0 : index
    %c0_1 = arith.constant 0 : index
    %0 = vector.load %arg1[%c0, %c0_0, %c0_1] : memref<1x8x32xf32, #tpu.memory_space<vmem>>, vector<1x8x32xf32>
    %c0_2 = arith.constant 0 : index
    %c0_3 = arith.constant 0 : index
    %1 = vector.load %arg2[%c0_2, %c0_3] : memref<1x32xf32, #tpu.memory_space<vmem>>, vector<1x32xf32>
    %c0_4 = arith.constant 0 : index
    %c0_5 = arith.constant 0 : index
    %2 = vector.load %arg3[%c0_4, %c0_5] : memref<1x32xf32, #tpu.memory_space<vmem>>, vector<1x32xf32>
    %cst = arith.constant dense<0.000000e+00> : vector<1x8xf32>
    %3 = vector.multi_reduction <add>, %0, %cst [2] : vector<1x8x32xf32> to vector<1x8xf32>
    %4 = vector.shape_cast %3 : vector<1x8xf32> to vector<1x8x1xf32>
    %5 = arith.mulf %0, %0 : vector<1x8x32xf32>
    %cst_6 = arith.constant dense<0.000000e+00> : vector<1x8xf32>
    %6 = vector.multi_reduction <add>, %5, %cst_6 [2] : vector<1x8x32xf32> to vector<1x8xf32>
    %7 = vector.shape_cast %6 : vector<1x8xf32> to vector<1x8x1xf32>
    %cst_7 = arith.constant 3.125000e-02 : f32
    %8 = vector.broadcast %cst_7 : f32 to vector<1x8x1xf32>
    %9 = arith.mulf %4, %8 : vector<1x8x1xf32>
    %cst_8 = arith.constant 3.125000e-02 : f32
    %10 = vector.broadcast %cst_8 : f32 to vector<1x8x1xf32>
    %11 = arith.mulf %7, %10 : vector<1x8x1xf32>
    %12 = arith.mulf %9, %9 : vector<1x8x1xf32>
    %13 = arith.subf %11, %12 : vector<1x8x1xf32>
    %14 = vector.broadcast %9 : vector<1x8x1xf32> to vector<1x8x32xf32>
    %15 = arith.subf %0, %14 : vector<1x8x32xf32>
    %cst_9 = arith.constant 9.99999974E-6 : f32
    %16 = vector.broadcast %cst_9 : f32 to vector<1x8x1xf32>
    %17 = arith.addf %13, %16 : vector<1x8x1xf32>
    %18 = math.rsqrt %17 : vector<1x8x1xf32>
    %19 = vector.broadcast %18 : vector<1x8x1xf32> to vector<1x8x32xf32>
    %20 = arith.mulf %15, %19 : vector<1x8x32xf32>
    %21 = vector.shape_cast %1 : vector<1x32xf32> to vector<1x1x32xf32>
    %22 = vector.broadcast %21 : vector<1x1x32xf32> to vector<1x8x32xf32>
    %23 = arith.mulf %20, %22 : vector<1x8x32xf32>
    %24 = vector.shape_cast %2 : vector<1x32xf32> to vector<1x1x32xf32>
    %25 = vector.broadcast %24 : vector<1x1x32xf32> to vector<1x8x32xf32>
    %26 = arith.addf %23, %25 : vector<1x8x32xf32>
    %27 = arith.truncf %26 : vector<1x8x32xf32> to vector<1x8x32xbf16>
    %c0_10 = arith.constant 0 : index
    %c0_11 = arith.constant 0 : index
    %28 = vector.load %arg4[%c0_10, %c0_11] : memref<32x8xbf16, #tpu.memory_space<vmem>>, vector<32x8xbf16>
    %c0_12 = arith.constant 0 : index
    %c0_13 = arith.constant 0 : index
    %29 = vector.load %arg6[%c0_12, %c0_13] : memref<8x32xbf16, #tpu.memory_space<vmem>>, vector<8x32xbf16>
    %c0_14 = arith.constant 0 : index
    %c0_15 = arith.constant 0 : index
    %30 = vector.load %arg5[%c0_14, %c0_15] : memref<32x1xf32, #tpu.memory_space<vmem>>, vector<32x1xf32>
    %c0_16 = arith.constant 0 : index
    %c0_17 = arith.constant 0 : index
    %31 = vector.load %arg7[%c0_16, %c0_17] : memref<8x1xf32, #tpu.memory_space<vmem>>, vector<8x1xf32>
    %32 = vector.shape_cast %27 : vector<1x8x32xbf16> to vector<8x32xbf16>
    %cst_18 = arith.constant dense<0.000000e+00> : vector<32x32xf32>
    %33 = tpu.matmul %28, %32, %cst_18 {dimension_numbers = #tpu.dot_dimension_numbers<[1], [0], [0], [1], [0, 0, 1, 1], [], []>} : vector<32x8xbf16>, vector<8x32xbf16>, vector<32x32xf32> -> vector<32x32xf32>
    %34 = vector.broadcast %30 : vector<32x1xf32> to vector<32x32xf32>
    %35 = arith.addf %33, %34 : vector<32x32xf32>
    %cst_19 = arith.constant 5.000000e-01 : f32
    %36 = vector.broadcast %cst_19 : f32 to vector<32x32xf32>
    %37 = arith.mulf %36, %35 : vector<32x32xf32>
    %cst_20 = arith.constant 0.707106769 : f32
    %38 = vector.broadcast %cst_20 : f32 to vector<32x32xf32>
    %39 = arith.mulf %35, %38 : vector<32x32xf32>
    %cst_21 = arith.constant 0.000000e+00 : f32
    %40 = vector.broadcast %cst_21 : f32 to vector<32x32xf32>
    %41 = arith.cmpf oge, %39, %40 : vector<32x32xf32>
    %cst_22 = arith.constant 1.000000e+00 : f32
    %cst_23 = arith.constant -1.000000e+00 : f32
    %42 = vector.broadcast %cst_22 : f32 to vector<32x32xf32>
    %43 = vector.broadcast %cst_23 : f32 to vector<32x32xf32>
    %44 = arith.select %41, %42, %43 : vector<32x32xi1>, vector<32x32xf32>
    %45 = math.absf %39 : vector<32x32xf32>
    %cst_24 = arith.constant 0.327591091 : f32
    %46 = vector.broadcast %cst_24 : f32 to vector<32x32xf32>
    %47 = arith.mulf %46, %45 : vector<32x32xf32>
    %cst_25 = arith.constant 1.000000e+00 : f32
    %48 = vector.broadcast %cst_25 : f32 to vector<32x32xf32>
    %49 = arith.addf %48, %47 : vector<32x32xf32>
    %50 = tpu.reciprocal %49 {approx = true} : vector<32x32xf32> -> vector<32x32xf32>
    %cst_26 = arith.constant 1.06140542 : f32
    %51 = vector.broadcast %cst_26 : f32 to vector<32x32xf32>
    %52 = arith.mulf %51, %50 : vector<32x32xf32>
    %cst_27 = arith.constant -1.45315206 : f32
    %53 = vector.broadcast %cst_27 : f32 to vector<32x32xf32>
    %54 = arith.addf %52, %53 : vector<32x32xf32>
    %55 = arith.mulf %54, %50 : vector<32x32xf32>
    %cst_28 = arith.constant 1.42141378 : f32
    %56 = vector.broadcast %cst_28 : f32 to vector<32x32xf32>
    %57 = arith.addf %55, %56 : vector<32x32xf32>
    %58 = arith.mulf %57, %50 : vector<32x32xf32>
    %cst_29 = arith.constant -0.284496725 : f32
    %59 = vector.broadcast %cst_29 : f32 to vector<32x32xf32>
    %60 = arith.addf %58, %59 : vector<32x32xf32>
    %61 = arith.mulf %60, %50 : vector<32x32xf32>
    %cst_30 = arith.constant 0.254829586 : f32
    %62 = vector.broadcast %cst_30 : f32 to vector<32x32xf32>
    %63 = arith.addf %61, %62 : vector<32x32xf32>
    %64 = arith.mulf %63, %50 : vector<32x32xf32>
    %cst_31 = arith.constant 0.000000e+00 : f32
    %65 = vector.broadcast %cst_31 : f32 to vector<32x32xf32>
    %66 = arith.subf %65, %45 : vector<32x32xf32>
    %67 = arith.mulf %66, %45 : vector<32x32xf32>
    %68 = math.exp %67 : vector<32x32xf32>
    %69 = arith.mulf %64, %68 : vector<32x32xf32>
    %cst_32 = arith.constant 1.000000e+00 : f32
    %70 = vector.broadcast %cst_32 : f32 to vector<32x32xf32>
    %71 = arith.subf %70, %69 : vector<32x32xf32>
    %72 = arith.mulf %44, %71 : vector<32x32xf32>
    %cst_33 = arith.constant 1.000000e+00 : f32
    %73 = vector.broadcast %cst_33 : f32 to vector<32x32xf32>
    %74 = arith.addf %73, %72 : vector<32x32xf32>
    %75 = arith.mulf %37, %74 : vector<32x32xf32>
    %76 = arith.truncf %75 : vector<32x32xf32> to vector<32x32xbf16>
    %cst_34 = arith.constant dense<0.000000e+00> : vector<8x32xf32>
    %77 = tpu.matmul %29, %76, %cst_34 {dimension_numbers = #tpu.dot_dimension_numbers<[1], [0], [0], [1], [0, 0, 1, 1], [], []>} : vector<8x32xbf16>, vector<32x32xbf16>, vector<8x32xf32> -> vector<8x32xf32>
    %78 = vector.shape_cast %0 : vector<1x8x32xf32> to vector<8x32xf32>
    %79 = arith.addf %78, %77 : vector<8x32xf32>
    %80 = vector.broadcast %31 : vector<8x1xf32> to vector<8x32xf32>
    %81 = arith.addf %79, %80 : vector<8x32xf32>
    %c0_35 = arith.constant 0 : index
    %c0_36 = arith.constant 0 : index
    %82 = vector.load %arg8[%c0_35, %c0_36] : memref<1x32xf32, #tpu.memory_space<vmem>>, vector<1x32xf32>
    %c0_37 = arith.constant 0 : index
    %c0_38 = arith.constant 0 : index
    %83 = vector.load %arg9[%c0_37, %c0_38] : memref<1x32xf32, #tpu.memory_space<vmem>>, vector<1x32xf32>
    %cst_39 = arith.constant dense<0.000000e+00> : vector<8xf32>
    %84 = vector.multi_reduction <add>, %81, %cst_39 [1] : vector<8x32xf32> to vector<8xf32>
    %85 = vector.shape_cast %84 : vector<8xf32> to vector<8x1xf32>
    %86 = arith.mulf %81, %81 : vector<8x32xf32>
    %cst_40 = arith.constant dense<0.000000e+00> : vector<8xf32>
    %87 = vector.multi_reduction <add>, %86, %cst_40 [1] : vector<8x32xf32> to vector<8xf32>
    %88 = vector.shape_cast %87 : vector<8xf32> to vector<8x1xf32>
    %cst_41 = arith.constant 3.125000e-02 : f32
    %89 = vector.broadcast %cst_41 : f32 to vector<8x1xf32>
    %90 = arith.mulf %85, %89 : vector<8x1xf32>
    %cst_42 = arith.constant 3.125000e-02 : f32
    %91 = vector.broadcast %cst_42 : f32 to vector<8x1xf32>
    %92 = arith.mulf %88, %91 : vector<8x1xf32>
    %93 = arith.mulf %90, %90 : vector<8x1xf32>
    %94 = arith.subf %92, %93 : vector<8x1xf32>
    %95 = vector.broadcast %90 : vector<8x1xf32> to vector<8x32xf32>
    %96 = arith.subf %81, %95 : vector<8x32xf32>
    %cst_43 = arith.constant 9.99999974E-6 : f32
    %97 = vector.broadcast %cst_43 : f32 to vector<8x1xf32>
    %98 = arith.addf %94, %97 : vector<8x1xf32>
    %99 = math.rsqrt %98 : vector<8x1xf32>
    %100 = vector.broadcast %99 : vector<8x1xf32> to vector<8x32xf32>
    %101 = arith.mulf %96, %100 : vector<8x32xf32>
    %102 = vector.broadcast %82 : vector<1x32xf32> to vector<8x32xf32>
    %103 = arith.mulf %101, %102 : vector<8x32xf32>
    %104 = vector.broadcast %83 : vector<1x32xf32> to vector<8x32xf32>
    %105 = arith.addf %103, %104 : vector<8x32xf32>
    %106 = arith.truncf %105 : vector<8x32xf32> to vector<8x32xbf16>
    %c0_44 = arith.constant 0 : index
    %c0_45 = arith.constant 0 : index
    %107 = vector.load %arg10[%c0_44, %c0_45] : memref<32x128xbf16, #tpu.memory_space<vmem>>, vector<32x128xbf16>
    %cst_46 = arith.constant dense<0.000000e+00> : vector<8x128xf32>
    %108 = tpu.matmul %106, %107, %cst_46 {dimension_numbers = #tpu.dot_dimension_numbers<[1], [0], [0], [1], [0, 0, 1, 1], [], []>} : vector<8x32xbf16>, vector<32x128xbf16>, vector<8x128xf32> -> vector<8x128xf32>
    %c0_47 = arith.constant 0 : index
    %c0_48 = arith.constant 0 : index
    %109 = vector.load %arg11[%c0_47, %c0_48] : memref<1x128xf32, #tpu.memory_space<vmem>>, vector<1x128xf32>
    %110 = vector.broadcast %109 : vector<1x128xf32> to vector<8x128xf32>
    %111 = arith.addf %108, %110 : vector<8x128xf32>
    %cst_49 = arith.constant 5.000000e-01 : f32
    %112 = vector.broadcast %cst_49 : f32 to vector<8x128xf32>
    %113 = arith.mulf %112, %111 : vector<8x128xf32>
    %cst_50 = arith.constant 0.707106769 : f32
    %114 = vector.broadcast %cst_50 : f32 to vector<8x128xf32>
    %115 = arith.mulf %111, %114 : vector<8x128xf32>
    %cst_51 = arith.constant 0.000000e+00 : f32
    %116 = vector.broadcast %cst_51 : f32 to vector<8x128xf32>
    %117 = arith.cmpf oge, %115, %116 : vector<8x128xf32>
    %cst_52 = arith.constant 1.000000e+00 : f32
    %cst_53 = arith.constant -1.000000e+00 : f32
    %118 = vector.broadcast %cst_52 : f32 to vector<8x128xf32>
    %119 = vector.broadcast %cst_53 : f32 to vector<8x128xf32>
    %120 = arith.select %117, %118, %119 : vector<8x128xi1>, vector<8x128xf32>
    %121 = math.absf %115 : vector<8x128xf32>
    %cst_54 = arith.constant 0.327591091 : f32
    %122 = vector.broadcast %cst_54 : f32 to vector<8x128xf32>
    %123 = arith.mulf %122, %121 : vector<8x128xf32>
    %cst_55 = arith.constant 1.000000e+00 : f32
    %124 = vector.broadcast %cst_55 : f32 to vector<8x128xf32>
    %125 = arith.addf %124, %123 : vector<8x128xf32>
    %126 = tpu.reciprocal %125 {approx = true} : vector<8x128xf32> -> vector<8x128xf32>
    %cst_56 = arith.constant 1.06140542 : f32
    %127 = vector.broadcast %cst_56 : f32 to vector<8x128xf32>
    %128 = arith.mulf %127, %126 : vector<8x128xf32>
    %cst_57 = arith.constant -1.45315206 : f32
    %129 = vector.broadcast %cst_57 : f32 to vector<8x128xf32>
    %130 = arith.addf %128, %129 : vector<8x128xf32>
    %131 = arith.mulf %130, %126 : vector<8x128xf32>
    %cst_58 = arith.constant 1.42141378 : f32
    %132 = vector.broadcast %cst_58 : f32 to vector<8x128xf32>
    %133 = arith.addf %131, %132 : vector<8x128xf32>
    %134 = arith.mulf %133, %126 : vector<8x128xf32>
    %cst_59 = arith.constant -0.284496725 : f32
    %135 = vector.broadcast %cst_59 : f32 to vector<8x128xf32>
    %136 = arith.addf %134, %135 : vector<8x128xf32>
    %137 = arith.mulf %136, %126 : vector<8x128xf32>
    %cst_60 = arith.constant 0.254829586 : f32
    %138 = vector.broadcast %cst_60 : f32 to vector<8x128xf32>
    %139 = arith.addf %137, %138 : vector<8x128xf32>
    %140 = arith.mulf %139, %126 : vector<8x128xf32>
    %cst_61 = arith.constant 0.000000e+00 : f32
    %141 = vector.broadcast %cst_61 : f32 to vector<8x128xf32>
    %142 = arith.subf %141, %121 : vector<8x128xf32>
    %143 = arith.mulf %142, %121 : vector<8x128xf32>
    %144 = math.exp %143 : vector<8x128xf32>
    %145 = arith.mulf %140, %144 : vector<8x128xf32>
    %cst_62 = arith.constant 1.000000e+00 : f32
    %146 = vector.broadcast %cst_62 : f32 to vector<8x128xf32>
    %147 = arith.subf %146, %145 : vector<8x128xf32>
    %148 = arith.mulf %120, %147 : vector<8x128xf32>
    %cst_63 = arith.constant 1.000000e+00 : f32
    %149 = vector.broadcast %cst_63 : f32 to vector<8x128xf32>
    %150 = arith.addf %149, %148 : vector<8x128xf32>
    %151 = arith.mulf %113, %150 : vector<8x128xf32>
    %152 = arith.truncf %151 : vector<8x128xf32> to vector<8x128xbf16>
    %c0_64 = arith.constant 0 : index
    %c0_65 = arith.constant 0 : index
    %153 = vector.load %arg12[%c0_64, %c0_65] : memref<128x32xbf16, #tpu.memory_space<vmem>>, vector<128x32xbf16>
    %cst_66 = arith.constant dense<0.000000e+00> : vector<8x32xf32>
    %154 = tpu.matmul %152, %153, %cst_66 {dimension_numbers = #tpu.dot_dimension_numbers<[1], [0], [0], [1], [0, 0, 1, 1], [], []>} : vector<8x128xbf16>, vector<128x32xbf16>, vector<8x32xf32> -> vector<8x32xf32>
    %c0_67 = arith.constant 0 : index
    %c0_68 = arith.constant 0 : index
    %155 = vector.load %arg13[%c0_67, %c0_68] : memref<1x32xf32, #tpu.memory_space<vmem>>, vector<1x32xf32>
    %156 = vector.broadcast %155 : vector<1x32xf32> to vector<8x32xf32>
    %157 = arith.addf %154, %156 : vector<8x32xf32>
    %158 = arith.addf %81, %157 : vector<8x32xf32>
    %159 = vector.shape_cast %158 : vector<8x32xf32> to vector<1x8x32xf32>
    %c0_69 = arith.constant 0 : index
    %c0_70 = arith.constant 0 : index
    %c0_71 = arith.constant 0 : index
    %160 = vector.load %arg14[%c0_69, %c0_70, %c0_71] : memref<1x8x32xf32, #tpu.memory_space<vmem>>, vector<1x8x32xf32>
    tpu.vector_store %arg14[%c0_69, %c0_70, %c0_71], %159 {strides = array<i32>} : memref<1x8x32xf32, #tpu.memory_space<vmem>>, vector<1x8x32xf32>,
    return
  }
  func.func @transform_0(%arg0: i32) -> (i32, i32, i32) {
    %c0_i32 = arith.constant 0 : i32
    %c0_i32_0 = arith.constant 0 : i32
    %c0_i32_1 = arith.constant 0 : i32
    return %arg0, %c0_i32, %c0_i32_0 : i32, i32, i32
  }
  func.func @transform_1(%arg0: i32) -> (i32, i32) {
    %c0_i32 = arith.constant 0 : i32
    %c0_i32_0 = arith.constant 0 : i32
    %c0_i32_1 = arith.constant 0 : i32
    return %c0_i32, %c0_i32_0 : i32, i32
  }
  func.func @transform_2(%arg0: i32) -> (i32, i32) {
    %c0_i32 = arith.constant 0 : i32
    %c0_i32_0 = arith.constant 0 : i32
    %c0_i32_1 = arith.constant 0 : i32
    return %c0_i32, %c0_i32_0 : i32, i32
  }
  func.func @transform_3(%arg0: i32) -> (i32, i32) {
    %c0_i32 = arith.constant 0 : i32
    %c0_i32_0 = arith.constant 0 : i32
    %c0_i32_1 = arith.constant 0 : i32
    return %c0_i32, %c0_i32_0 : i32, i32
  }
  func.func @transform_4(%arg0: i32) -> (i32, i32) {
    %c0_i32 = arith.constant 0 : i32
    %c0_i32_0 = arith.constant 0 : i32
    %c0_i32_1 = arith.constant 0 : i32
    return %c0_i32, %c0_i32_0 : i32, i32
  }
  func.func @transform_5(%arg0: i32) -> (i32, i32) {
    %c0_i32 = arith.constant 0 : i32
    %c0_i32_0 = arith.constant 0 : i32
    %c0_i32_1 = arith.constant 0 : i32
    return %c0_i32, %c0_i32_0 : i32, i32
  }
  func.func @transform_6(%arg0: i32) -> (i32, i32) {
    %c0_i32 = arith.constant 0 : i32
    %c0_i32_0 = arith.constant 0 : i32
    %c0_i32_1 = arith.constant 0 : i32
    return %c0_i32, %c0_i32_0 : i32, i32
  }
  func.func @transform_7(%arg0: i32) -> (i32, i32) {
    %c0_i32 = arith.constant 0 : i32
    %c0_i32_0 = arith.constant 0 : i32
    %c0_i32_1 = arith.constant 0 : i32
    return %c0_i32, %c0_i32_0 : i32, i32
  }
  func.func @transform_8(%arg0: i32) -> (i32, i32) {
    %c0_i32 = arith.constant 0 : i32
    %c0_i32_0 = arith.constant 0 : i32
    %c0_i32_1 = arith.constant 0 : i32
    return %c0_i32, %c0_i32_0 : i32, i32
  }
  func.func @transform_9(%arg0: i32) -> (i32, i32) {
    %c0_i32 = arith.constant 0 : i32
    %c0_i32_0 = arith.constant 0 : i32
    %c0_i32_1 = arith.constant 0 : i32
    return %c0_i32, %c0_i32_0 : i32, i32
  }
  func.func @transform_10(%arg0: i32) -> (i32, i32) {
    %c0_i32 = arith.constant 0 : i32
    %c0_i32_0 = arith.constant 0 : i32
    %c0_i32_1 = arith.constant 0 : i32
    return %c0_i32, %c0_i32_0 : i32, i32
  }
  func.func @transform_11(%arg0: i32) -> (i32, i32) {
    %c0_i32 = arith.constant 0 : i32
    %c0_i32_0 = arith.constant 0 : i32
    %c0_i32_1 = arith.constant 0 : i32
    return %c0_i32, %c0_i32_0 : i32, i32
  }
  func.func @transform_12(%arg0: i32) -> (i32, i32) {
    %c0_i32 = arith.constant 0 : i32
    %c0_i32_0 = arith.constant 0 : i32
    %c0_i32_1 = arith.constant 0 : i32
    return %c0_i32, %c0_i32_0 : i32, i32
  }
  func.func @transform_13(%arg0: i32) -> (i32, i32, i32) {
    %c0_i32 = arith.constant 0 : i32
    %c0_i32_0 = arith.constant 0 : i32
    %c0_i32_1 = arith.constant 0 : i32
    return %arg0, %c0_i32, %c0_i32_0 : i32, i32, i32
  }
}

</mosaic_0001>

<llo_original>
// kernel: tpu_custom_call.1
$region0: #{tpu_custom_call.1}
  #allocation0 [shape = 'u32[]', space=smem, size = 0x4, offset = 0x4, fixed_abs, tag = 'smem constant byte address 0x4 - core index']
  #allocation1 [shape = 'u32[144,128]{1,0:T(1,128)}', space=vmem, size = 0x12000, scoped, tag = 'internal scratch']
  %s0 = inlined_call_operand.hbm [shape: f32[2,8,32], index: 0, kind: input, shape index: {}]
  %s1 = inlined_call_operand.hbm [shape: f32[1,32], index: 1, kind: input, shape index: {}]
  %s2 = inlined_call_operand.hbm [shape: f32[1,32], index: 2, kind: input, shape index: {}]
  %s3 = inlined_call_operand.hbm [shape: bf16[32,8], index: 3, kind: input, shape index: {}]
  %s4 = inlined_call_operand.hbm [shape: f32[32,1], index: 4, kind: input, shape index: {}]
  %s5 = inlined_call_operand.hbm [shape: bf16[8,32], index: 5, kind: input, shape index: {}]
  %s6 = inlined_call_operand.hbm [shape: f32[8,1], index: 6, kind: input, shape index: {}]
  %s7 = inlined_call_operand.hbm [shape: f32[1,32], index: 7, kind: input, shape index: {}]
  %s8 = inlined_call_operand.hbm [shape: f32[1,32], index: 8, kind: input, shape index: {}]
  %s9 = inlined_call_operand.hbm [shape: bf16[32,128], index: 9, kind: input, shape index: {}]
  %s10 = inlined_call_operand.hbm [shape: f32[1,128], index: 10, kind: input, shape index: {}]
  %s11 = inlined_call_operand.hbm [shape: bf16[128,32], index: 11, kind: input, shape index: {}]
  %s12 = inlined_call_operand.hbm [shape: f32[1,32], index: 12, kind: input, shape index: {}]
  %s13 = inlined_call_operand.hbm [shape: f32[2,8,32], index: 13, kind: output, shape index: {}]
  %s14 = sld [smem:[#allocation0]]
  $region137: #{tpu_custom_call.1} parent=0
    _
  %s16 = ssub.s32 1, %s14
  %s17 = scalar_select 0, %s16, %s14
  $region1: #{tpu_custom_call.1} parent=0
    #allocation2 [shape = 'u8[8192]{0}', space=vmem, size = 0x2000, scoped, tag = 'input window, operand 0']
    #allocation3 [shape = 's32[2]{0}', space=sflag, size = 0x8, scoped, tag = 'scoped memory for tpu_custom_call.1']
    #allocation4 [shape = 's32[2]{0}', space=sflag, size = 0x8, scoped, tag = 'scoped memory for tpu_custom_call.1']
    #allocation5 [shape = 'u8[512]{0}', space=vmem, size = 0x400, scoped, tag = 'input window, operand 1, single buffered']
    #allocation6 [shape = 's32[1]{0}', space=sflag, size = 0x4, scoped, tag = 'scoped memory for tpu_custom_call.1']
    #allocation7 [shape = 'u8[512]{0}', space=vmem, size = 0x400, scoped, tag = 'input window, operand 2, single buffered']
    #allocation8 [shape = 'u8[8192]{0}', space=vmem, size = 0x2000, scoped, tag = 'input window, operand 3, single buffered']
    #allocation9 [shape = 's32[1]{0}', space=sflag, size = 0x4, scoped, tag = 'scoped memory for tpu_custom_call.1']
    #allocation10 [shape = 'u8[16384]{0}', space=vmem, size = 0x4000, scoped, tag = 'input window, operand 4, single buffered']
    #allocation11 [shape = 'u8[2048]{0}', space=vmem, size = 0x800, scoped, tag = 'input window, operand 5, single buffered']
    #allocation12 [shape = 's32[1]{0}', space=sflag, size = 0x4, scoped, tag = 'scoped memory for tpu_custom_call.1']
    #allocation13 [shape = 'u8[4096]{0}', space=vmem, size = 0x1000, scoped, tag = 'input window, operand 6, single buffered']
    #allocation14 [shape = 'u8[512]{0}', space=vmem, size = 0x400, scoped, tag = 'input window, operand 7, single buffered']
    #allocation15 [shape = 's32[1]{0}', space=sflag, size = 0x4, scoped, tag = 'scoped memory for tpu_custom_call.1']
    #allocation16 [shape = 'u8[512]{0}', space=vmem, size = 0x400, scoped, tag = 'input window, operand 8, single buffered']
    #allocation17 [shape = 'u8[8192]{0}', space=vmem, size = 0x2000, scoped, tag = 'input window, operand 9, single buffered']
    #allocation18 [shape = 's32[1]{0}', space=sflag, size = 0x4, scoped, tag = 'scoped memory for tpu_custom_call.1']
    #allocation19 [shape = 'u8[512]{0}', space=vmem, size = 0x400, scoped, tag = 'input window, operand 10, single buffered']
    #allocation20 [shape = 'u8[32768]{0}', space=vmem, size = 0x8000, scoped, tag = 'input window, operand 11, single buffered']
    #allocation21 [shape = 's32[1]{0}', space=sflag, size = 0x4, scoped, tag = 'scoped memory for tpu_custom_call.1']
    #allocation22 [shape = 'u8[512]{0}', space=vmem, size = 0x400, scoped, tag = 'input window, operand 12, single buffered']
    #allocation23 [shape = 'u8[8192]{0}', space=vmem, size = 0x2000, scoped, tag = 'output window, operand 0']
    %18 = vsyncpa [#allocation3], 0
    %s19 = scalar_lea.sflag [#allocation3], 1
    %20 = vsyncpa %s19, 0
    %21 = vsyncpa [#allocation6], 0
    %22 = vsyncpa [#allocation9], 0
    %23 = vsyncpa [#allocation12], 0
    %24 = vsyncpa [#allocation15], 0
    %25 = vsyncpa [#allocation18], 0
    %26 = vsyncpa [#allocation21], 0
    %27 = vsyncpa [#allocation4], 0
    %s28 = scalar_lea.sflag [#allocation4], 1
    %29 = vsyncpa %s28, 0
    loop: start=0, step=1, limit=4
    $region2: #{tpu_custom_call.1} parent=1 // loop_pre_header
      _
    $region3: #{tpu_custom_call.1} parent=1 // loop_header
      %s31 = sphi 0, %s35
      %p32 = scmp.ge.s32.totalorder %s31, 4
      %s41 = sphi 0, %s43
      %s44 = sphi 0, %s41
      %s45 = sphi 0, %s44
      %s61 = sphi 0, %s45
      %s65 = sphi 0, %s65
      %s67 = sphi 0, %s65
      %s68 = sphi 0, %s67
      %s82 = sphi 0, %s68
      %s86 = sphi 0, %s86
      %s88 = sphi 0, %s86
      %s89 = sphi 0, %s88
      %s103 = sphi 0, %s89
      %s107 = sphi 0, %s107
      %s109 = sphi 0, %s107
      %s110 = sphi 0, %s109
      %s124 = sphi 0, %s110
      %s128 = sphi 0, %s128
      %s130 = sphi 0, %s128
      %s131 = sphi 0, %s130
      %s145 = sphi 0, %s131
      %s149 = sphi 0, %s149
      %s151 = sphi 0, %s149
      %s152 = sphi 0, %s151
      %s166 = sphi 0, %s152
      %s170 = sphi 0, %s170
      %s172 = sphi 0, %s170
      %s173 = sphi 0, %s172
      %s187 = sphi 0, %s173
      %s191 = sphi 0, %s191
      %s193 = sphi 0, %s191
      %s194 = sphi 0, %s193
      %s208 = sphi 0, %s194
      %s212 = sphi 0, %s212
      %s214 = sphi 0, %s212
      %s215 = sphi 0, %s214
      %s229 = sphi 0, %s215
      %s233 = sphi 0, %s233
      %s235 = sphi 0, %s233
      %s236 = sphi 0, %s235
      %s250 = sphi 0, %s236
      %s254 = sphi 0, %s254
      %s256 = sphi 0, %s254
      %s257 = sphi 0, %s256
      %s271 = sphi 0, %s257
      %s275 = sphi 0, %s275
      %s277 = sphi 0, %s275
      %s278 = sphi 0, %s277
      %s292 = sphi 0, %s278
      %s296 = sphi 0, %s296
      %s298 = sphi 0, %s296
      %s299 = sphi 0, %s298
      %s313 = sphi 0, %s299
      %s319 = sphi 0, %s321
      %s322 = sphi 0, %s319
      %s323 = sphi 0, %s322
      %s339 = sphi 0, %s323
    $region4: #{tpu_custom_call.1} parent=1 // loop_header_branch
      %34 = sbr.rel (%p32) target = $region8
    $region5: #{tpu_custom_call.1} parent=1 // loop_body
      %s36 = ssub.s32 %s31, 1
      %s37 = ssub.s32 %s31, 2
      %s38 = sadd.s32 %s31, 1
      %s39 = ssub.s32 %s31, %s38
      %p40 = scmp.eq.s32.totalorder %s39, 0
      %s42 = sadd.s32 %s41, 1
      %s43 = scalar_select %p40, %s41, %s42
      %p46 = pneg %p40
      %p47 = scmp.eq.s32.totalorder %s31, 1
      %p48 = por %p46, %p47
      %p49 = scmp.ne.s32.totalorder %s41, %s44
      %p50 = scmp.eq.s32.totalorder %s31, 0
      %p51 = por %p49, %p50
      %p52 = scmp.ne.s32.totalorder %s41, %s44
      %p53 = scmp.eq.s32.totalorder %s36, 1
      %p54 = por %p52, %p53
      %p55 = scmp.ne.s32.totalorder %s44, %s45
      %p56 = scmp.eq.s32.totalorder %s36, 0
      %p57 = por %p55, %p56
      %p58 = scmp.ne.s32.totalorder %s44, %s45
      %p59 = scmp.eq.s32.totalorder %s37, 1
      %p60 = por %p58, %p59
      %p62 = scmp.ne.s32.totalorder %s45, %s61
      %p63 = scmp.eq.s32.totalorder %s37, 0
      %p64 = por %p62, %p63
      %s66 = sadd.s32 %s65, 1
      %p69 = scmp.eq.s32.totalorder %s31, 1
      %p70 = scmp.ne.s32.totalorder %s65, %s67
      %p71 = scmp.eq.s32.totalorder %s31, 0
      %p72 = por %p70, %p71
      %p73 = scmp.ne.s32.totalorder %s65, %s67
      %p74 = scmp.eq.s32.totalorder %s36, 1
      %p75 = por %p73, %p74
      %p76 = scmp.ne.s32.totalorder %s67, %s68
      %p77 = scmp.eq.s32.totalorder %s36, 0
      %p78 = por %p76, %p77
      %p79 = scmp.ne.s32.totalorder %s67, %s68
      %p80 = scmp.eq.s32.totalorder %s37, 1
      %p81 = por %p79, %p80
      %p83 = scmp.ne.s32.totalorder %s68, %s82
      %p84 = scmp.eq.s32.totalorder %s37, 0
      %p85 = por %p83, %p84
      %s87 = sadd.s32 %s86, 1
      %p90 = scmp.eq.s32.totalorder %s31, 1
      %p91 = scmp.ne.s32.totalorder %s86, %s88
      %p92 = scmp.eq.s32.totalorder %s31, 0
      %p93 = por %p91, %p92
      %p94 = scmp.ne.s32.totalorder %s86, %s88
      %p95 = scmp.eq.s32.totalorder %s36, 1
      %p96 = por %p94, %p95
      %p97 = scmp.ne.s32.totalorder %s88, %s89
      %p98 = scmp.eq.s32.totalorder %s36, 0
      %p99 = por %p97, %p98
      %p100 = scmp.ne.s32.totalorder %s88, %s89
      %p101 = scmp.eq.s32.totalorder %s37, 1
      %p102 = por %p100, %p101
      %p104 = scmp.ne.s32.totalorder %s89, %s103
      %p105 = scmp.eq.s32.totalorder %s37, 0
      %p106 = por %p104, %p105
      %s108 = sadd.s32 %s107, 1
      %p111 = scmp.eq.s32.totalorder %s31, 1
      %p112 = scmp.ne.s32.totalorder %s107, %s109
      %p113 = scmp.eq.s32.totalorder %s31, 0
      %p114 = por %p112, %p113
      %p115 = scmp.ne.s32.totalorder %s107, %s109
      %p116 = scmp.eq.s32.totalorder %s36, 1
      %p117 = por %p115, %p116
      %p118 = scmp.ne.s32.totalorder %s109, %s110
      %p119 = scmp.eq.s32.totalorder %s36, 0
      %p120 = por %p118, %p119
      %p121 = scmp.ne.s32.totalorder %s109, %s110
      %p122 = scmp.eq.s32.totalorder %s37, 1
      %p123 = por %p121, %p122
      %p125 = scmp.ne.s32.totalorder %s110, %s124
      %p126 = scmp.eq.s32.totalorder %s37, 0
      %p127 = por %p125, %p126
      %s129 = sadd.s32 %s128, 1
      %p132 = scmp.eq.s32.totalorder %s31, 1
      %p133 = scmp.ne.s32.totalorder %s128, %s130
      %p134 = scmp.eq.s32.totalorder %s31, 0
      %p135 = por %p133, %p134
      %p136 = scmp.ne.s32.totalorder %s128, %s130
      %p137 = scmp.eq.s32.totalorder %s36, 1
      %p138 = por %p136, %p137
      %p139 = scmp.ne.s32.totalorder %s130, %s131
      %p140 = scmp.eq.s32.totalorder %s36, 0
      %p141 = por %p139, %p140
      %p142 = scmp.ne.s32.totalorder %s130, %s131
      %p143 = scmp.eq.s32.totalorder %s37, 1
      %p144 = por %p142, %p143
      %p146 = scmp.ne.s32.totalorder %s131, %s145
      %p147 = scmp.eq.s32.totalorder %s37, 0
      %p148 = por %p146, %p147
      %s150 = sadd.s32 %s149, 1
      %p153 = scmp.eq.s32.totalorder %s31, 1
      %p154 = scmp.ne.s32.totalorder %s149, %s151
      %p155 = scmp.eq.s32.totalorder %s31, 0
      %p156 = por %p154, %p155
      %p157 = scmp.ne.s32.totalorder %s149, %s151
      %p158 = scmp.eq.s32.totalorder %s36, 1
      %p159 = por %p157, %p158
      %p160 = scmp.ne.s32.totalorder %s151, %s152
      %p161 = scmp.eq.s32.totalorder %s36, 0
      %p162 = por %p160, %p161
      %p163 = scmp.ne.s32.totalorder %s151, %s152
      %p164 = scmp.eq.s32.totalorder %s37, 1
      %p165 = por %p163, %p164
      %p167 = scmp.ne.s32.totalorder %s152, %s166
      %p168 = scmp.eq.s32.totalorder %s37, 0
      %p169 = por %p167, %p168
      %s171 = sadd.s32 %s170, 1
      %p174 = scmp.eq.s32.totalorder %s31, 1
      %p175 = scmp.ne.s32.totalorder %s170, %s172
      %p176 = scmp.eq.s32.totalorder %s31, 0
      %p177 = por %p175, %p176
      %p178 = scmp.ne.s32.totalorder %s170, %s172
      %p179 = scmp.eq.s32.totalorder %s36, 1
      %p180 = por %p178, %p179
      %p181 = scmp.ne.s32.totalorder %s172, %s173
      %p182 = scmp.eq.s32.totalorder %s36, 0
      %p183 = por %p181, %p182
      %p184 = scmp.ne.s32.totalorder %s172, %s173
      %p185 = scmp.eq.s32.totalorder %s37, 1
      %p186 = por %p184, %p185
      %p188 = scmp.ne.s32.totalorder %s173, %s187
      %p189 = scmp.eq.s32.totalorder %s37, 0
      %p190 = por %p188, %p189
      %s192 = sadd.s32 %s191, 1
      %p195 = scmp.eq.s32.totalorder %s31, 1
      %p196 = scmp.ne.s32.totalorder %s191, %s193
      %p197 = scmp.eq.s32.totalorder %s31, 0
      %p198 = por %p196, %p197
      %p199 = scmp.ne.s32.totalorder %s191, %s193
      %p200 = scmp.eq.s32.totalorder %s36, 1
      %p201 = por %p199, %p200
      %p202 = scmp.ne.s32.totalorder %s193, %s194
      %p203 = scmp.eq.s32.totalorder %s36, 0
      %p204 = por %p202, %p203
      %p205 = scmp.ne.s32.totalorder %s193, %s194
      %p206 = scmp.eq.s32.totalorder %s37, 1
      %p207 = por %p205, %p206
      %p209 = scmp.ne.s32.totalorder %s194, %s208
      %p210 = scmp.eq.s32.totalorder %s37, 0
      %p211 = por %p209, %p210
      %s213 = sadd.s32 %s212, 1
      %p216 = scmp.eq.s32.totalorder %s31, 1
      %p217 = scmp.ne.s32.totalorder %s212, %s214
      %p218 = scmp.eq.s32.totalorder %s31, 0
      %p219 = por %p217, %p218
      %p220 = scmp.ne.s32.totalorder %s212, %s214
      %p221 = scmp.eq.s32.totalorder %s36, 1
      %p222 = por %p220, %p221
      %p223 = scmp.ne.s32.totalorder %s214, %s215
      %p224 = scmp.eq.s32.totalorder %s36, 0
      %p225 = por %p223, %p224
      %p226 = scmp.ne.s32.totalorder %s214, %s215
      %p227 = scmp.eq.s32.totalorder %s37, 1
      %p228 = por %p226, %p227
      %p230 = scmp.ne.s32.totalorder %s215, %s229
      %p231 = scmp.eq.s32.totalorder %s37, 0
      %p232 = por %p230, %p231
      %s234 = sadd.s32 %s233, 1
      %p237 = scmp.eq.s32.totalorder %s31, 1
      %p238 = scmp.ne.s32.totalorder %s233, %s235
      %p239 = scmp.eq.s32.totalorder %s31, 0
      %p240 = por %p238, %p239
      %p241 = scmp.ne.s32.totalorder %s233, %s235
      %p242 = scmp.eq.s32.totalorder %s36, 1
      %p243 = por %p241, %p242
      %p244 = scmp.ne.s32.totalorder %s235, %s236
      %p245 = scmp.eq.s32.totalorder %s36, 0
      %p246 = por %p244, %p245
      %p247 = scmp.ne.s32.totalorder %s235, %s236
      %p248 = scmp.eq.s32.totalorder %s37, 1
      %p249 = por %p247, %p248
      %p251 = scmp.ne.s32.totalorder %s236, %s250
      %p252 = scmp.eq.s32.totalorder %s37, 0
      %p253 = por %p251, %p252
      %s255 = sadd.s32 %s254, 1
      %p258 = scmp.eq.s32.totalorder %s31, 1
      %p259 = scmp.ne.s32.totalorder %s254, %s256
      %p260 = scmp.eq.s32.totalorder %s31, 0
      %p261 = por %p259, %p260
      %p262 = scmp.ne.s32.totalorder %s254, %s256
      %p263 = scmp.eq.s32.totalorder %s36, 1
      %p264 = por %p262, %p263
      %p265 = scmp.ne.s32.totalorder %s256, %s257
      %p266 = scmp.eq.s32.totalorder %s36, 0
      %p267 = por %p265, %p266
      %p268 = scmp.ne.s32.totalorder %s256, %s257
      %p269 = scmp.eq.s32.totalorder %s37, 1
      %p270 = por %p268, %p269
      %p272 = scmp.ne.s32.totalorder %s257, %s271
      %p273 = scmp.eq.s32.totalorder %s37, 0
      %p274 = por %p272, %p273
      %s276 = sadd.s32 %s275, 1
      %p279 = scmp.eq.s32.totalorder %s31, 1
      %p280 = scmp.ne.s32.totalorder %s275, %s277
      %p281 = scmp.eq.s32.totalorder %s31, 0
      %p282 = por %p280, %p281
      %p283 = scmp.ne.s32.totalorder %s275, %s277
      %p284 = scmp.eq.s32.totalorder %s36, 1
      %p285 = por %p283, %p284
      %p286 = scmp.ne.s32.totalorder %s277, %s278
      %p287 = scmp.eq.s32.totalorder %s36, 0
      %p288 = por %p286, %p287
      %p289 = scmp.ne.s32.totalorder %s277, %s278
      %p290 = scmp.eq.s32.totalorder %s37, 1
      %p291 = por %p289, %p290
      %p293 = scmp.ne.s32.totalorder %s278, %s292
      %p294 = scmp.eq.s32.totalorder %s37, 0
      %p295 = por %p293, %p294
      %s297 = sadd.s32 %s296, 1
      %p300 = scmp.eq.s32.totalorder %s31, 1
      %p301 = scmp.ne.s32.totalorder %s296, %s298
      %p302 = scmp.eq.s32.totalorder %s31, 0
      %p303 = por %p301, %p302
      %p304 = scmp.ne.s32.totalorder %s296, %s298
      %p305 = scmp.eq.s32.totalorder %s36, 1
      %p306 = por %p304, %p305
      %p307 = scmp.ne.s32.totalorder %s298, %s299
      %p308 = scmp.eq.s32.totalorder %s36, 0
      %p309 = por %p307, %p308
      %p310 = scmp.ne.s32.totalorder %s298, %s299
      %p311 = scmp.eq.s32.totalorder %s37, 1
      %p312 = por %p310, %p311
      %p314 = scmp.ne.s32.totalorder %s299, %s313
      %p315 = scmp.eq.s32.totalorder %s37, 0
      %p316 = por %p314, %p315
      %s317 = ssub.s32 %s31, %s38
      %p318 = scmp.eq.s32.totalorder %s317, 0
      %s320 = sadd.s32 %s319, 1
      %s321 = scalar_select %p318, %s319, %s320
      %p324 = pneg %p318
      %p325 = scmp.eq.s32.totalorder %s31, 1
      %p326 = por %p324, %p325
      %p327 = scmp.ne.s32.totalorder %s319, %s322
      %p328 = scmp.eq.s32.totalorder %s31, 0
      %p329 = por %p327, %p328
      %p330 = scmp.ne.s32.totalorder %s319, %s322
      %p331 = scmp.eq.s32.totalorder %s36, 1
      %p332 = por %p330, %p331
      %p333 = scmp.ne.s32.totalorder %s322, %s323
      %p334 = scmp.eq.s32.totalorder %s36, 0
      %p335 = por %p333, %p334
      %p336 = scmp.ne.s32.totalorder %s322, %s323
      %p337 = scmp.eq.s32.totalorder %s37, 1
      %p338 = por %p336, %p337
      %p340 = scmp.ne.s32.totalorder %s323, %s339
      %p341 = scmp.eq.s32.totalorder %s37, 0
      %p342 = por %p340, %p341
      %p343 = scmp.le.s32.totalorder 1, %s31
      %p344 = scmp.lt.s32.totalorder %s31, 3
      %p345 = pnand %p343, %p344
      %p346 = pneg %p345
      // Predicated region
      $region9: #{tpu_custom_call.1} parent=5 // pred_check
        _
      $region10: #{tpu_custom_call.1} parent=5 // pred_check_branch
        %348 = sbr.rel (%p345) target = $region12
      $region11: #{tpu_custom_call.1} parent=5 // pred_region
        %s349 = ssub.s32 %s31, 1
        // Predicated region
        $region13: #{tpu_custom_call.1} parent=11 // pred_check
          %p350 = pneg %p78
        $region14: #{tpu_custom_call.1} parent=11 // pred_check_branch
          %352 = sbr.rel (%p350) target = $region16
        $region15: #{tpu_custom_call.1} parent=11 // pred_region
          %s354 = ssub.s32 16, 16
          %355 = vsyncadd [#allocation6], %s354
          %s357 = sshll.u32 [#allocation5], 4
          %s358 = int_to_ptr.vmem [resolvable:$true] %s357
          %360 = dma.hbm_to_vmem [thread:$0]  %s1, 16, %s358, [#allocation6]
        $region16: #{tpu_custom_call.1} parent=11 // pred_fallthru
          _
        // Predicated region
        $region17: #{tpu_custom_call.1} parent=11 // pred_check
          %p361 = pneg %p99
        $region18: #{tpu_custom_call.1} parent=11 // pred_check_branch
          %363 = sbr.rel (%p361) target = $region20
        $region19: #{tpu_custom_call.1} parent=11 // pred_region
          %s365 = ssub.s32 16, 16
          %366 = vsyncadd [#allocation6], %s365
          %s368 = sshll.u32 [#allocation7], 4
          %s369 = int_to_ptr.vmem [resolvable:$true] %s368
          %371 = dma.hbm_to_vmem [thread:$0]  %s2, 16, %s369, [#allocation6]
        $region20: #{tpu_custom_call.1} parent=11 // pred_fallthru
          _
        // Predicated region
        $region21: #{tpu_custom_call.1} parent=11 // pred_check
          %p372 = pneg %p120
        $region22: #{tpu_custom_call.1} parent=11 // pred_check_branch
          %374 = sbr.rel (%p372) target = $region24
        $region23: #{tpu_custom_call.1} parent=11 // pred_region
          %s376 = ssub.s32 256, 256
          %377 = vsyncadd [#allocation9], %s376
          %s378 = sshll.u32 [#allocation8], 4
          %s379 = int_to_ptr.vmem [resolvable:$true] %s378
          %384 = dma.hbm_to_vmem [thread:$0]  %s3, 256, %s379, [#allocation9], 64, 64, 4
        $region24: #{tpu_custom_call.1} parent=11 // pred_fallthru
          _
        // Predicated region
        $region25: #{tpu_custom_call.1} parent=11 // pred_check
          %p385 = pneg %p141
        $region26: #{tpu_custom_call.1} parent=11 // pred_check_branch
          %387 = sbr.rel (%p385) target = $region28
        $region27: #{tpu_custom_call.1} parent=11 // pred_region
          %s389 = ssub.s32 512, 512
          %390 = vsyncadd [#allocation9], %s389
          %s391 = sshll.u32 [#allocation10], 4
          %s392 = int_to_ptr.vmem [resolvable:$true] %s391
          %397 = dma.hbm_to_vmem [thread:$0]  %s4, 512, %s392, [#allocation9], 128, 128, 8
        $region28: #{tpu_custom_call.1} parent=11 // pred_fallthru
          _
        // Predicated region
        $region29: #{tpu_custom_call.1} parent=11 // pred_check
          %p398 = pneg %p162
        $region30: #{tpu_custom_call.1} parent=11 // pred_check_branch
          %400 = sbr.rel (%p398) target = $region32
        $region31: #{tpu_custom_call.1} parent=11 // pred_region
          %s402 = ssub.s32 64, 64
          %403 = vsyncadd [#allocation12], %s402
          %s405 = sshll.u32 [#allocation11], 4
          %s406 = int_to_ptr.vmem [resolvable:$true] %s405
          %408 = dma.hbm_to_vmem [thread:$0]  %s5, 64, %s406, [#allocation12]
        $region32: #{tpu_custom_call.1} parent=11 // pred_fallthru
          _
        // Predicated region
        $region33: #{tpu_custom_call.1} parent=11 // pred_check
          %p409 = pneg %p183
        $region34: #{tpu_custom_call.1} parent=11 // pred_check_branch
          %411 = sbr.rel (%p409) target = $region36
        $region35: #{tpu_custom_call.1} parent=11 // pred_region
          %s413 = ssub.s32 128, 128
          %414 = vsyncadd [#allocation12], %s413
          %s416 = sshll.u32 [#allocation13], 4
          %s417 = int_to_ptr.vmem [resolvable:$true] %s416
          %419 = dma.hbm_to_vmem [thread:$0]  %s6, 128, %s417, [#allocation12]
        $region36: #{tpu_custom_call.1} parent=11 // pred_fallthru
          _
        // Predicated region
        $region37: #{tpu_custom_call.1} parent=11 // pred_check
          %p420 = pneg %p204
        $region38: #{tpu_custom_call.1} parent=11 // pred_check_branch
          %422 = sbr.rel (%p420) target = $region40
        $region39: #{tpu_custom_call.1} parent=11 // pred_region
          %s424 = ssub.s32 16, 16
          %425 = vsyncadd [#allocation15], %s424
          %s427 = sshll.u32 [#allocation14], 4
          %s428 = int_to_ptr.vmem [resolvable:$true] %s427
          %430 = dma.hbm_to_vmem [thread:$0]  %s7, 16, %s428, [#allocation15]
        $region40: #{tpu_custom_call.1} parent=11 // pred_fallthru
          _
        // Predicated region
        $region41: #{tpu_custom_call.1} parent=11 // pred_check
          %p431 = pneg %p225
        $region42: #{tpu_custom_call.1} parent=11 // pred_check_branch
          %433 = sbr.rel (%p431) target = $region44
        $region43: #{tpu_custom_call.1} parent=11 // pred_region
          %s435 = ssub.s32 16, 16
          %436 = vsyncadd [#allocation15], %s435
          %s438 = sshll.u32 [#allocation16], 4
          %s439 = int_to_ptr.vmem [resolvable:$true] %s438
          %441 = dma.hbm_to_vmem [thread:$0]  %s8, 16, %s439, [#allocation15]
        $region44: #{tpu_custom_call.1} parent=11 // pred_fallthru
          _
        // Predicated region
        $region45: #{tpu_custom_call.1} parent=11 // pred_check
          %p442 = pneg %p246
        $region46: #{tpu_custom_call.1} parent=11 // pred_check_branch
          %444 = sbr.rel (%p442) target = $region48
        $region47: #{tpu_custom_call.1} parent=11 // pred_region
          %s446 = ssub.s32 256, 256
          %447 = vsyncadd [#allocation18], %s446
          %s448 = sshll.u32 [#allocation17], 4
          %s449 = int_to_ptr.vmem [resolvable:$true] %s448
          %454 = dma.hbm_to_vmem [thread:$0]  %s9, 256, %s449, [#allocation18], 64, 64, 4
        $region48: #{tpu_custom_call.1} parent=11 // pred_fallthru
          _
        // Predicated region
        $region49: #{tpu_custom_call.1} parent=11 // pred_check
          %p455 = pneg %p267
        $region50: #{tpu_custom_call.1} parent=11 // pred_check_branch
          %457 = sbr.rel (%p455) target = $region52
        $region51: #{tpu_custom_call.1} parent=11 // pred_region
          %s459 = ssub.s32 16, 16
          %460 = vsyncadd [#allocation18], %s459
          %s462 = sshll.u32 [#allocation19], 4
          %s463 = int_to_ptr.vmem [resolvable:$true] %s462
          %465 = dma.hbm_to_vmem [thread:$0]  %s10, 16, %s463, [#allocation18]
        $region52: #{tpu_custom_call.1} parent=11 // pred_fallthru
          _
        // Predicated region
        $region53: #{tpu_custom_call.1} parent=11 // pred_check
          %p466 = pneg %p288
        $region54: #{tpu_custom_call.1} parent=11 // pred_check_branch
          %468 = sbr.rel (%p466) target = $region56
        $region55: #{tpu_custom_call.1} parent=11 // pred_region
          %s470 = ssub.s32 1024, 1024
          %471 = vsyncadd [#allocation21], %s470
          %s472 = sshll.u32 [#allocation20], 4
          %s473 = int_to_ptr.vmem [resolvable:$true] %s472
          %478 = dma.hbm_to_vmem [thread:$0]  %s11, 1024, %s473, [#allocation21], 64, 64, 4
        $region56: #{tpu_custom_call.1} parent=11 // pred_fallthru
          _
        // Predicated region
        $region57: #{tpu_custom_call.1} parent=11 // pred_check
          %p479 = pneg %p309
        $region58: #{tpu_custom_call.1} parent=11 // pred_check_branch
          %481 = sbr.rel (%p479) target = $region60
        $region59: #{tpu_custom_call.1} parent=11 // pred_region
          %s483 = ssub.s32 16, 16
          %484 = vsyncadd [#allocation21], %s483
          %s486 = sshll.u32 [#allocation22], 4
          %s487 = int_to_ptr.vmem [resolvable:$true] %s486
          %489 = dma.hbm_to_vmem [thread:$0]  %s12, 16, %s487, [#allocation21]
        $region60: #{tpu_custom_call.1} parent=11 // pred_fallthru
          _
      $region12: #{tpu_custom_call.1} parent=5 // pred_fallthru
        _
      %p490 = scmp.lt.s32.totalorder %s31, 2
      // Predicated region
      $region61: #{tpu_custom_call.1} parent=5 // pred_check
        %p491 = pneg %p490
      $region62: #{tpu_custom_call.1} parent=5 // pred_check_branch
        %493 = sbr.rel (%p491) target = $region64
      $region63: #{tpu_custom_call.1} parent=5 // pred_region
        // Predicated region
        $region65: #{tpu_custom_call.1} parent=63 // pred_check
          %p494 = pneg %p51
        $region66: #{tpu_custom_call.1} parent=63 // pred_check_branch
          %496 = sbr.rel (%p494) target = $region68
        $region67: #{tpu_custom_call.1} parent=63 // pred_region
          %s497 = sand.u32 %s41, 1
          %s498 = scalar_lea.sflag [#allocation3], %s497
          %s499 = sand.u32 %s41, 1
          %s500 = smul.addr %s499, 8
          %s501 = scalar_lea.vmem [#allocation2], %s500
          %s503 = ssub.s32 128, 128
          %504 = vsyncadd %s498, %s503
          %s505 = smul.addr %s31, 128
          %s506 = scalar_lea.hbm %s0, %s505
          %s508 = sshll.u32 %s501, 4
          %s509 = int_to_ptr.vmem [resolvable:$true] %s508
          %511 = dma.hbm_to_vmem [thread:$0]  %s506, 128, %s509, %s498
        $region68: #{tpu_custom_call.1} parent=63 // pred_fallthru
          _
      $region64: #{tpu_custom_call.1} parent=5 // pred_fallthru
        _
      %p512 = scmp.le.s32.totalorder 1, %s31
      %p513 = scmp.lt.s32.totalorder %s31, 3
      %p514 = pnand %p512, %p513
      %p515 = pneg %p514
      // Predicated region
      $region69: #{tpu_custom_call.1} parent=5 // pred_check
        _
      $region70: #{tpu_custom_call.1} parent=5 // pred_check_branch
        %517 = sbr.rel (%p514) target = $region72
      $region71: #{tpu_custom_call.1} parent=5 // pred_region
        %s518 = ssub.s32 %s31, 1
        %s519 = sand.u32 %s44, 1
        %s520 = scalar_lea.sflag [#allocation3], %s519
        %s521 = sand.u32 %s44, 1
        %s522 = smul.addr %s521, 8
        %s523 = scalar_lea.vmem [#allocation2], %s522
        // Predicated region
        $region73: #{tpu_custom_call.1} parent=71 // pred_check
          %p524 = pneg %p57
        $region74: #{tpu_custom_call.1} parent=71 // pred_check_branch
          %526 = sbr.rel (%p524) target = $region76
        $region75: #{tpu_custom_call.1} parent=71 // pred_region
          %527 = dma.done %s520, 128
        $region76: #{tpu_custom_call.1} parent=71 // pred_fallthru
          _
        // Predicated region
        $region77: #{tpu_custom_call.1} parent=71 // pred_check
          %p528 = pneg %p78
        $region78: #{tpu_custom_call.1} parent=71 // pred_check_branch
          %530 = sbr.rel (%p528) target = $region80
        $region79: #{tpu_custom_call.1} parent=71 // pred_region
          %531 = dma.done [#allocation6], 16
        $region80: #{tpu_custom_call.1} parent=71 // pred_fallthru
          _
        // Predicated region
        $region81: #{tpu_custom_call.1} parent=71 // pred_check
          %p532 = pneg %p99
        $region82: #{tpu_custom_call.1} parent=71 // pred_check_branch
          %534 = sbr.rel (%p532) target = $region84
        $region83: #{tpu_custom_call.1} parent=71 // pred_region
          %535 = dma.done [#allocation6], 16
        $region84: #{tpu_custom_call.1} parent=71 // pred_fallthru
          _
        // Predicated region
        $region85: #{tpu_custom_call.1} parent=71 // pred_check
          %p536 = pneg %p120
        $region86: #{tpu_custom_call.1} parent=71 // pred_check_branch
          %538 = sbr.rel (%p536) target = $region88
        $region87: #{tpu_custom_call.1} parent=71 // pred_region
          %539 = dma.done [#allocation9], 256
        $region88: #{tpu_custom_call.1} parent=71 // pred_fallthru
          _
        // Predicated region
        $region89: #{tpu_custom_call.1} parent=71 // pred_check
          %p540 = pneg %p141
        $region90: #{tpu_custom_call.1} parent=71 // pred_check_branch
          %542 = sbr.rel (%p540) target = $region92
        $region91: #{tpu_custom_call.1} parent=71 // pred_region
          %543 = dma.done [#allocation9], 512
        $region92: #{tpu_custom_call.1} parent=71 // pred_fallthru
          _
        // Predicated region
        $region93: #{tpu_custom_call.1} parent=71 // pred_check
          %p544 = pneg %p162
        $region94: #{tpu_custom_call.1} parent=71 // pred_check_branch
          %546 = sbr.rel (%p544) target = $region96
        $region95: #{tpu_custom_call.1} parent=71 // pred_region
          %547 = dma.done [#allocation12], 64
        $region96: #{tpu_custom_call.1} parent=71 // pred_fallthru
          _
        // Predicated region
        $region97: #{tpu_custom_call.1} parent=71 // pred_check
          %p548 = pneg %p183
        $region98: #{tpu_custom_call.1} parent=71 // pred_check_branch
          %550 = sbr.rel (%p548) target = $region100
        $region99: #{tpu_custom_call.1} parent=71 // pred_region
          %551 = dma.done [#allocation12], 128
        $region100: #{tpu_custom_call.1} parent=71 // pred_fallthru
          _
        // Predicated region
        $region101: #{tpu_custom_call.1} parent=71 // pred_check
          %p552 = pneg %p204
        $region102: #{tpu_custom_call.1} parent=71 // pred_check_branch
          %554 = sbr.rel (%p552) target = $region104
        $region103: #{tpu_custom_call.1} parent=71 // pred_region
          %555 = dma.done [#allocation15], 16
        $region104: #{tpu_custom_call.1} parent=71 // pred_fallthru
          _
        // Predicated region
        $region105: #{tpu_custom_call.1} parent=71 // pred_check
          %p556 = pneg %p225
        $region106: #{tpu_custom_call.1} parent=71 // pred_check_branch
          %558 = sbr.rel (%p556) target = $region108
        $region107: #{tpu_custom_call.1} parent=71 // pred_region
          %559 = dma.done [#allocation15], 16
        $region108: #{tpu_custom_call.1} parent=71 // pred_fallthru
          _
        // Predicated region
        $region109: #{tpu_custom_call.1} parent=71 // pred_check
          %p560 = pneg %p246
        $region110: #{tpu_custom_call.1} parent=71 // pred_check_branch
          %562 = sbr.rel (%p560) target = $region112
        $region111: #{tpu_custom_call.1} parent=71 // pred_region
          %563 = dma.done [#allocation18], 256
        $region112: #{tpu_custom_call.1} parent=71 // pred_fallthru
          _
        // Predicated region
        $region113: #{tpu_custom_call.1} parent=71 // pred_check
          %p564 = pneg %p267
        $region114: #{tpu_custom_call.1} parent=71 // pred_check_branch
          %566 = sbr.rel (%p564) target = $region116
        $region115: #{tpu_custom_call.1} parent=71 // pred_region
          %567 = dma.done [#allocation18], 16
        $region116: #{tpu_custom_call.1} parent=71 // pred_fallthru
          _
        // Predicated region
        $region117: #{tpu_custom_call.1} parent=71 // pred_check
          %p568 = pneg %p288
        $region118: #{tpu_custom_call.1} parent=71 // pred_check_branch
          %570 = sbr.rel (%p568) target = $region120
        $region119: #{tpu_custom_call.1} parent=71 // pred_region
          %571 = dma.done [#allocation21], 1024
        $region120: #{tpu_custom_call.1} parent=71 // pred_fallthru
          _
        // Predicated region
        $region121: #{tpu_custom_call.1} parent=71 // pred_check
          %p572 = pneg %p309
        $region122: #{tpu_custom_call.1} parent=71 // pred_check_branch
          %574 = sbr.rel (%p572) target = $region124
        $region123: #{tpu_custom_call.1} parent=71 // pred_region
          %575 = dma.done [#allocation21], 16
        $region124: #{tpu_custom_call.1} parent=71 // pred_fallthru
          _
        %s576 = sand.u32 %s44, 1
        %s577 = scalar_lea.sflag [#allocation3], %s576
        %s578 = sand.u32 %s44, 1
        %s579 = smul.addr %s578, 8
        %s580 = scalar_lea.vmem [#allocation2], %s579
        %p581 = pneg %p57
        %p582 = pneg %p54
        %p583 = pneg %p78
        %p584 = pneg %p75
        %p585 = pneg %p99
        %p586 = pneg %p96
        %p587 = pneg %p120
        %p588 = pneg %p117
        %p589 = pneg %p141
        %p590 = pneg %p138
        %p591 = pneg %p162
        %p592 = pneg %p159
        %p593 = pneg %p183
        %p594 = pneg %p180
        %p595 = pneg %p204
        %p596 = pneg %p201
        %p597 = pneg %p225
        %p598 = pneg %p222
        %p599 = pneg %p246
        %p600 = pneg %p243
        %p601 = pneg %p267
        %p602 = pneg %p264
        %p603 = pneg %p288
        %p604 = pneg %p285
        %p605 = pneg %p309
        %p606 = pneg %p306
        %p607 = pneg %p335
        %p608 = pneg %p332
        %s609 = sand.u32 %s322, 1
        %s610 = scalar_lea.sflag [#allocation4], %s609
        %s611 = sand.u32 %s322, 1
        %s612 = smul.addr %s611, 8
        %s613 = scalar_lea.vmem [#allocation23], %s612
        %v615 = vld [vmem:[%s523] sm:$0xff]
        %v616 = vld [vmem:[#allocation5] sm:$0x1]
        %v617 = vld [vmem:[#allocation7] sm:$0x1]
        %vm618 = vcmask 261120
        %v619 = vsel %vm618, %v615, 0.0
        %620 = vadd.xlane.f32.xlu0 %v619
        %v621 = vpop.xlane.xlu0 %620
        %v622 = vmul.f32 %v615, %v615
        %v623 = vsel %vm618, %v622, 0.0
        %624 = vadd.xlane.f32.xlu0 %v623
        %v625 = vpop.xlane.xlu0 %624
        %v626 = vmul.f32 %v621, 0.03125
        %v627 = vmul.f32 %v625, 0.03125
        %v628 = vmul.f32 %v626, %v626
        %v629 = vsub.f32 %v627, %v628
        %v630 = vsub.f32 %v615, %v626
        %v631 = vadd.f32 %v629, 1e-05
        %v632 = vrsqrt.pop %v631
        %v633 = vmul.f32 %v630, %v632
        %v635 = vlaneseq
        %v636 = vshrl.u32 %v635, 7
        %v637 = vsub.s32 0, %v636
        %v638 = vrot.slane %v616, %v637
        %v640 = vmul.f32 %v633, %v638
        %v642 = vlaneseq
        %v643 = vshrl.u32 %v642, 7
        %v644 = vsub.s32 0, %v643
        %v645 = vrot.slane %v617, %v644
        %v647 = vadd.f32 %v640, %v645
        %v648 = vpack.c.bf16 %v647, %v647
        %v649 = vld [vmem:[#allocation8] sm:$0xf]
        %v650 = vld [vmem:[#allocation8 + $0x4] sm:$0xf]
        %v651 = vld [vmem:[#allocation8 + $0x8] sm:$0xf]
        %v652 = vld [vmem:[#allocation8 + $0xc] sm:$0xf]
        %v653 = vld [vmem:[#allocation11] sm:$0xf]
        %v654 = vld [vmem:[#allocation10] sm:$0xff]
        %v655 = vld [vmem:[#allocation10 + $0x8] sm:$0xff]
        %v656 = vld [vmem:[#allocation10 + $0x10] sm:$0xff]
        %v657 = vld [vmem:[#allocation10 + $0x18] sm:$0xff]
        %v658 = vld [vmem:[#allocation13] sm:$0xff]
        %660 = vset.pattern.permute.xlu0 0
        %661 = vperm.xlu0 %660, %v654
        %v662 = vpop.permute.xlu0 %661
        %665 = vset.pattern.permute.xlu0 0
        %666 = vperm.xlu0 %665, %v655
        %v667 = vpop.permute.xlu0 %666
        %670 = vset.pattern.permute.xlu0 0
        %671 = vperm.xlu0 %670, %v656
        %v672 = vpop.permute.xlu0 %671
        %675 = vset.pattern.permute.xlu0 0
        %676 = vperm.xlu0 %675, %v657
        %v677 = vpop.permute.xlu0 %676
        %v683 = vunpack.c.l.b16 %v649
        %v684 = vunpack.c.l.b16 %v650
        %v685 = vunpack.c.l.b16 %v651
        %v686 = vunpack.c.l.b16 %v652
        %v687 = vpack.c.b16 %v684, %v683
        %v688 = vpack.c.b16 %v686, %v685
        %vm689 = vcmask 64512
        %v691 = vsel %vm689, %v687, 0
        %v694 = vsel %vm689, %v688, 0
        %vm696 = vcmask 1043456
        %v698 = vsel %vm696, %v648, 0
        %700 = vmatprep.subr.bf16.mxu0 0
        %701 = vmatpush1.bf16.msra.mxu0 %v698
        %702 = vmatprep.subr.bf16.mxu0 0
        %703 = vmatpush1.bf16.msra.mxu0 0
        %704 = vmatprep.subr.bf16.mxu0 0
        %705 = vmatpush1.bf16.msra.mxu0 0
        %706 = vmatprep.subr.bf16.mxu0 0
        %707 = vmatpush1.bf16.msra.mxu0 0
        %708 = vmatprep.subr.bf16.mxu0 0
        %709 = vmatpush1.bf16.msra.mxu0 0
        %710 = vmatprep.subr.bf16.mxu0 0
        %711 = vmatpush1.bf16.msra.mxu0 0
        %712 = vmatprep.subr.bf16.mxu0 0
        %713 = vmatpush1.bf16.msra.mxu0 0
        %714 = vmatprep.subr.bf16.mxu0 0
        %715 = vmatpush1.bf16.msra.mxu0 0
        %716 = vmatprep.subr.bf16.mxu0 0
        %717 = vmatpush1.bf16.msra.mxu0 0
        %718 = vmatprep.subr.bf16.mxu0 0
        %719 = vmatpush1.bf16.msra.mxu0 0
        %720 = vmatprep.subr.bf16.mxu0 0
        %721 = vmatpush1.bf16.msra.mxu0 0
        %722 = vmatprep.subr.bf16.mxu0 0
        %723 = vmatpush1.bf16.msra.mxu0 0
        %724 = vmatprep.subr.bf16.mxu0 0
        %725 = vmatpush1.bf16.msra.mxu0 0
        %726 = vmatprep.subr.bf16.mxu0 0
        %727 = vmatpush1.bf16.msra.mxu0 0
        %728 = vmatprep.subr.bf16.mxu0 0
        %729 = vmatpush1.bf16.msra.mxu0 0
        %730 = vmatprep.subr.bf16.mxu0 0
        %731 = vmatpush1.bf16.msra.mxu0 0
        %732 = vmatprep.mubr.bf16.mxu0 0
        %733 = vmatmul.mubr.bf16.gmra.mrb[0].mxu0 %v691
        %v734 = vpop.f32.mrb[0].mxu0
        %v735 = vadd.f32 %v662, %v734
        %v736 = vpop.f32.mrb[0].mxu0
        %v737 = vpop.f32.mrb[0].mxu0
        %v738 = vadd.f32 %v667, %v737
        %v739 = vpop.f32.mrb[0].mxu0
        %740 = vmatprep.mubr.bf16.mxu0 0
        %741 = vmatmul.mubr.bf16.gmra.mrb[0].mxu0 %v694
        %v742 = vpop.f32.mrb[0].mxu0
        %v743 = vadd.f32 %v672, %v742
        %v744 = vpop.f32.mrb[0].mxu0
        %v745 = vpop.f32.mrb[0].mxu0
        %v746 = vadd.f32 %v677, %v745
        %v747 = vpop.f32.mrb[0].mxu0
        %748 = vdwg.mxu0
        %v749 = vmul.f32 %v735, 0.5
        %v750 = vmul.f32 %v738, 0.5
        %v751 = vmul.f32 %v743, 0.5
        %v752 = vmul.f32 %v746, 0.5
        %v753 = vmul.f32 %v735, 0.70710677
        %v754 = vmul.f32 %v738, 0.70710677
        %v755 = vmul.f32 %v743, 0.70710677
        %v756 = vmul.f32 %v746, 0.70710677
        %vm757 = vcmp.ge.f32.partialorder %v753, 0.0
        %vm758 = vcmp.ge.f32.partialorder %v754, 0.0
        %vm759 = vcmp.ge.f32.partialorder %v755, 0.0
        %vm760 = vcmp.ge.f32.partialorder %v756, 0.0
        %v761 = vsel %vm757, 1.0, -1.0
        %v762 = vsel %vm758, 1.0, -1.0
        %v763 = vsel %vm759, 1.0, -1.0
        %v764 = vsel %vm760, 1.0, -1.0
        %v765 = vand.u32 2147483647, %v753
        %v766 = vand.u32 2147483647, %v754
        %v767 = vand.u32 2147483647, %v755
        %v768 = vand.u32 2147483647, %v756
        %v769 = vmul.f32 %v765, 0.3275911
        %v770 = vmul.f32 %v766, 0.3275911
        %v771 = vmul.f32 %v767, 0.3275911
        %v772 = vmul.f32 %v768, 0.3275911
        %v773 = vadd.f32 %v769, 1.0
        %v774 = vadd.f32 %v770, 1.0
        %v775 = vadd.f32 %v771, 1.0
        %v776 = vadd.f32 %v772, 1.0
        %v777 = vrcp.pop %v773
        %v778 = vrcp.pop %v774
        %v779 = vrcp.pop %v775
        %v780 = vrcp.pop %v776
        %v781 = vmul.f32 %v777, 1.0614054
        %v782 = vmul.f32 %v778, 1.0614054
        %v783 = vmul.f32 %v779, 1.0614054
        %v784 = vmul.f32 %v780, 1.0614054
        %v785 = vadd.f32 %v781, -1.4531521
        %v786 = vadd.f32 %v782, -1.4531521
        %v787 = vadd.f32 %v783, -1.4531521
        %v788 = vadd.f32 %v784, -1.4531521
        %v789 = vmul.f32 %v785, %v777
        %v790 = vmul.f32 %v786, %v778
        %v791 = vmul.f32 %v787, %v779
        %v792 = vmul.f32 %v788, %v780
        %v793 = vadd.f32 %v789, 1.4214138
        %v794 = vadd.f32 %v790, 1.4214138
        %v795 = vadd.f32 %v791, 1.4214138
        %v796 = vadd.f32 %v792, 1.4214138
        %v797 = vmul.f32 %v793, %v777
        %v798 = vmul.f32 %v794, %v778
        %v799 = vmul.f32 %v795, %v779
        %v800 = vmul.f32 %v796, %v780
        %v801 = vadd.f32 %v797, -0.28449672
        %v802 = vadd.f32 %v798, -0.28449672
        %v803 = vadd.f32 %v799, -0.28449672
        %v804 = vadd.f32 %v800, -0.28449672
        %v805 = vmul.f32 %v801, %v777
        %v806 = vmul.f32 %v802, %v778
        %v807 = vmul.f32 %v803, %v779
        %v808 = vmul.f32 %v804, %v780
        %v809 = vadd.f32 %v805, 0.2548296
        %v810 = vadd.f32 %v806, 0.2548296
        %v811 = vadd.f32 %v807, 0.2548296
        %v812 = vadd.f32 %v808, 0.2548296
        %v813 = vmul.f32 %v809, %v777
        %v814 = vmul.f32 %v810, %v778
        %v815 = vmul.f32 %v811, %v779
        %v816 = vmul.f32 %v812, %v780
        %v817 = vsub.f32 0.0, %v765
        %v818 = vsub.f32 0.0, %v766
        %v819 = vsub.f32 0.0, %v767
        %v820 = vsub.f32 0.0, %v768
        %v821 = vmul.f32 %v817, %v765
        %v822 = vmul.f32 %v818, %v766
        %v823 = vmul.f32 %v819, %v767
        %v824 = vmul.f32 %v820, %v768
        %v825 = vmul.f32 %v821, 1.442695
        %v826 = vpow.pop %v825
        %v827 = vmul.f32 %v822, 1.442695
        %v828 = vpow.pop %v827
        %v829 = vmul.f32 %v823, 1.442695
        %v830 = vpow.pop %v829
        %v831 = vmul.f32 %v824, 1.442695
        %v832 = vpow.pop %v831
        %v833 = vmul.f32 %v813, %v826
        %v834 = vmul.f32 %v814, %v828
        %v835 = vmul.f32 %v815, %v830
        %v836 = vmul.f32 %v816, %v832
        %v837 = vsub.f32 1.0, %v833
        %v838 = vsub.f32 1.0, %v834
        %v839 = vsub.f32 1.0, %v835
        %v840 = vsub.f32 1.0, %v836
        %v841 = vmul.f32 %v761, %v837
        %v842 = vmul.f32 %v762, %v838
        %v843 = vmul.f32 %v763, %v839
        %v844 = vmul.f32 %v764, %v840
        %v845 = vadd.f32 %v841, 1.0
        %v846 = vadd.f32 %v842, 1.0
        %v847 = vadd.f32 %v843, 1.0
        %v848 = vadd.f32 %v844, 1.0
        %v849 = vmul.f32 %v749, %v845
        %v850 = vmul.f32 %v750, %v846
        %v851 = vmul.f32 %v751, %v847
        %v852 = vmul.f32 %v752, %v848
        %v853 = vpack.c.bf16 %v850, %v849
        %v854 = vpack.c.bf16 %v852, %v851
        %v856 = vsel %vm618, %v653, 0
        %858 = vmatprep.subr.bf16.mxu0 0
        %859 = vmatpush1.bf16.msra.mxu0 %v853
        %860 = vmatprep.subr.bf16.mxu0 0
        %861 = vmatpush1.bf16.msra.mxu0 %v854
        %862 = vmatprep.subr.bf16.mxu0 0
        %863 = vmatpush1.bf16.msra.mxu0 0
        %864 = vmatprep.subr.bf16.mxu0 0
        %865 = vmatpush1.bf16.msra.mxu0 0
        %866 = vmatprep.subr.bf16.mxu0 0
        %867 = vmatpush1.bf16.msra.mxu0 0
        %868 = vmatprep.subr.bf16.mxu0 0
        %869 = vmatpush1.bf16.msra.mxu0 0
        %870 = vmatprep.subr.bf16.mxu0 0
        %871 = vmatpush1.bf16.msra.mxu0 0
        %872 = vmatprep.subr.bf16.mxu0 0
        %873 = vmatpush1.bf16.msra.mxu0 0
        %874 = vmatprep.subr.bf16.mxu0 0
        %875 = vmatpush1.bf16.msra.mxu0 0
        %876 = vmatprep.subr.bf16.mxu0 0
        %877 = vmatpush1.bf16.msra.mxu0 0
        %878 = vmatprep.subr.bf16.mxu0 0
        %879 = vmatpush1.bf16.msra.mxu0 0
        %880 = vmatprep.subr.bf16.mxu0 0
        %881 = vmatpush1.bf16.msra.mxu0 0
        %882 = vmatprep.subr.bf16.mxu0 0
        %883 = vmatpush1.bf16.msra.mxu0 0
        %884 = vmatprep.subr.bf16.mxu0 0
        %885 = vmatpush1.bf16.msra.mxu0 0
        %886 = vmatprep.subr.bf16.mxu0 0
        %887 = vmatpush1.bf16.msra.mxu0 0
        %888 = vmatprep.subr.bf16.mxu0 0
        %889 = vmatpush1.bf16.msra.mxu0 0
        %890 = vmatprep.mubr.bf16.mxu0 0
        %891 = vmatmul.mubr.bf16.gmra.mrb[0].mxu0 %v856
        %v892 = vpop.f32.mrb[0].mxu0
        %v893 = vadd.f32 0.0, %v892
        %v894 = vpop.f32.mrb[0].mxu0
        %v895 = vpop.f32.mrb[0].mxu0
        %v896 = vpop.f32.mrb[0].mxu0
        %897 = vdwg.mxu0
        %v898 = vadd.f32 %v615, %v893
        %900 = vset.pattern.permute.xlu0 0
        %901 = vperm.xlu0 %900, %v658
        %v902 = vpop.permute.xlu0 %901
        %v904 = vadd.f32 %v898, %v902
        %v905 = vld [vmem:[#allocation14] sm:$0x1]
        %v906 = vld [vmem:[#allocation16] sm:$0x1]
        %v907 = vsel %vm618, %v904, 0.0
        %908 = vadd.xlane.f32.xlu0 %v907
        %v909 = vpop.xlane.xlu0 %908
        %v910 = vmul.f32 %v904, %v904
        %v911 = vsel %vm618, %v910, 0.0
        %912 = vadd.xlane.f32.xlu0 %v911
        %v913 = vpop.xlane.xlu0 %912
        %v914 = vmul.f32 %v909, 0.03125
        %v915 = vmul.f32 %v913, 0.03125
        %v916 = vmul.f32 %v914, %v914
        %v917 = vsub.f32 %v915, %v916
        %v918 = vsub.f32 %v904, %v914
        %v919 = vadd.f32 %v917, 1e-05
        %v920 = vrsqrt.pop %v919
        %v921 = vmul.f32 %v918, %v920
        %v923 = vlaneseq
        %v924 = vshrl.u32 %v923, 7
        %v925 = vsub.s32 0, %v924
        %v926 = vrot.slane %v905, %v925
        %v928 = vmul.f32 %v921, %v926
        %v930 = vlaneseq
        %v931 = vshrl.u32 %v930, 7
        %v932 = vsub.s32 0, %v931
        %v933 = vrot.slane %v906, %v932
        %v935 = vadd.f32 %v928, %v933
        %v936 = vpack.c.bf16 %v935, %v935
        %v937 = vld [vmem:[#allocation17] sm:$0xf]
        %v938 = vld [vmem:[#allocation17 + $0x4] sm:$0xf]
        %v939 = vld [vmem:[#allocation17 + $0x8] sm:$0xf]
        %v940 = vld [vmem:[#allocation17 + $0xc] sm:$0xf]
        %v941 = vld [vmem:[#allocation19] sm:$0x1]
        %v943 = vlaneseq
        %v944 = vshrl.u32 %v943, 7
        %v945 = vsub.s32 0, %v944
        %v946 = vrot.slane %v941, %v945
        %v952 = vunpack.c.l.b16 %v937
        %v953 = vunpack.c.l.b16 %v938
        %v954 = vunpack.c.l.b16 %v939
        %v955 = vunpack.c.l.b16 %v940
        %v956 = vpack.c.b16 %v953, %v952
        %v957 = vpack.c.b16 %v955, %v954
        %v961 = vsel %vm618, %v936, 0
        %963 = vmatprep.subr.bf16.mxu0 0
        %964 = vmatpush1.bf16.msra.mxu0 %v956
        %965 = vmatprep.subr.bf16.mxu0 0
        %966 = vmatpush1.bf16.msra.mxu0 %v957
        %967 = vmatprep.subr.bf16.mxu0 0
        %968 = vmatpush1.bf16.msra.mxu0 0
        %969 = vmatprep.subr.bf16.mxu0 0
        %970 = vmatpush1.bf16.msra.mxu0 0
        %971 = vmatprep.subr.bf16.mxu0 0
        %972 = vmatpush1.bf16.msra.mxu0 0
        %973 = vmatprep.subr.bf16.mxu0 0
        %974 = vmatpush1.bf16.msra.mxu0 0
        %975 = vmatprep.subr.bf16.mxu0 0
        %976 = vmatpush1.bf16.msra.mxu0 0
        %977 = vmatprep.subr.bf16.mxu0 0
        %978 = vmatpush1.bf16.msra.mxu0 0
        %979 = vmatprep.subr.bf16.mxu0 0
        %980 = vmatpush1.bf16.msra.mxu0 0
        %981 = vmatprep.subr.bf16.mxu0 0
        %982 = vmatpush1.bf16.msra.mxu0 0
        %983 = vmatprep.subr.bf16.mxu0 0
        %984 = vmatpush1.bf16.msra.mxu0 0
        %985 = vmatprep.subr.bf16.mxu0 0
        %986 = vmatpush1.bf16.msra.mxu0 0
        %987 = vmatprep.subr.bf16.mxu0 0
        %988 = vmatpush1.bf16.msra.mxu0 0
        %989 = vmatprep.subr.bf16.mxu0 0
        %990 = vmatpush1.bf16.msra.mxu0 0
        %991 = vmatprep.subr.bf16.mxu0 0
        %992 = vmatpush1.bf16.msra.mxu0 0
        %993 = vmatprep.subr.bf16.mxu0 0
        %994 = vmatpush1.bf16.msra.mxu0 0
        %995 = vmatprep.mubr.bf16.mxu0 0
        %996 = vmatmul.mubr.bf16.gmra.mrb[0].mxu0 %v961
        %v997 = vpop.f32.mrb[0].mxu0
        %v998 = vadd.f32 %v946, %v997
        %v999 = vpop.f32.mrb[0].mxu0
        %v1000 = vpop.f32.mrb[0].mxu0
        %v1001 = vpop.f32.mrb[0].mxu0
        %1002 = vdwg.mxu0
        %v1003 = vmul.f32 %v998, 0.5
        %v1004 = vmul.f32 %v998, 0.70710677
        %vm1005 = vcmp.ge.f32.partialorder %v1004, 0.0
        %v1006 = vsel %vm1005, 1.0, -1.0
        %v1007 = vand.u32 2147483647, %v1004
        %v1008 = vmul.f32 %v1007, 0.3275911
        %v1009 = vadd.f32 %v1008, 1.0
        %v1010 = vrcp.pop %v1009
        %v1011 = vmul.f32 %v1010, 1.0614054
        %v1012 = vadd.f32 %v1011, -1.4531521
        %v1013 = vmul.f32 %v1012, %v1010
        %v1014 = vadd.f32 %v1013, 1.4214138
        %v1015 = vmul.f32 %v1014, %v1010
        %v1016 = vadd.f32 %v1015, -0.28449672
        %v1017 = vmul.f32 %v1016, %v1010
        %v1018 = vadd.f32 %v1017, 0.2548296
        %v1019 = vmul.f32 %v1018, %v1010
        %v1020 = vsub.f32 0.0, %v1007
        %v1021 = vmul.f32 %v1020, %v1007
        %v1022 = vmul.f32 %v1021, 1.442695
        %v1023 = vpow.pop %v1022
        %v1024 = vmul.f32 %v1019, %v1023
        %v1025 = vsub.f32 1.0, %v1024
        %v1026 = vmul.f32 %v1006, %v1025
        %v1027 = vadd.f32 %v1026, 1.0
        %v1028 = vmul.f32 %v1003, %v1027
        %v1029 = vpack.c.bf16 %v1028, %v1028
        %v1030 = vld [vmem:[#allocation20] sm:$0xf]
        %v1031 = vld [vmem:[#allocation20 + $0x4] sm:$0xf]
        %v1032 = vld [vmem:[#allocation20 + $0x8] sm:$0xf]
        %v1033 = vld [vmem:[#allocation20 + $0xc] sm:$0xf]
        %v1034 = vld [vmem:[#allocation20 + $0x10] sm:$0xf]
        %v1035 = vld [vmem:[#allocation20 + $0x14] sm:$0xf]
        %v1036 = vld [vmem:[#allocation20 + $0x18] sm:$0xf]
        %v1037 = vld [vmem:[#allocation20 + $0x1c] sm:$0xf]
        %v1038 = vld [vmem:[#allocation20 + $0x20] sm:$0xf]
        %v1039 = vld [vmem:[#allocation20 + $0x24] sm:$0xf]
        %v1040 = vld [vmem:[#allocation20 + $0x28] sm:$0xf]
        %v1041 = vld [vmem:[#allocation20 + $0x2c] sm:$0xf]
        %v1042 = vld [vmem:[#allocation20 + $0x30] sm:$0xf]
        %v1043 = vld [vmem:[#allocation20 + $0x34] sm:$0xf]
        %v1044 = vld [vmem:[#allocation20 + $0x38] sm:$0xf]
        %v1045 = vld [vmem:[#allocation20 + $0x3c] sm:$0xf]
        %v1046 = vld [vmem:[#allocation22] sm:$0x1]
        %v1048 = vlaneseq
        %v1049 = vshrl.u32 %v1048, 7
        %v1050 = vsub.s32 0, %v1049
        %v1051 = vrot.slane %v1046, %v1050
        %v1069 = vunpack.c.l.b16 %v1030
        %v1070 = vunpack.c.l.b16 %v1031
        %v1071 = vunpack.c.l.b16 %v1032
        %v1072 = vunpack.c.l.b16 %v1033
        %v1073 = vunpack.c.l.b16 %v1034
        %v1074 = vunpack.c.l.b16 %v1035
        %v1075 = vunpack.c.l.b16 %v1036
        %v1076 = vunpack.c.l.b16 %v1037
        %v1077 = vunpack.c.l.b16 %v1038
        %v1078 = vunpack.c.l.b16 %v1039
        %v1079 = vunpack.c.l.b16 %v1040
        %v1080 = vunpack.c.l.b16 %v1041
        %v1081 = vunpack.c.l.b16 %v1042
        %v1082 = vunpack.c.l.b16 %v1043
        %v1083 = vunpack.c.l.b16 %v1044
        %v1084 = vunpack.c.l.b16 %v1045
        %v1085 = vpack.c.b16 %v1070, %v1069
        %v1086 = vpack.c.b16 %v1072, %v1071
        %v1087 = vpack.c.b16 %v1074, %v1073
        %v1088 = vpack.c.b16 %v1076, %v1075
        %v1089 = vpack.c.b16 %v1078, %v1077
        %v1090 = vpack.c.b16 %v1080, %v1079
        %v1091 = vpack.c.b16 %v1082, %v1081
        %v1092 = vpack.c.b16 %v1084, %v1083
        %1101 = vmatprep.subr.bf16.mxu0 0
        %1102 = vmatpush1.bf16.msra.mxu0 %v1085
        %1103 = vmatprep.subr.bf16.mxu0 0
        %1104 = vmatpush1.bf16.msra.mxu0 %v1086
        %1105 = vmatprep.subr.bf16.mxu0 0
        %1106 = vmatpush1.bf16.msra.mxu0 %v1087
        %1107 = vmatprep.subr.bf16.mxu0 0
        %1108 = vmatpush1.bf16.msra.mxu0 %v1088
        %1109 = vmatprep.subr.bf16.mxu0 0
        %1110 = vmatpush1.bf16.msra.mxu0 %v1089
        %1111 = vmatprep.subr.bf16.mxu0 0
        %1112 = vmatpush1.bf16.msra.mxu0 %v1090
        %1113 = vmatprep.subr.bf16.mxu0 0
        %1114 = vmatpush1.bf16.msra.mxu0 %v1091
        %1115 = vmatprep.subr.bf16.mxu0 0
        %1116 = vmatpush1.bf16.msra.mxu0 %v1092
        %1117 = vmatprep.subr.bf16.mxu0 0
        %1118 = vmatpush1.bf16.msra.mxu0 0
        %1119 = vmatprep.subr.bf16.mxu0 0
        %1120 = vmatpush1.bf16.msra.mxu0 0
        %1121 = vmatprep.subr.bf16.mxu0 0
        %1122 = vmatpush1.bf16.msra.mxu0 0
        %1123 = vmatprep.subr.bf16.mxu0 0
        %1124 = vmatpush1.bf16.msra.mxu0 0
        %1125 = vmatprep.subr.bf16.mxu0 0
        %1126 = vmatpush1.bf16.msra.mxu0 0
        %1127 = vmatprep.subr.bf16.mxu0 0
        %1128 = vmatpush1.bf16.msra.mxu0 0
        %1129 = vmatprep.subr.bf16.mxu0 0
        %1130 = vmatpush1.bf16.msra.mxu0 0
        %1131 = vmatprep.subr.bf16.mxu0 0
        %1132 = vmatpush1.bf16.msra.mxu0 0
        %1133 = vmatprep.mubr.bf16.mxu0 0
        %1134 = vmatmul.mubr.bf16.gmra.mrb[0].mxu0 %v1029
        %v1135 = vpop.f32.mrb[0].mxu0
        %v1136 = vadd.f32 %v1051, %v1135
        %v1137 = vpop.f32.mrb[0].mxu0
        %v1138 = vpop.f32.mrb[0].mxu0
        %v1139 = vpop.f32.mrb[0].mxu0
        %1140 = vdwg.mxu0
        %v1141 = vadd.f32 %v904, %v1136
        %1142 = vst.msk [vmem:[%s613] sm:$0xff] %vm618, %v1141
        %s1143 = sand.u32 %s322, 1
        %s1144 = scalar_lea.sflag [#allocation4], %s1143
        %s1145 = sand.u32 %s322, 1
        %s1146 = smul.addr %s1145, 8
        %s1147 = scalar_lea.vmem [#allocation23], %s1146
        // Predicated region
        $region125: #{tpu_custom_call.1} parent=71 // pred_check
          %p1148 = pneg %p332
        $region126: #{tpu_custom_call.1} parent=71 // pred_check_branch
          %1150 = sbr.rel (%p1148) target = $region128
        $region127: #{tpu_custom_call.1} parent=71 // pred_region
          %s1152 = ssub.s32 128, 128
          %1153 = vsyncadd %s1144, %s1152
          %s1154 = smul.addr %s36, 128
          %s1155 = scalar_lea.hbm %s13, %s1154
          %s1157 = sshll.u32 %s1147, 4
          %s1158 = int_to_ptr.vmem [resolvable:$true] %s1157
          %1160 = dma.vmem_to_hbm [thread:$0]  %s1158, 128, %s1155, %s1144
        $region128: #{tpu_custom_call.1} parent=71 // pred_fallthru
          _
      $region72: #{tpu_custom_call.1} parent=5 // pred_fallthru
        _
      %p1161 = scmp.le.s32.totalorder 2, %s31
      // Predicated region
      $region129: #{tpu_custom_call.1} parent=5 // pred_check
        %p1162 = pneg %p1161
      $region130: #{tpu_custom_call.1} parent=5 // pred_check_branch
        %1164 = sbr.rel (%p1162) target = $region132
      $region131: #{tpu_custom_call.1} parent=5 // pred_region
        %s1165 = ssub.s32 %s31, 2
        // Predicated region
        $region133: #{tpu_custom_call.1} parent=131 // pred_check
          %p1166 = pneg %p338
        $region134: #{tpu_custom_call.1} parent=131 // pred_check_branch
          %1168 = sbr.rel (%p1166) target = $region136
        $region135: #{tpu_custom_call.1} parent=131 // pred_region
          %s1169 = sand.u32 %s323, 1
          %s1170 = scalar_lea.sflag [#allocation4], %s1169
          %s1171 = sand.u32 %s323, 1
          %s1172 = smul.addr %s1171, 8
          %s1173 = scalar_lea.vmem [#allocation23], %s1172
          %1174 = dma.done %s1170, 128
        $region136: #{tpu_custom_call.1} parent=131 // pred_fallthru
          _
      $region132: #{tpu_custom_call.1} parent=5 // pred_fallthru
        _
    $region6: #{tpu_custom_call.1} parent=1 // loop_footer
      %s35 = sadd.s32 1, %s31
    $region7: #{tpu_custom_call.1} parent=1 // loop_footer_branch
      %30 = sbr.rel target = $region3
    $region8: #{tpu_custom_call.1} parent=1 // loop_exit
      _
    %1175 = vsyncpa [#allocation3], 1
    %s1176 = scalar_lea.sflag [#allocation3], 1
    %1177 = vsyncpa %s1176, 1
    %1178 = vsyncpa [#allocation6], 1
    %1179 = vsyncpa [#allocation9], 1
    %1180 = vsyncpa [#allocation12], 1
    %1181 = vsyncpa [#allocation15], 1
    %1182 = vsyncpa [#allocation18], 1
    %1183 = vsyncpa [#allocation21], 1
    %1184 = vsyncpa [#allocation4], 1
    %s1185 = scalar_lea.sflag [#allocation4], 1
    %1186 = vsyncpa %s1185, 1

// kernel: tpu_custom_call.1
$region0: #{tpu_custom_call.1}
  #allocation0 [shape = 'u32[]', space=smem, size = 0x4, offset = 0x4, fixed_abs, tag = 'smem constant byte address 0x4 - core index']
  #allocation1 [shape = 'u32[144,128]{1,0:T(1,128)}', space=vmem, size = 0x12000, scoped, tag = 'internal scratch']
  %s0 = inlined_call_operand.hbm [shape: f32[2,8,32], index: 0, kind: input, shape index: {}]
  %s1 = inlined_call_operand.hbm [shape: f32[1,32], index: 1, kind: input, shape index: {}]
  %s2 = inlined_call_operand.hbm [shape: f32[1,32], index: 2, kind: input, shape index: {}]
  %s3 = inlined_call_operand.hbm [shape: bf16[32,8], index: 3, kind: input, shape index: {}]
  %s4 = inlined_call_operand.hbm [shape: f32[32,1], index: 4, kind: input, shape index: {}]
  %s5 = inlined_call_operand.hbm [shape: bf16[8,32], index: 5, kind: input, shape index: {}]
  %s6 = inlined_call_operand.hbm [shape: f32[8,1], index: 6, kind: input, shape index: {}]
  %s7 = inlined_call_operand.hbm [shape: f32[1,32], index: 7, kind: input, shape index: {}]
  %s8 = inlined_call_operand.hbm [shape: f32[1,32], index: 8, kind: input, shape index: {}]
  %s9 = inlined_call_operand.hbm [shape: bf16[32,128], index: 9, kind: input, shape index: {}]
  %s10 = inlined_call_operand.hbm [shape: f32[1,128], index: 10, kind: input, shape index: {}]
  %s11 = inlined_call_operand.hbm [shape: bf16[128,32], index: 11, kind: input, shape index: {}]
  %s12 = inlined_call_operand.hbm [shape: f32[1,32], index: 12, kind: input, shape index: {}]
  %s13 = inlined_call_operand.hbm [shape: f32[2,8,32], index: 13, kind: output, shape index: {}]
  %s14 = sld [smem:[#allocation0]]
  $region137: #{tpu_custom_call.1} parent=0
    _
  %s16 = ssub.s32 1, %s14
  %s17 = scalar_select 0, %s16, %s14
  $region1: #{tpu_custom_call.1} parent=0
    #allocation2 [shape = 'u8[8192]{0}', space=vmem, size = 0x2000, scoped, tag = 'input window, operand 0']
    #allocation3 [shape = 's32[2]{0}', space=sflag, size = 0x8, scoped, tag = 'scoped memory for tpu_custom_call.1']
    #allocation4 [shape = 's32[2]{0}', space=sflag, size = 0x8, scoped, tag = 'scoped memory for tpu_custom_call.1']
    #allocation5 [shape = 'u8[512]{0}', space=vmem, size = 0x400, scoped, tag = 'input window, operand 1, single buffered']
    #allocation6 [shape = 's32[1]{0}', space=sflag, size = 0x4, scoped, tag = 'scoped memory for tpu_custom_call.1']
    #allocation7 [shape = 'u8[512]{0}', space=vmem, size = 0x400, scoped, tag = 'input window, operand 2, single buffered']
    #allocation8 [shape = 'u8[8192]{0}', space=vmem, size = 0x2000, scoped, tag = 'input window, operand 3, single buffered']
    #allocation9 [shape = 's32[1]{0}', space=sflag, size = 0x4, scoped, tag = 'scoped memory for tpu_custom_call.1']
    #allocation10 [shape = 'u8[16384]{0}', space=vmem, size = 0x4000, scoped, tag = 'input window, operand 4, single buffered']
    #allocation11 [shape = 'u8[2048]{0}', space=vmem, size = 0x800, scoped, tag = 'input window, operand 5, single buffered']
    #allocation12 [shape = 's32[1]{0}', space=sflag, size = 0x4, scoped, tag = 'scoped memory for tpu_custom_call.1']
    #allocation13 [shape = 'u8[4096]{0}', space=vmem, size = 0x1000, scoped, tag = 'input window, operand 6, single buffered']
    #allocation14 [shape = 'u8[512]{0}', space=vmem, size = 0x400, scoped, tag = 'input window, operand 7, single buffered']
    #allocation15 [shape = 's32[1]{0}', space=sflag, size = 0x4, scoped, tag = 'scoped memory for tpu_custom_call.1']
    #allocation16 [shape = 'u8[512]{0}', space=vmem, size = 0x400, scoped, tag = 'input window, operand 8, single buffered']
    #allocation17 [shape = 'u8[8192]{0}', space=vmem, size = 0x2000, scoped, tag = 'input window, operand 9, single buffered']
    #allocation18 [shape = 's32[1]{0}', space=sflag, size = 0x4, scoped, tag = 'scoped memory for tpu_custom_call.1']
    #allocation19 [shape = 'u8[512]{0}', space=vmem, size = 0x400, scoped, tag = 'input window, operand 10, single buffered']
    #allocation20 [shape = 'u8[32768]{0}', space=vmem, size = 0x8000, scoped, tag = 'input window, operand 11, single buffered']
    #allocation21 [shape = 's32[1]{0}', space=sflag, size = 0x4, scoped, tag = 'scoped memory for tpu_custom_call.1']
    #allocation22 [shape = 'u8[512]{0}', space=vmem, size = 0x400, scoped, tag = 'input window, operand 12, single buffered']
    #allocation23 [shape = 'u8[8192]{0}', space=vmem, size = 0x2000, scoped, tag = 'output window, operand 0']
    %18 = vsyncpa [#allocation3], 0
    %s19 = scalar_lea.sflag [#allocation3], 1
    %20 = vsyncpa %s19, 0
    %21 = vsyncpa [#allocation6], 0
    %22 = vsyncpa [#allocation9], 0
    %23 = vsyncpa [#allocation12], 0
    %24 = vsyncpa [#allocation15], 0
    %25 = vsyncpa [#allocation18], 0
    %26 = vsyncpa [#allocation21], 0
    %27 = vsyncpa [#allocation4], 0
    %s28 = scalar_lea.sflag [#allocation4], 1
    %29 = vsyncpa %s28, 0
    loop: start=0, step=1, limit=4
    $region2: #{tpu_custom_call.1} parent=1 // loop_pre_header
      _
    $region3: #{tpu_custom_call.1} parent=1 // loop_header
      %s31 = sphi 0, %s35
      %p32 = scmp.ge.s32.totalorder %s31, 4
      %s41 = sphi 0, %s43
      %s44 = sphi 0, %s41
      %s45 = sphi 0, %s44
      %s61 = sphi 0, %s45
      %s65 = sphi 0, %s65
      %s67 = sphi 0, %s65
      %s68 = sphi 0, %s67
      %s82 = sphi 0, %s68
      %s86 = sphi 0, %s86
      %s88 = sphi 0, %s86
      %s89 = sphi 0, %s88
      %s103 = sphi 0, %s89
      %s107 = sphi 0, %s107
      %s109 = sphi 0, %s107
      %s110 = sphi 0, %s109
      %s124 = sphi 0, %s110
      %s128 = sphi 0, %s128
      %s130 = sphi 0, %s128
      %s131 = sphi 0, %s130
      %s145 = sphi 0, %s131
      %s149 = sphi 0, %s149
      %s151 = sphi 0, %s149
      %s152 = sphi 0, %s151
      %s166 = sphi 0, %s152
      %s170 = sphi 0, %s170
      %s172 = sphi 0, %s170
      %s173 = sphi 0, %s172
      %s187 = sphi 0, %s173
      %s191 = sphi 0, %s191
      %s193 = sphi 0, %s191
      %s194 = sphi 0, %s193
      %s208 = sphi 0, %s194
      %s212 = sphi 0, %s212
      %s214 = sphi 0, %s212
      %s215 = sphi 0, %s214
      %s229 = sphi 0, %s215
      %s233 = sphi 0, %s233
      %s235 = sphi 0, %s233
      %s236 = sphi 0, %s235
      %s250 = sphi 0, %s236
      %s254 = sphi 0, %s254
      %s256 = sphi 0, %s254
      %s257 = sphi 0, %s256
      %s271 = sphi 0, %s257
      %s275 = sphi 0, %s275
      %s277 = sphi 0, %s275
      %s278 = sphi 0, %s277
      %s292 = sphi 0, %s278
      %s296 = sphi 0, %s296
      %s298 = sphi 0, %s296
      %s299 = sphi 0, %s298
      %s313 = sphi 0, %s299
      %s319 = sphi 0, %s321
      %s322 = sphi 0, %s319
      %s323 = sphi 0, %s322
      %s339 = sphi 0, %s323
    $region4: #{tpu_custom_call.1} parent=1 // loop_header_branch
      %34 = sbr.rel (%p32) target = $region8
    $region5: #{tpu_custom_call.1} parent=1 // loop_body
      %s36 = ssub.s32 %s31, 1
      %s37 = ssub.s32 %s31, 2
      %s38 = sadd.s32 %s31, 1
      %s39 = ssub.s32 %s31, %s38
      %p40 = scmp.eq.s32.totalorder %s39, 0
      %s42 = sadd.s32 %s41, 1
      %s43 = scalar_select %p40, %s41, %s42
      %p46 = pneg %p40
      %p47 = scmp.eq.s32.totalorder %s31, 1
      %p48 = por %p46, %p47
      %p49 = scmp.ne.s32.totalorder %s41, %s44
      %p50 = scmp.eq.s32.totalorder %s31, 0
      %p51 = por %p49, %p50
      %p52 = scmp.ne.s32.totalorder %s41, %s44
      %p53 = scmp.eq.s32.totalorder %s36, 1
      %p54 = por %p52, %p53
      %p55 = scmp.ne.s32.totalorder %s44, %s45
      %p56 = scmp.eq.s32.totalorder %s36, 0
      %p57 = por %p55, %p56
      %p58 = scmp.ne.s32.totalorder %s44, %s45
      %p59 = scmp.eq.s32.totalorder %s37, 1
      %p60 = por %p58, %p59
      %p62 = scmp.ne.s32.totalorder %s45, %s61
      %p63 = scmp.eq.s32.totalorder %s37, 0
      %p64 = por %p62, %p63
      %s66 = sadd.s32 %s65, 1
      %p69 = scmp.eq.s32.totalorder %s31, 1
      %p70 = scmp.ne.s32.totalorder %s65, %s67
      %p71 = scmp.eq.s32.totalorder %s31, 0
      %p72 = por %p70, %p71
      %p73 = scmp.ne.s32.totalorder %s65, %s67
      %p74 = scmp.eq.s32.totalorder %s36, 1
      %p75 = por %p73, %p74
      %p76 = scmp.ne.s32.totalorder %s67, %s68
      %p77 = scmp.eq.s32.totalorder %s36, 0
      %p78 = por %p76, %p77
      %p79 = scmp.ne.s32.totalorder %s67, %s68
      %p80 = scmp.eq.s32.totalorder %s37, 1
      %p81 = por %p79, %p80
      %p83 = scmp.ne.s32.totalorder %s68, %s82
      %p84 = scmp.eq.s32.totalorder %s37, 0
      %p85 = por %p83, %p84
      %s87 = sadd.s32 %s86, 1
      %p90 = scmp.eq.s32.totalorder %s31, 1
      %p91 = scmp.ne.s32.totalorder %s86, %s88
      %p92 = scmp.eq.s32.totalorder %s31, 0
      %p93 = por %p91, %p92
      %p94 = scmp.ne.s32.totalorder %s86, %s88
      %p95 = scmp.eq.s32.totalorder %s36, 1
      %p96 = por %p94, %p95
      %p97 = scmp.ne.s32.totalorder %s88, %s89
      %p98 = scmp.eq.s32.totalorder %s36, 0
      %p99 = por %p97, %p98
      %p100 = scmp.ne.s32.totalorder %s88, %s89
      %p101 = scmp.eq.s32.totalorder %s37, 1
      %p102 = por %p100, %p101
      %p104 = scmp.ne.s32.totalorder %s89, %s103
      %p105 = scmp.eq.s32.totalorder %s37, 0
      %p106 = por %p104, %p105
      %s108 = sadd.s32 %s107, 1
      %p111 = scmp.eq.s32.totalorder %s31, 1
      %p112 = scmp.ne.s32.totalorder %s107, %s109
      %p113 = scmp.eq.s32.totalorder %s31, 0
      %p114 = por %p112, %p113
      %p115 = scmp.ne.s32.totalorder %s107, %s109
      %p116 = scmp.eq.s32.totalorder %s36, 1
      %p117 = por %p115, %p116
      %p118 = scmp.ne.s32.totalorder %s109, %s110
      %p119 = scmp.eq.s32.totalorder %s36, 0
      %p120 = por %p118, %p119
      %p121 = scmp.ne.s32.totalorder %s109, %s110
      %p122 = scmp.eq.s32.totalorder %s37, 1
      %p123 = por %p121, %p122
      %p125 = scmp.ne.s32.totalorder %s110, %s124
      %p126 = scmp.eq.s32.totalorder %s37, 0
      %p127 = por %p125, %p126
      %s129 = sadd.s32 %s128, 1
      %p132 = scmp.eq.s32.totalorder %s31, 1
      %p133 = scmp.ne.s32.totalorder %s128, %s130
      %p134 = scmp.eq.s32.totalorder %s31, 0
      %p135 = por %p133, %p134
      %p136 = scmp.ne.s32.totalorder %s128, %s130
      %p137 = scmp.eq.s32.totalorder %s36, 1
      %p138 = por %p136, %p137
      %p139 = scmp.ne.s32.totalorder %s130, %s131
      %p140 = scmp.eq.s32.totalorder %s36, 0
      %p141 = por %p139, %p140
      %p142 = scmp.ne.s32.totalorder %s130, %s131
      %p143 = scmp.eq.s32.totalorder %s37, 1
      %p144 = por %p142, %p143
      %p146 = scmp.ne.s32.totalorder %s131, %s145
      %p147 = scmp.eq.s32.totalorder %s37, 0
      %p148 = por %p146, %p147
      %s150 = sadd.s32 %s149, 1
      %p153 = scmp.eq.s32.totalorder %s31, 1
      %p154 = scmp.ne.s32.totalorder %s149, %s151
      %p155 = scmp.eq.s32.totalorder %s31, 0
      %p156 = por %p154, %p155
      %p157 = scmp.ne.s32.totalorder %s149, %s151
      %p158 = scmp.eq.s32.totalorder %s36, 1
      %p159 = por %p157, %p158
      %p160 = scmp.ne.s32.totalorder %s151, %s152
      %p161 = scmp.eq.s32.totalorder %s36, 0
      %p162 = por %p160, %p161
      %p163 = scmp.ne.s32.totalorder %s151, %s152
      %p164 = scmp.eq.s32.totalorder %s37, 1
      %p165 = por %p163, %p164
      %p167 = scmp.ne.s32.totalorder %s152, %s166
      %p168 = scmp.eq.s32.totalorder %s37, 0
      %p169 = por %p167, %p168
      %s171 = sadd.s32 %s170, 1
      %p174 = scmp.eq.s32.totalorder %s31, 1
      %p175 = scmp.ne.s32.totalorder %s170, %s172
      %p176 = scmp.eq.s32.totalorder %s31, 0
      %p177 = por %p175, %p176
      %p178 = scmp.ne.s32.totalorder %s170, %s172
      %p179 = scmp.eq.s32.totalorder %s36, 1
      %p180 = por %p178, %p179
      %p181 = scmp.ne.s32.totalorder %s172, %s173
      %p182 = scmp.eq.s32.totalorder %s36, 0
      %p183 = por %p181, %p182
      %p184 = scmp.ne.s32.totalorder %s172, %s173
      %p185 = scmp.eq.s32.totalorder %s37, 1
      %p186 = por %p184, %p185
      %p188 = scmp.ne.s32.totalorder %s173, %s187
      %p189 = scmp.eq.s32.totalorder %s37, 0
      %p190 = por %p188, %p189
      %s192 = sadd.s32 %s191, 1
      %p195 = scmp.eq.s32.totalorder %s31, 1
      %p196 = scmp.ne.s32.totalorder %s191, %s193
      %p197 = scmp.eq.s32.totalorder %s31, 0
      %p198 = por %p196, %p197
      %p199 = scmp.ne.s32.totalorder %s191, %s193
      %p200 = scmp.eq.s32.totalorder %s36, 1
      %p201 = por %p199, %p200
      %p202 = scmp.ne.s32.totalorder %s193, %s194
      %p203 = scmp.eq.s32.totalorder %s36, 0
      %p204 = por %p202, %p203
      %p205 = scmp.ne.s32.totalorder %s193, %s194
      %p206 = scmp.eq.s32.totalorder %s37, 1
      %p207 = por %p205, %p206
      %p209 = scmp.ne.s32.totalorder %s194, %s208
      %p210 = scmp.eq.s32.totalorder %s37, 0
      %p211 = por %p209, %p210
      %s213 = sadd.s32 %s212, 1
      %p216 = scmp.eq.s32.totalorder %s31, 1
      %p217 = scmp.ne.s32.totalorder %s212, %s214
      %p218 = scmp.eq.s32.totalorder %s31, 0
      %p219 = por %p217, %p218
      %p220 = scmp.ne.s32.totalorder %s212, %s214
      %p221 = scmp.eq.s32.totalorder %s36, 1
      %p222 = por %p220, %p221
      %p223 = scmp.ne.s32.totalorder %s214, %s215
      %p224 = scmp.eq.s32.totalorder %s36, 0
      %p225 = por %p223, %p224
      %p226 = scmp.ne.s32.totalorder %s214, %s215
      %p227 = scmp.eq.s32.totalorder %s37, 1
      %p228 = por %p226, %p227
      %p230 = scmp.ne.s32.totalorder %s215, %s229
      %p231 = scmp.eq.s32.totalorder %s37, 0
      %p232 = por %p230, %p231
      %s234 = sadd.s32 %s233, 1
      %p237 = scmp.eq.s32.totalorder %s31, 1
      %p238 = scmp.ne.s32.totalorder %s233, %s235
      %p239 = scmp.eq.s32.totalorder %s31, 0
      %p240 = por %p238, %p239
      %p241 = scmp.ne.s32.totalorder %s233, %s235
      %p242 = scmp.eq.s32.totalorder %s36, 1
      %p243 = por %p241, %p242
      %p244 = scmp.ne.s32.totalorder %s235, %s236
      %p245 = scmp.eq.s32.totalorder %s36, 0
      %p246 = por %p244, %p245
      %p247 = scmp.ne.s32.totalorder %s235, %s236
      %p248 = scmp.eq.s32.totalorder %s37, 1
      %p249 = por %p247, %p248
      %p251 = scmp.ne.s32.totalorder %s236, %s250
      %p252 = scmp.eq.s32.totalorder %s37, 0
      %p253 = por %p251, %p252
      %s255 = sadd.s32 %s254, 1
      %p258 = scmp.eq.s32.totalorder %s31, 1
      %p259 = scmp.ne.s32.totalorder %s254, %s256
      %p260 = scmp.eq.s32.totalorder %s31, 0
      %p261 = por %p259, %p260
      %p262 = scmp.ne.s32.totalorder %s254, %s256
      %p263 = scmp.eq.s32.totalorder %s36, 1
      %p264 = por %p262, %p263
      %p265 = scmp.ne.s32.totalorder %s256, %s257
      %p266 = scmp.eq.s32.totalorder %s36, 0
      %p267 = por %p265, %p266
      %p268 = scmp.ne.s32.totalorder %s256, %s257
      %p269 = scmp.eq.s32.totalorder %s37, 1
      %p270 = por %p268, %p269
      %p272 = scmp.ne.s32.totalorder %s257, %s271
      %p273 = scmp.eq.s32.totalorder %s37, 0
      %p274 = por %p272, %p273
      %s276 = sadd.s32 %s275, 1
      %p279 = scmp.eq.s32.totalorder %s31, 1
      %p280 = scmp.ne.s32.totalorder %s275, %s277
      %p281 = scmp.eq.s32.totalorder %s31, 0
      %p282 = por %p280, %p281
      %p283 = scmp.ne.s32.totalorder %s275, %s277
      %p284 = scmp.eq.s32.totalorder %s36, 1
      %p285 = por %p283, %p284
      %p286 = scmp.ne.s32.totalorder %s277, %s278
      %p287 = scmp.eq.s32.totalorder %s36, 0
      %p288 = por %p286, %p287
      %p289 = scmp.ne.s32.totalorder %s277, %s278
      %p290 = scmp.eq.s32.totalorder %s37, 1
      %p291 = por %p289, %p290
      %p293 = scmp.ne.s32.totalorder %s278, %s292
      %p294 = scmp.eq.s32.totalorder %s37, 0
      %p295 = por %p293, %p294
      %s297 = sadd.s32 %s296, 1
      %p300 = scmp.eq.s32.totalorder %s31, 1
      %p301 = scmp.ne.s32.totalorder %s296, %s298
      %p302 = scmp.eq.s32.totalorder %s31, 0
      %p303 = por %p301, %p302
      %p304 = scmp.ne.s32.totalorder %s296, %s298
      %p305 = scmp.eq.s32.totalorder %s36, 1
      %p306 = por %p304, %p305
      %p307 = scmp.ne.s32.totalorder %s298, %s299
      %p308 = scmp.eq.s32.totalorder %s36, 0
      %p309 = por %p307, %p308
      %p310 = scmp.ne.s32.totalorder %s298, %s299
      %p311 = scmp.eq.s32.totalorder %s37, 1
      %p312 = por %p310, %p311
      %p314 = scmp.ne.s32.totalorder %s299, %s313
      %p315 = scmp.eq.s32.totalorder %s37, 0
      %p316 = por %p314, %p315
      %s317 = ssub.s32 %s31, %s38
      %p318 = scmp.eq.s32.totalorder %s317, 0
      %s320 = sadd.s32 %s319, 1
      %s321 = scalar_select %p318, %s319, %s320
      %p324 = pneg %p318
      %p325 = scmp.eq.s32.totalorder %s31, 1
      %p326 = por %p324, %p325
      %p327 = scmp.ne.s32.totalorder %s319, %s322
      %p328 = scmp.eq.s32.totalorder %s31, 0
      %p329 = por %p327, %p328
      %p330 = scmp.ne.s32.totalorder %s319, %s322
      %p331 = scmp.eq.s32.totalorder %s36, 1
      %p332 = por %p330, %p331
      %p333 = scmp.ne.s32.totalorder %s322, %s323
      %p334 = scmp.eq.s32.totalorder %s36, 0
      %p335 = por %p333, %p334
      %p336 = scmp.ne.s32.totalorder %s322, %s323
      %p337 = scmp.eq.s32.totalorder %s37, 1
      %p338 = por %p336, %p337
      %p340 = scmp.ne.s32.totalorder %s323, %s339
      %p341 = scmp.eq.s32.totalorder %s37, 0
      %p342 = por %p340, %p341
      %p343 = scmp.le.s32.totalorder 1, %s31
      %p344 = scmp.lt.s32.totalorder %s31, 3
      %p345 = pnand %p343, %p344
      %p346 = pneg %p345
      // Predicated region
      $region9: #{tpu_custom_call.1} parent=5 // pred_check
        _
      $region10: #{tpu_custom_call.1} parent=5 // pred_check_branch
        %348 = sbr.rel (%p345) target = $region12
      $region11: #{tpu_custom_call.1} parent=5 // pred_region
        %s349 = ssub.s32 %s31, 1
        // Predicated region
        $region13: #{tpu_custom_call.1} parent=11 // pred_check
          %p350 = pneg %p78
        $region14: #{tpu_custom_call.1} parent=11 // pred_check_branch
          %352 = sbr.rel (%p350) target = $region16
        $region15: #{tpu_custom_call.1} parent=11 // pred_region
          %s354 = ssub.s32 16, 16
          %355 = vsyncadd [#allocation6], %s354
          %s357 = sshll.u32 [#allocation5], 4
          %s358 = int_to_ptr.vmem [resolvable:$true] %s357
          %360 = dma.hbm_to_vmem [thread:$0]  %s1, 16, %s358, [#allocation6]
        $region16: #{tpu_custom_call.1} parent=11 // pred_fallthru
          _
        // Predicated region
        $region17: #{tpu_custom_call.1} parent=11 // pred_check
          %p361 = pneg %p99
        $region18: #{tpu_custom_call.1} parent=11 // pred_check_branch
          %363 = sbr.rel (%p361) target = $region20
        $region19: #{tpu_custom_call.1} parent=11 // pred_region
          %s365 = ssub.s32 16, 16
          %366 = vsyncadd [#allocation6], %s365
          %s368 = sshll.u32 [#allocation7], 4
          %s369 = int_to_ptr.vmem [resolvable:$true] %s368
          %371 = dma.hbm_to_vmem [thread:$0]  %s2, 16, %s369, [#allocation6]
        $region20: #{tpu_custom_call.1} parent=11 // pred_fallthru
          _
        // Predicated region
        $region21: #{tpu_custom_call.1} parent=11 // pred_check
          %p372 = pneg %p120
        $region22: #{tpu_custom_call.1} parent=11 // pred_check_branch
          %374 = sbr.rel (%p372) target = $region24
        $region23: #{tpu_custom_call.1} parent=11 // pred_region
          %s376 = ssub.s32 256, 256
          %377 = vsyncadd [#allocation9], %s376
          %s378 = sshll.u32 [#allocation8], 4
          %s379 = int_to_ptr.vmem [resolvable:$true] %s378
          %384 = dma.hbm_to_vmem [thread:$0]  %s3, 256, %s379, [#allocation9], 64, 64, 4
        $region24: #{tpu_custom_call.1} parent=11 // pred_fallthru
          _
        // Predicated region
        $region25: #{tpu_custom_call.1} parent=11 // pred_check
          %p385 = pneg %p141
        $region26: #{tpu_custom_call.1} parent=11 // pred_check_branch
          %387 = sbr.rel (%p385) target = $region28
        $region27: #{tpu_custom_call.1} parent=11 // pred_region
          %s389 = ssub.s32 512, 512
          %390 = vsyncadd [#allocation9], %s389
          %s391 = sshll.u32 [#allocation10], 4
          %s392 = int_to_ptr.vmem [resolvable:$true] %s391
          %397 = dma.hbm_to_vmem [thread:$0]  %s4, 512, %s392, [#allocation9], 128, 128, 8
        $region28: #{tpu_custom_call.1} parent=11 // pred_fallthru
          _
        // Predicated region
        $region29: #{tpu_custom_call.1} parent=11 // pred_check
          %p398 = pneg %p162
        $region30: #{tpu_custom_call.1} parent=11 // pred_check_branch
          %400 = sbr.rel (%p398) target = $region32
        $region31: #{tpu_custom_call.1} parent=11 // pred_region
          %s402 = ssub.s32 64, 64
          %403 = vsyncadd [#allocation12], %s402
          %s405 = sshll.u32 [#allocation11], 4
          %s406 = int_to_ptr.vmem [resolvable:$true] %s405
          %408 = dma.hbm_to_vmem [thread:$0]  %s5, 64, %s406, [#allocation12]
        $region32: #{tpu_custom_call.1} parent=11 // pred_fallthru
          _
        // Predicated region
        $region33: #{tpu_custom_call.1} parent=11 // pred_check
          %p409 = pneg %p183
        $region34: #{tpu_custom_call.1} parent=11 // pred_check_branch
          %411 = sbr.rel (%p409) target = $region36
        $region35: #{tpu_custom_call.1} parent=11 // pred_region
          %s413 = ssub.s32 128, 128
          %414 = vsyncadd [#allocation12], %s413
          %s416 = sshll.u32 [#allocation13], 4
          %s417 = int_to_ptr.vmem [resolvable:$true] %s416
          %419 = dma.hbm_to_vmem [thread:$0]  %s6, 128, %s417, [#allocation12]
        $region36: #{tpu_custom_call.1} parent=11 // pred_fallthru
          _
        // Predicated region
        $region37: #{tpu_custom_call.1} parent=11 // pred_check
          %p420 = pneg %p204
        $region38: #{tpu_custom_call.1} parent=11 // pred_check_branch
          %422 = sbr.rel (%p420) target = $region40
        $region39: #{tpu_custom_call.1} parent=11 // pred_region
          %s424 = ssub.s32 16, 16
          %425 = vsyncadd [#allocation15], %s424
          %s427 = sshll.u32 [#allocation14], 4
          %s428 = int_to_ptr.vmem [resolvable:$true] %s427
          %430 = dma.hbm_to_vmem [thread:$0]  %s7, 16, %s428, [#allocation15]
        $region40: #{tpu_custom_call.1} parent=11 // pred_fallthru
          _
        // Predicated region
        $region41: #{tpu_custom_call.1} parent=11 // pred_check
          %p431 = pneg %p225
        $region42: #{tpu_custom_call.1} parent=11 // pred_check_branch
          %433 = sbr.rel (%p431) target = $region44
        $region43: #{tpu_custom_call.1} parent=11 // pred_region
          %s435 = ssub.s32 16, 16
          %436 = vsyncadd [#allocation15], %s435
          %s438 = sshll.u32 [#allocation16], 4
          %s439 = int_to_ptr.vmem [resolvable:$true] %s438
          %441 = dma.hbm_to_vmem [thread:$0]  %s8, 16, %s439, [#allocation15]
        $region44: #{tpu_custom_call.1} parent=11 // pred_fallthru
          _
        // Predicated region
        $region45: #{tpu_custom_call.1} parent=11 // pred_check
          %p442 = pneg %p246
        $region46: #{tpu_custom_call.1} parent=11 // pred_check_branch
          %444 = sbr.rel (%p442) target = $region48
        $region47: #{tpu_custom_call.1} parent=11 // pred_region
          %s446 = ssub.s32 256, 256
          %447 = vsyncadd [#allocation18], %s446
          %s448 = sshll.u32 [#allocation17], 4
          %s449 = int_to_ptr.vmem [resolvable:$true] %s448
          %454 = dma.hbm_to_vmem [thread:$0]  %s9, 256, %s449, [#allocation18], 64, 64, 4
        $region48: #{tpu_custom_call.1} parent=11 // pred_fallthru
          _
        // Predicated region
        $region49: #{tpu_custom_call.1} parent=11 // pred_check
          %p455 = pneg %p267
        $region50: #{tpu_custom_call.1} parent=11 // pred_check_branch
          %457 = sbr.rel (%p455) target = $region52
        $region51: #{tpu_custom_call.1} parent=11 // pred_region
          %s459 = ssub.s32 16, 16
          %460 = vsyncadd [#allocation18], %s459
          %s462 = sshll.u32 [#allocation19], 4
          %s463 = int_to_ptr.vmem [resolvable:$true] %s462
          %465 = dma.hbm_to_vmem [thread:$0]  %s10, 16, %s463, [#allocation18]
        $region52: #{tpu_custom_call.1} parent=11 // pred_fallthru
          _
        // Predicated region
        $region53: #{tpu_custom_call.1} parent=11 // pred_check
          %p466 = pneg %p288
        $region54: #{tpu_custom_call.1} parent=11 // pred_check_branch
          %468 = sbr.rel (%p466) target = $region56
        $region55: #{tpu_custom_call.1} parent=11 // pred_region
          %s470 = ssub.s32 1024, 1024
          %471 = vsyncadd [#allocation21], %s470
          %s472 = sshll.u32 [#allocation20], 4
          %s473 = int_to_ptr.vmem [resolvable:$true] %s472
          %478 = dma.hbm_to_vmem [thread:$0]  %s11, 1024, %s473, [#allocation21], 64, 64, 4
        $region56: #{tpu_custom_call.1} parent=11 // pred_fallthru
          _
        // Predicated region
        $region57: #{tpu_custom_call.1} parent=11 // pred_check
          %p479 = pneg %p309
        $region58: #{tpu_custom_call.1} parent=11 // pred_check_branch
          %481 = sbr.rel (%p479) target = $region60
        $region59: #{tpu_custom_call.1} parent=11 // pred_region
          %s483 = ssub.s32 16, 16
          %484 = vsyncadd [#allocation21], %s483
          %s486 = sshll.u32 [#allocation22], 4
          %s487 = int_to_ptr.vmem [resolvable:$true] %s486
          %489 = dma.hbm_to_vmem [thread:$0]  %s12, 16, %s487, [#allocation21]
        $region60: #{tpu_custom_call.1} parent=11 // pred_fallthru
          _
      $region12: #{tpu_custom_call.1} parent=5 // pred_fallthru
        _
      %p490 = scmp.lt.s32.totalorder %s31, 2
      // Predicated region
      $region61: #{tpu_custom_call.1} parent=5 // pred_check
        %p491 = pneg %p490
      $region62: #{tpu_custom_call.1} parent=5 // pred_check_branch
        %493 = sbr.rel (%p491) target = $region64
      $region63: #{tpu_custom_call.1} parent=5 // pred_region
        // Predicated region
        $region65: #{tpu_custom_call.1} parent=63 // pred_check
          %p494 = pneg %p51
        $region66: #{tpu_custom_call.1} parent=63 // pred_check_branch
          %496 = sbr.rel (%p494) target = $region68
        $region67: #{tpu_custom_call.1} parent=63 // pred_region
          %s497 = sand.u32 %s41, 1
          %s498 = scalar_lea.sflag [#allocation3], %s497
          %s499 = sand.u32 %s41, 1
          %s500 = smul.addr %s499, 8
          %s501 = scalar_lea.vmem [#allocation2], %s500
          %s503 = ssub.s32 128, 128
          %504 = vsyncadd %s498, %s503
          %s505 = smul.addr %s31, 128
          %s506 = scalar_lea.hbm %s0, %s505
          %s508 = sshll.u32 %s501, 4
          %s509 = int_to_ptr.vmem [resolvable:$true] %s508
          %511 = dma.hbm_to_vmem [thread:$0]  %s506, 128, %s509, %s498
        $region68: #{tpu_custom_call.1} parent=63 // pred_fallthru
          _
      $region64: #{tpu_custom_call.1} parent=5 // pred_fallthru
        _
      %p512 = scmp.le.s32.totalorder 1, %s31
      %p513 = scmp.lt.s32.totalorder %s31, 3
      %p514 = pnand %p512, %p513
      %p515 = pneg %p514
      // Predicated region
      $region69: #{tpu_custom_call.1} parent=5 // pred_check
        _
      $region70: #{tpu_custom_call.1} parent=5 // pred_check_branch
        %517 = sbr.rel (%p514) target = $region72
      $region71: #{tpu_custom_call.1} parent=5 // pred_region
        %s518 = ssub.s32 %s31, 1
        %s519 = sand.u32 %s44, 1
        %s520 = scalar_lea.sflag [#allocation3], %s519
        %s521 = sand.u32 %s44, 1
        %s522 = smul.addr %s521, 8
        %s523 = scalar_lea.vmem [#allocation2], %s522
        // Predicated region
        $region73: #{tpu_custom_call.1} parent=71 // pred_check
          %p524 = pneg %p57
        $region74: #{tpu_custom_call.1} parent=71 // pred_check_branch
          %526 = sbr.rel (%p524) target = $region76
        $region75: #{tpu_custom_call.1} parent=71 // pred_region
          %527 = dma.done %s520, 128
        $region76: #{tpu_custom_call.1} parent=71 // pred_fallthru
          _
        // Predicated region
        $region77: #{tpu_custom_call.1} parent=71 // pred_check
          %p528 = pneg %p78
        $region78: #{tpu_custom_call.1} parent=71 // pred_check_branch
          %530 = sbr.rel (%p528) target = $region80
        $region79: #{tpu_custom_call.1} parent=71 // pred_region
          %531 = dma.done [#allocation6], 16
        $region80: #{tpu_custom_call.1} parent=71 // pred_fallthru
          _
        // Predicated region
        $region81: #{tpu_custom_call.1} parent=71 // pred_check
          %p532 = pneg %p99
        $region82: #{tpu_custom_call.1} parent=71 // pred_check_branch
          %534 = sbr.rel (%p532) target = $region84
        $region83: #{tpu_custom_call.1} parent=71 // pred_region
          %535 = dma.done [#allocation6], 16
        $region84: #{tpu_custom_call.1} parent=71 // pred_fallthru
          _
        // Predicated region
        $region85: #{tpu_custom_call.1} parent=71 // pred_check
          %p536 = pneg %p120
        $region86: #{tpu_custom_call.1} parent=71 // pred_check_branch
          %538 = sbr.rel (%p536) target = $region88
        $region87: #{tpu_custom_call.1} parent=71 // pred_region
          %539 = dma.done [#allocation9], 256
        $region88: #{tpu_custom_call.1} parent=71 // pred_fallthru
          _
        // Predicated region
        $region89: #{tpu_custom_call.1} parent=71 // pred_check
          %p540 = pneg %p141
        $region90: #{tpu_custom_call.1} parent=71 // pred_check_branch
          %542 = sbr.rel (%p540) target = $region92
        $region91: #{tpu_custom_call.1} parent=71 // pred_region
          %543 = dma.done [#allocation9], 512
        $region92: #{tpu_custom_call.1} parent=71 // pred_fallthru
          _
        // Predicated region
        $region93: #{tpu_custom_call.1} parent=71 // pred_check
          %p544 = pneg %p162
        $region94: #{tpu_custom_call.1} parent=71 // pred_check_branch
          %546 = sbr.rel (%p544) target = $region96
        $region95: #{tpu_custom_call.1} parent=71 // pred_region
          %547 = dma.done [#allocation12], 64
        $region96: #{tpu_custom_call.1} parent=71 // pred_fallthru
          _
        // Predicated region
        $region97: #{tpu_custom_call.1} parent=71 // pred_check
          %p548 = pneg %p183
        $region98: #{tpu_custom_call.1} parent=71 // pred_check_branch
          %550 = sbr.rel (%p548) target = $region100
        $region99: #{tpu_custom_call.1} parent=71 // pred_region
          %551 = dma.done [#allocation12], 128
        $region100: #{tpu_custom_call.1} parent=71 // pred_fallthru
          _
        // Predicated region
        $region101: #{tpu_custom_call.1} parent=71 // pred_check
          %p552 = pneg %p204
        $region102: #{tpu_custom_call.1} parent=71 // pred_check_branch
          %554 = sbr.rel (%p552) target = $region104
        $region103: #{tpu_custom_call.1} parent=71 // pred_region
          %555 = dma.done [#allocation15], 16
        $region104: #{tpu_custom_call.1} parent=71 // pred_fallthru
          _
        // Predicated region
        $region105: #{tpu_custom_call.1} parent=71 // pred_check
          %p556 = pneg %p225
        $region106: #{tpu_custom_call.1} parent=71 // pred_check_branch
          %558 = sbr.rel (%p556) target = $region108
        $region107: #{tpu_custom_call.1} parent=71 // pred_region
          %559 = dma.done [#allocation15], 16
        $region108: #{tpu_custom_call.1} parent=71 // pred_fallthru
          _
        // Predicated region
        $region109: #{tpu_custom_call.1} parent=71 // pred_check
          %p560 = pneg %p246
        $region110: #{tpu_custom_call.1} parent=71 // pred_check_branch
          %562 = sbr.rel (%p560) target = $region112
        $region111: #{tpu_custom_call.1} parent=71 // pred_region
          %563 = dma.done [#allocation18], 256
        $region112: #{tpu_custom_call.1} parent=71 // pred_fallthru
          _
        // Predicated region
        $region113: #{tpu_custom_call.1} parent=71 // pred_check
          %p564 = pneg %p267
        $region114: #{tpu_custom_call.1} parent=71 // pred_check_branch
          %566 = sbr.rel (%p564) target = $region116
        $region115: #{tpu_custom_call.1} parent=71 // pred_region
          %567 = dma.done [#allocation18], 16
        $region116: #{tpu_custom_call.1} parent=71 // pred_fallthru
          _
        // Predicated region
        $region117: #{tpu_custom_call.1} parent=71 // pred_check
          %p568 = pneg %p288
        $region118: #{tpu_custom_call.1} parent=71 // pred_check_branch
          %570 = sbr.rel (%p568) target = $region120
        $region119: #{tpu_custom_call.1} parent=71 // pred_region
          %571 = dma.done [#allocation21], 1024
        $region120: #{tpu_custom_call.1} parent=71 // pred_fallthru
          _
        // Predicated region
        $region121: #{tpu_custom_call.1} parent=71 // pred_check
          %p572 = pneg %p309
        $region122: #{tpu_custom_call.1} parent=71 // pred_check_branch
          %574 = sbr.rel (%p572) target = $region124
        $region123: #{tpu_custom_call.1} parent=71 // pred_region
          %575 = dma.done [#allocation21], 16
        $region124: #{tpu_custom_call.1} parent=71 // pred_fallthru
          _
        %s576 = sand.u32 %s44, 1
        %s577 = scalar_lea.sflag [#allocation3], %s576
        %s578 = sand.u32 %s44, 1
        %s579 = smul.addr %s578, 8
        %s580 = scalar_lea.vmem [#allocation2], %s579
        %p581 = pneg %p57
        %p582 = pneg %p54
        %p583 = pneg %p78
        %p584 = pneg %p75
        %p585 = pneg %p99
        %p586 = pneg %p96
        %p587 = pneg %p120
        %p588 = pneg %p117
        %p589 = pneg %p141
        %p590 = pneg %p138
        %p591 = pneg %p162
        %p592 = pneg %p159
        %p593 = pneg %p183
        %p594 = pneg %p180
        %p595 = pneg %p204
        %p596 = pneg %p201
        %p597 = pneg %p225
        %p598 = pneg %p222
        %p599 = pneg %p246
        %p600 = pneg %p243
        %p601 = pneg %p267
        %p602 = pneg %p264
        %p603 = pneg %p288
        %p604 = pneg %p285
        %p605 = pneg %p309
        %p606 = pneg %p306
        %p607 = pneg %p335
        %p608 = pneg %p332
        %s609 = sand.u32 %s322, 1
        %s610 = scalar_lea.sflag [#allocation4], %s609
        %s611 = sand.u32 %s322, 1
        %s612 = smul.addr %s611, 8
        %s613 = scalar_lea.vmem [#allocation23], %s612
        %v615 = vld [vmem:[%s523] sm:$0xff]
        %v616 = vld [vmem:[#allocation5] sm:$0x1]
        %v617 = vld [vmem:[#allocation7] sm:$0x1]
        %vm618 = vcmask 261120
        %v619 = vsel %vm618, %v615, 0.0
        %620 = vadd.xlane.f32.xlu0 %v619
        %v621 = vpop.xlane.xlu0 %620
        %v622 = vmul.f32 %v615, %v615
        %v623 = vsel %vm618, %v622, 0.0
        %624 = vadd.xlane.f32.xlu0 %v623
        %v625 = vpop.xlane.xlu0 %624
        %v626 = vmul.f32 %v621, 0.03125
        %v627 = vmul.f32 %v625, 0.03125
        %v628 = vmul.f32 %v626, %v626
        %v629 = vsub.f32 %v627, %v628
        %v630 = vsub.f32 %v615, %v626
        %v631 = vadd.f32 %v629, 1e-05
        %v632 = vrsqrt.pop %v631
        %v633 = vmul.f32 %v630, %v632
        %v635 = vlaneseq
        %v636 = vshrl.u32 %v635, 7
        %v637 = vsub.s32 0, %v636
        %v638 = vrot.slane %v616, %v637
        %v640 = vmul.f32 %v633, %v638
        %v642 = vlaneseq
        %v643 = vshrl.u32 %v642, 7
        %v644 = vsub.s32 0, %v643
        %v645 = vrot.slane %v617, %v644
        %v647 = vadd.f32 %v640, %v645
        %v648 = vpack.c.bf16 %v647, %v647
        %v649 = vld [vmem:[#allocation8] sm:$0xf]
        %v650 = vld [vmem:[#allocation8 + $0x4] sm:$0xf]
        %v651 = vld [vmem:[#allocation8 + $0x8] sm:$0xf]
        %v652 = vld [vmem:[#allocation8 + $0xc] sm:$0xf]
        %v653 = vld [vmem:[#allocation11] sm:$0xf]
        %v654 = vld [vmem:[#allocation10] sm:$0xff]
        %v655 = vld [vmem:[#allocation10 + $0x8] sm:$0xff]
        %v656 = vld [vmem:[#allocation10 + $0x10] sm:$0xff]
        %v657 = vld [vmem:[#allocation10 + $0x18] sm:$0xff]
        %v658 = vld [vmem:[#allocation13] sm:$0xff]
        %660 = vset.pattern.permute.xlu0 0
        %661 = vperm.xlu0 %660, %v654
        %v662 = vpop.permute.xlu0 %661
        %665 = vset.pattern.permute.xlu0 0
        %666 = vperm.xlu0 %665, %v655
        %v667 = vpop.permute.xlu0 %666
        %670 = vset.pattern.permute.xlu0 0
        %671 = vperm.xlu0 %670, %v656
        %v672 = vpop.permute.xlu0 %671
        %675 = vset.pattern.permute.xlu0 0
        %676 = vperm.xlu0 %675, %v657
        %v677 = vpop.permute.xlu0 %676
        %v683 = vunpack.c.l.b16 %v649
        %v684 = vunpack.c.l.b16 %v650
        %v685 = vunpack.c.l.b16 %v651
        %v686 = vunpack.c.l.b16 %v652
        %v687 = vpack.c.b16 %v684, %v683
        %v688 = vpack.c.b16 %v686, %v685
        %vm689 = vcmask 64512
        %v691 = vsel %vm689, %v687, 0
        %v694 = vsel %vm689, %v688, 0
        %vm696 = vcmask 1043456
        %v698 = vsel %vm696, %v648, 0
        %700 = vmatprep.subr.bf16.mxu0 0
        %701 = vmatpush1.bf16.msra.mxu0 %v698
        %702 = vmatprep.subr.bf16.mxu0 0
        %703 = vmatpush1.bf16.msra.mxu0 0
        %704 = vmatprep.subr.bf16.mxu0 0
        %705 = vmatpush1.bf16.msra.mxu0 0
        %706 = vmatprep.subr.bf16.mxu0 0
        %707 = vmatpush1.bf16.msra.mxu0 0
        %708 = vmatprep.subr.bf16.mxu0 0
        %709 = vmatpush1.bf16.msra.mxu0 0
        %710 = vmatprep.subr.bf16.mxu0 0
        %711 = vmatpush1.bf16.msra.mxu0 0
        %712 = vmatprep.subr.bf16.mxu0 0
        %713 = vmatpush1.bf16.msra.mxu0 0
        %714 = vmatprep.subr.bf16.mxu0 0
        %715 = vmatpush1.bf16.msra.mxu0 0
        %716 = vmatprep.subr.bf16.mxu0 0
        %717 = vmatpush1.bf16.msra.mxu0 0
        %718 = vmatprep.subr.bf16.mxu0 0
        %719 = vmatpush1.bf16.msra.mxu0 0
        %720 = vmatprep.subr.bf16.mxu0 0
        %721 = vmatpush1.bf16.msra.mxu0 0
        %722 = vmatprep.subr.bf16.mxu0 0
        %723 = vmatpush1.bf16.msra.mxu0 0
        %724 = vmatprep.subr.bf16.mxu0 0
        %725 = vmatpush1.bf16.msra.mxu0 0
        %726 = vmatprep.subr.bf16.mxu0 0
        %727 = vmatpush1.bf16.msra.mxu0 0
        %728 = vmatprep.subr.bf16.mxu0 0
        %729 = vmatpush1.bf16.msra.mxu0 0
        %730 = vmatprep.subr.bf16.mxu0 0
        %731 = vmatpush1.bf16.msra.mxu0 0
        %732 = vmatprep.mubr.bf16.mxu0 0
        %733 = vmatmul.mubr.bf16.gmra.mrb[0].mxu0 %v691
        %v734 = vpop.f32.mrb[0].mxu0
        %v735 = vadd.f32 %v662, %v734
        %v736 = vpop.f32.mrb[0].mxu0
        %v737 = vpop.f32.mrb[0].mxu0
        %v738 = vadd.f32 %v667, %v737
        %v739 = vpop.f32.mrb[0].mxu0
        %740 = vmatprep.mubr.bf16.mxu0 0
        %741 = vmatmul.mubr.bf16.gmra.mrb[0].mxu0 %v694
        %v742 = vpop.f32.mrb[0].mxu0
        %v743 = vadd.f32 %v672, %v742
        %v744 = vpop.f32.mrb[0].mxu0
        %v745 = vpop.f32.mrb[0].mxu0
        %v746 = vadd.f32 %v677, %v745
        %v747 = vpop.f32.mrb[0].mxu0
        %748 = vdwg.mxu0
        %v749 = vmul.f32 %v735, 0.5
        %v750 = vmul.f32 %v738, 0.5
        %v751 = vmul.f32 %v743, 0.5
        %v752 = vmul.f32 %v746, 0.5
        %v753 = vmul.f32 %v735, 0.70710677
        %v754 = vmul.f32 %v738, 0.70710677
        %v755 = vmul.f32 %v743, 0.70710677
        %v756 = vmul.f32 %v746, 0.70710677
        %vm757 = vcmp.ge.f32.partialorder %v753, 0.0
        %vm758 = vcmp.ge.f32.partialorder %v754, 0.0
        %vm759 = vcmp.ge.f32.partialorder %v755, 0.0
        %vm760 = vcmp.ge.f32.partialorder %v756, 0.0
        %v761 = vsel %vm757, 1.0, -1.0
        %v762 = vsel %vm758, 1.0, -1.0
        %v763 = vsel %vm759, 1.0, -1.0
        %v764 = vsel %vm760, 1.0, -1.0
        %v765 = vand.u32 2147483647, %v753
        %v766 = vand.u32 2147483647, %v754
        %v767 = vand.u32 2147483647, %v755
        %v768 = vand.u32 2147483647, %v756
        %v769 = vmul.f32 %v765, 0.3275911
        %v770 = vmul.f32 %v766, 0.3275911
        %v771 = vmul.f32 %v767, 0.3275911
        %v772 = vmul.f32 %v768, 0.3275911
        %v773 = vadd.f32 %v769, 1.0
        %v774 = vadd.f32 %v770, 1.0
        %v775 = vadd.f32 %v771, 1.0
        %v776 = vadd.f32 %v772, 1.0
        %v777 = vrcp.pop %v773
        %v778 = vrcp.pop %v774
        %v779 = vrcp.pop %v775
        %v780 = vrcp.pop %v776
        %v781 = vmul.f32 %v777, 1.0614054
        %v782 = vmul.f32 %v778, 1.0614054
        %v783 = vmul.f32 %v779, 1.0614054
        %v784 = vmul.f32 %v780, 1.0614054
        %v785 = vadd.f32 %v781, -1.4531521
        %v786 = vadd.f32 %v782, -1.4531521
        %v787 = vadd.f32 %v783, -1.4531521
        %v788 = vadd.f32 %v784, -1.4531521
        %v789 = vmul.f32 %v785, %v777
        %v790 = vmul.f32 %v786, %v778
        %v791 = vmul.f32 %v787, %v779
        %v792 = vmul.f32 %v788, %v780
        %v793 = vadd.f32 %v789, 1.4214138
        %v794 = vadd.f32 %v790, 1.4214138
        %v795 = vadd.f32 %v791, 1.4214138
        %v796 = vadd.f32 %v792, 1.4214138
        %v797 = vmul.f32 %v793, %v777
        %v798 = vmul.f32 %v794, %v778
        %v799 = vmul.f32 %v795, %v779
        %v800 = vmul.f32 %v796, %v780
        %v801 = vadd.f32 %v797, -0.28449672
        %v802 = vadd.f32 %v798, -0.28449672
        %v803 = vadd.f32 %v799, -0.28449672
        %v804 = vadd.f32 %v800, -0.28449672
        %v805 = vmul.f32 %v801, %v777
        %v806 = vmul.f32 %v802, %v778
        %v807 = vmul.f32 %v803, %v779
        %v808 = vmul.f32 %v804, %v780
        %v809 = vadd.f32 %v805, 0.2548296
        %v810 = vadd.f32 %v806, 0.2548296
        %v811 = vadd.f32 %v807, 0.2548296
        %v812 = vadd.f32 %v808, 0.2548296
        %v813 = vmul.f32 %v809, %v777
        %v814 = vmul.f32 %v810, %v778
        %v815 = vmul.f32 %v811, %v779
        %v816 = vmul.f32 %v812, %v780
        %v817 = vsub.f32 0.0, %v765
        %v818 = vsub.f32 0.0, %v766
        %v819 = vsub.f32 0.0, %v767
        %v820 = vsub.f32 0.0, %v768
        %v821 = vmul.f32 %v817, %v765
        %v822 = vmul.f32 %v818, %v766
        %v823 = vmul.f32 %v819, %v767
        %v824 = vmul.f32 %v820, %v768
        %v825 = vmul.f32 %v821, 1.442695
        %v826 = vpow.pop %v825
        %v827 = vmul.f32 %v822, 1.442695
        %v828 = vpow.pop %v827
        %v829 = vmul.f32 %v823, 1.442695
        %v830 = vpow.pop %v829
        %v831 = vmul.f32 %v824, 1.442695
        %v832 = vpow.pop %v831
        %v833 = vmul.f32 %v813, %v826
        %v834 = vmul.f32 %v814, %v828
        %v835 = vmul.f32 %v815, %v830
        %v836 = vmul.f32 %v816, %v832
        %v837 = vsub.f32 1.0, %v833
        %v838 = vsub.f32 1.0, %v834
        %v839 = vsub.f32 1.0, %v835
        %v840 = vsub.f32 1.0, %v836
        %v841 = vmul.f32 %v761, %v837
        %v842 = vmul.f32 %v762, %v838
        %v843 = vmul.f32 %v763, %v839
        %v844 = vmul.f32 %v764, %v840
        %v845 = vadd.f32 %v841, 1.0
        %v846 = vadd.f32 %v842, 1.0
        %v847 = vadd.f32 %v843, 1.0
        %v848 = vadd.f32 %v844, 1.0
        %v849 = vmul.f32 %v749, %v845
        %v850 = vmul.f32 %v750, %v846
        %v851 = vmul.f32 %v751, %v847
        %v852 = vmul.f32 %v752, %v848
        %v853 = vpack.c.bf16 %v850, %v849
        %v854 = vpack.c.bf16 %v852, %v851
        %v856 = vsel %vm618, %v653, 0
        %858 = vmatprep.subr.bf16.mxu0 0
        %859 = vmatpush1.bf16.msra.mxu0 %v853
        %860 = vmatprep.subr.bf16.mxu0 0
        %861 = vmatpush1.bf16.msra.mxu0 %v854
        %862 = vmatprep.subr.bf16.mxu0 0
        %863 = vmatpush1.bf16.msra.mxu0 0
        %864 = vmatprep.subr.bf16.mxu0 0
        %865 = vmatpush1.bf16.msra.mxu0 0
        %866 = vmatprep.subr.bf16.mxu0 0
        %867 = vmatpush1.bf16.msra.mxu0 0
        %868 = vmatprep.subr.bf16.mxu0 0
        %869 = vmatpush1.bf16.msra.mxu0 0
        %870 = vmatprep.subr.bf16.mxu0 0
        %871 = vmatpush1.bf16.msra.mxu0 0
        %872 = vmatprep.subr.bf16.mxu0 0
        %873 = vmatpush1.bf16.msra.mxu0 0
        %874 = vmatprep.subr.bf16.mxu0 0
        %875 = vmatpush1.bf16.msra.mxu0 0
        %876 = vmatprep.subr.bf16.mxu0 0
        %877 = vmatpush1.bf16.msra.mxu0 0
        %878 = vmatprep.subr.bf16.mxu0 0
        %879 = vmatpush1.bf16.msra.mxu0 0
        %880 = vmatprep.subr.bf16.mxu0 0
        %881 = vmatpush1.bf16.msra.mxu0 0
        %882 = vmatprep.subr.bf16.mxu0 0
        %883 = vmatpush1.bf16.msra.mxu0 0
        %884 = vmatprep.subr.bf16.mxu0 0
        %885 = vmatpush1.bf16.msra.mxu0 0
        %886 = vmatprep.subr.bf16.mxu0 0
        %887 = vmatpush1.bf16.msra.mxu0 0
        %888 = vmatprep.subr.bf16.mxu0 0
        %889 = vmatpush1.bf16.msra.mxu0 0
        %890 = vmatprep.mubr.bf16.mxu0 0
        %891 = vmatmul.mubr.bf16.gmra.mrb[0].mxu0 %v856
        %v892 = vpop.f32.mrb[0].mxu0
        %v893 = vadd.f32 0.0, %v892
        %v894 = vpop.f32.mrb[0].mxu0
        %v895 = vpop.f32.mrb[0].mxu0
        %v896 = vpop.f32.mrb[0].mxu0
        %897 = vdwg.mxu0
        %v898 = vadd.f32 %v615, %v893
        %900 = vset.pattern.permute.xlu0 0
        %901 = vperm.xlu0 %900, %v658
        %v902 = vpop.permute.xlu0 %901
        %v904 = vadd.f32 %v898, %v902
        %v905 = vld [vmem:[#allocation14] sm:$0x1]
        %v906 = vld [vmem:[#allocation16] sm:$0x1]
        %v907 = vsel %vm618, %v904, 0.0
        %908 = vadd.xlane.f32.xlu0 %v907
        %v909 = vpop.xlane.xlu0 %908
        %v910 = vmul.f32 %v904, %v904
        %v911 = vsel %vm618, %v910, 0.0
        %912 = vadd.xlane.f32.xlu0 %v911
        %v913 = vpop.xlane.xlu0 %912
        %v914 = vmul.f32 %v909, 0.03125
        %v915 = vmul.f32 %v913, 0.03125
        %v916 = vmul.f32 %v914, %v914
        %v917 = vsub.f32 %v915, %v916
        %v918 = vsub.f32 %v904, %v914
        %v919 = vadd.f32 %v917, 1e-05
        %v920 = vrsqrt.pop %v919
        %v921 = vmul.f32 %v918, %v920
        %v923 = vlaneseq
        %v924 = vshrl.u32 %v923, 7
        %v925 = vsub.s32 0, %v924
        %v926 = vrot.slane %v905, %v925
        %v928 = vmul.f32 %v921, %v926
        %v930 = vlaneseq
        %v931 = vshrl.u32 %v930, 7
        %v932 = vsub.s32 0, %v931
        %v933 = vrot.slane %v906, %v932
        %v935 = vadd.f32 %v928, %v933
        %v936 = vpack.c.bf16 %v935, %v935
        %v937 = vld [vmem:[#allocation17] sm:$0xf]
        %v938 = vld [vmem:[#allocation17 + $0x4] sm:$0xf]
        %v939 = vld [vmem:[#allocation17 + $0x8] sm:$0xf]
        %v940 = vld [vmem:[#allocation17 + $0xc] sm:$0xf]
        %v941 = vld [vmem:[#allocation19] sm:$0x1]
        %v943 = vlaneseq
        %v944 = vshrl.u32 %v943, 7
        %v945 = vsub.s32 0, %v944
        %v946 = vrot.slane %v941, %v945
        %v952 = vunpack.c.l.b16 %v937
        %v953 = vunpack.c.l.b16 %v938
        %v954 = vunpack.c.l.b16 %v939
        %v955 = vunpack.c.l.b16 %v940
        %v956 = vpack.c.b16 %v953, %v952
        %v957 = vpack.c.b16 %v955, %v954
        %v961 = vsel %vm618, %v936, 0
        %963 = vmatprep.subr.bf16.mxu0 0
        %964 = vmatpush1.bf16.msra.mxu0 %v956
        %965 = vmatprep.subr.bf16.mxu0 0
        %966 = vmatpush1.bf16.msra.mxu0 %v957
        %967 = vmatprep.subr.bf16.mxu0 0
        %968 = vmatpush1.bf16.msra.mxu0 0
        %969 = vmatprep.subr.bf16.mxu0 0
        %970 = vmatpush1.bf16.msra.mxu0 0
        %971 = vmatprep.subr.bf16.mxu0 0
        %972 = vmatpush1.bf16.msra.mxu0 0
        %973 = vmatprep.subr.bf16.mxu0 0
        %974 = vmatpush1.bf16.msra.mxu0 0
        %975 = vmatprep.subr.bf16.mxu0 0
        %976 = vmatpush1.bf16.msra.mxu0 0
        %977 = vmatprep.subr.bf16.mxu0 0
        %978 = vmatpush1.bf16.msra.mxu0 0
        %979 = vmatprep.subr.bf16.mxu0 0
        %980 = vmatpush1.bf16.msra.mxu0 0
        %981 = vmatprep.subr.bf16.mxu0 0
        %982 = vmatpush1.bf16.msra.mxu0 0
        %983 = vmatprep.subr.bf16.mxu0 0
        %984 = vmatpush1.bf16.msra.mxu0 0
        %985 = vmatprep.subr.bf16.mxu0 0
        %986 = vmatpush1.bf16.msra.mxu0 0
        %987 = vmatprep.subr.bf16.mxu0 0
        %988 = vmatpush1.bf16.msra.mxu0 0
        %989 = vmatprep.subr.bf16.mxu0 0
        %990 = vmatpush1.bf16.msra.mxu0 0
        %991 = vmatprep.subr.bf16.mxu0 0
        %992 = vmatpush1.bf16.msra.mxu0 0
        %993 = vmatprep.subr.bf16.mxu0 0
        %994 = vmatpush1.bf16.msra.mxu0 0
        %995 = vmatprep.mubr.bf16.mxu0 0
        %996 = vmatmul.mubr.bf16.gmra.mrb[0].mxu0 %v961
        %v997 = vpop.f32.mrb[0].mxu0
        %v998 = vadd.f32 %v946, %v997
        %v999 = vpop.f32.mrb[0].mxu0
        %v1000 = vpop.f32.mrb[0].mxu0
        %v1001 = vpop.f32.mrb[0].mxu0
        %1002 = vdwg.mxu0
        %v1003 = vmul.f32 %v998, 0.5
        %v1004 = vmul.f32 %v998, 0.70710677
        %vm1005 = vcmp.ge.f32.partialorder %v1004, 0.0
        %v1006 = vsel %vm1005, 1.0, -1.0
        %v1007 = vand.u32 2147483647, %v1004
        %v1008 = vmul.f32 %v1007, 0.3275911
        %v1009 = vadd.f32 %v1008, 1.0
        %v1010 = vrcp.pop %v1009
        %v1011 = vmul.f32 %v1010, 1.0614054
        %v1012 = vadd.f32 %v1011, -1.4531521
        %v1013 = vmul.f32 %v1012, %v1010
        %v1014 = vadd.f32 %v1013, 1.4214138
        %v1015 = vmul.f32 %v1014, %v1010
        %v1016 = vadd.f32 %v1015, -0.28449672
        %v1017 = vmul.f32 %v1016, %v1010
        %v1018 = vadd.f32 %v1017, 0.2548296
        %v1019 = vmul.f32 %v1018, %v1010
        %v1020 = vsub.f32 0.0, %v1007
        %v1021 = vmul.f32 %v1020, %v1007
        %v1022 = vmul.f32 %v1021, 1.442695
        %v1023 = vpow.pop %v1022
        %v1024 = vmul.f32 %v1019, %v1023
        %v1025 = vsub.f32 1.0, %v1024
        %v1026 = vmul.f32 %v1006, %v1025
        %v1027 = vadd.f32 %v1026, 1.0
        %v1028 = vmul.f32 %v1003, %v1027
        %v1029 = vpack.c.bf16 %v1028, %v1028
        %v1030 = vld [vmem:[#allocation20] sm:$0xf]
        %v1031 = vld [vmem:[#allocation20 + $0x4] sm:$0xf]
        %v1032 = vld [vmem:[#allocation20 + $0x8] sm:$0xf]
        %v1033 = vld [vmem:[#allocation20 + $0xc] sm:$0xf]
        %v1034 = vld [vmem:[#allocation20 + $0x10] sm:$0xf]
        %v1035 = vld [vmem:[#allocation20 + $0x14] sm:$0xf]
        %v1036 = vld [vmem:[#allocation20 + $0x18] sm:$0xf]
        %v1037 = vld [vmem:[#allocation20 + $0x1c] sm:$0xf]
        %v1038 = vld [vmem:[#allocation20 + $0x20] sm:$0xf]
        %v1039 = vld [vmem:[#allocation20 + $0x24] sm:$0xf]
        %v1040 = vld [vmem:[#allocation20 + $0x28] sm:$0xf]
        %v1041 = vld [vmem:[#allocation20 + $0x2c] sm:$0xf]
        %v1042 = vld [vmem:[#allocation20 + $0x30] sm:$0xf]
        %v1043 = vld [vmem:[#allocation20 + $0x34] sm:$0xf]
        %v1044 = vld [vmem:[#allocation20 + $0x38] sm:$0xf]
        %v1045 = vld [vmem:[#allocation20 + $0x3c] sm:$0xf]
        %v1046 = vld [vmem:[#allocation22] sm:$0x1]
        %v1048 = vlaneseq
        %v1049 = vshrl.u32 %v1048, 7
        %v1050 = vsub.s32 0, %v1049
        %v1051 = vrot.slane %v1046, %v1050
        %v1069 = vunpack.c.l.b16 %v1030
        %v1070 = vunpack.c.l.b16 %v1031
        %v1071 = vunpack.c.l.b16 %v1032
        %v1072 = vunpack.c.l.b16 %v1033
        %v1073 = vunpack.c.l.b16 %v1034
        %v1074 = vunpack.c.l.b16 %v1035
        %v1075 = vunpack.c.l.b16 %v1036
        %v1076 = vunpack.c.l.b16 %v1037
        %v1077 = vunpack.c.l.b16 %v1038
        %v1078 = vunpack.c.l.b16 %v1039
        %v1079 = vunpack.c.l.b16 %v1040
        %v1080 = vunpack.c.l.b16 %v1041
        %v1081 = vunpack.c.l.b16 %v1042
        %v1082 = vunpack.c.l.b16 %v1043
        %v1083 = vunpack.c.l.b16 %v1044
        %v1084 = vunpack.c.l.b16 %v1045
        %v1085 = vpack.c.b16 %v1070, %v1069
        %v1086 = vpack.c.b16 %v1072, %v1071
        %v1087 = vpack.c.b16 %v1074, %v1073
        %v1088 = vpack.c.b16 %v1076, %v1075
        %v1089 = vpack.c.b16 %v1078, %v1077
        %v1090 = vpack.c.b16 %v1080, %v1079
        %v1091 = vpack.c.b16 %v1082, %v1081
        %v1092 = vpack.c.b16 %v1084, %v1083
        %1101 = vmatprep.subr.bf16.mxu0 0
        %1102 = vmatpush1.bf16.msra.mxu0 %v1085
        %1103 = vmatprep.subr.bf16.mxu0 0
        %1104 = vmatpush1.bf16.msra.mxu0 %v1086
        %1105 = vmatprep.subr.bf16.mxu0 0
        %1106 = vmatpush1.bf16.msra.mxu0 %v1087
        %1107 = vmatprep.subr.bf16.mxu0 0
        %1108 = vmatpush1.bf16.msra.mxu0 %v1088
        %1109 = vmatprep.subr.bf16.mxu0 0
        %1110 = vmatpush1.bf16.msra.mxu0 %v1089
        %1111 = vmatprep.subr.bf16.mxu0 0
        %1112 = vmatpush1.bf16.msra.mxu0 %v1090
        %1113 = vmatprep.subr.bf16.mxu0 0
        %1114 = vmatpush1.bf16.msra.mxu0 %v1091
        %1115 = vmatprep.subr.bf16.mxu0 0
        %1116 = vmatpush1.bf16.msra.mxu0 %v1092
        %1117 = vmatprep.subr.bf16.mxu0 0
        %1118 = vmatpush1.bf16.msra.mxu0 0
        %1119 = vmatprep.subr.bf16.mxu0 0
        %1120 = vmatpush1.bf16.msra.mxu0 0
        %1121 = vmatprep.subr.bf16.mxu0 0
        %1122 = vmatpush1.bf16.msra.mxu0 0
        %1123 = vmatprep.subr.bf16.mxu0 0
        %1124 = vmatpush1.bf16.msra.mxu0 0
        %1125 = vmatprep.subr.bf16.mxu0 0
        %1126 = vmatpush1.bf16.msra.mxu0 0
        %1127 = vmatprep.subr.bf16.mxu0 0
        %1128 = vmatpush1.bf16.msra.mxu0 0
        %1129 = vmatprep.subr.bf16.mxu0 0
        %1130 = vmatpush1.bf16.msra.mxu0 0
        %1131 = vmatprep.subr.bf16.mxu0 0
        %1132 = vmatpush1.bf16.msra.mxu0 0
        %1133 = vmatprep.mubr.bf16.mxu0 0
        %1134 = vmatmul.mubr.bf16.gmra.mrb[0].mxu0 %v1029
        %v1135 = vpop.f32.mrb[0].mxu0
        %v1136 = vadd.f32 %v1051, %v1135
        %v1137 = vpop.f32.mrb[0].mxu0
        %v1138 = vpop.f32.mrb[0].mxu0
        %v1139 = vpop.f32.mrb[0].mxu0
        %1140 = vdwg.mxu0
        %v1141 = vadd.f32 %v904, %v1136
        %1142 = vst.msk [vmem:[%s613] sm:$0xff] %vm618, %v1141
        %s1143 = sand.u32 %s322, 1
        %s1144 = scalar_lea.sflag [#allocation4], %s1143
        %s1145 = sand.u32 %s322, 1
        %s1146 = smul.addr %s1145, 8
        %s1147 = scalar_lea.vmem [#allocation23], %s1146
        // Predicated region
        $region125: #{tpu_custom_call.1} parent=71 // pred_check
          %p1148 = pneg %p332
        $region126: #{tpu_custom_call.1} parent=71 // pred_check_branch
          %1150 = sbr.rel (%p1148) target = $region128
        $region127: #{tpu_custom_call.1} parent=71 // pred_region
          %s1152 = ssub.s32 128, 128
          %1153 = vsyncadd %s1144, %s1152
          %s1154 = smul.addr %s36, 128
          %s1155 = scalar_lea.hbm %s13, %s1154
          %s1157 = sshll.u32 %s1147, 4
          %s1158 = int_to_ptr.vmem [resolvable:$true] %s1157
          %1160 = dma.vmem_to_hbm [thread:$0]  %s1158, 128, %s1155, %s1144
        $region128: #{tpu_custom_call.1} parent=71 // pred_fallthru
          _
      $region72: #{tpu_custom_call.1} parent=5 // pred_fallthru
        _
      %p1161 = scmp.le.s32.totalorder 2, %s31
      // Predicated region
      $region129: #{tpu_custom_call.1} parent=5 // pred_check
        %p1162 = pneg %p1161
      $region130: #{tpu_custom_call.1} parent=5 // pred_check_branch
        %1164 = sbr.rel (%p1162) target = $region132
      $region131: #{tpu_custom_call.1} parent=5 // pred_region
        %s1165 = ssub.s32 %s31, 2
        // Predicated region
        $region133: #{tpu_custom_call.1} parent=131 // pred_check
          %p1166 = pneg %p338
        $region134: #{tpu_custom_call.1} parent=131 // pred_check_branch
          %1168 = sbr.rel (%p1166) target = $region136
        $region135: #{tpu_custom_call.1} parent=131 // pred_region
          %s1169 = sand.u32 %s323, 1
          %s1170 = scalar_lea.sflag [#allocation4], %s1169
          %s1171 = sand.u32 %s323, 1
          %s1172 = smul.addr %s1171, 8
          %s1173 = scalar_lea.vmem [#allocation23], %s1172
          %1174 = dma.done %s1170, 128
        $region136: #{tpu_custom_call.1} parent=131 // pred_fallthru
          _
      $region132: #{tpu_custom_call.1} parent=5 // pred_fallthru
        _
    $region6: #{tpu_custom_call.1} parent=1 // loop_footer
      %s35 = sadd.s32 1, %s31
    $region7: #{tpu_custom_call.1} parent=1 // loop_footer_branch
      %30 = sbr.rel target = $region3
    $region8: #{tpu_custom_call.1} parent=1 // loop_exit
      _
    %1175 = vsyncpa [#allocation3], 1
    %s1176 = scalar_lea.sflag [#allocation3], 1
    %1177 = vsyncpa %s1176, 1
    %1178 = vsyncpa [#allocation6], 1
    %1179 = vsyncpa [#allocation9], 1
    %1180 = vsyncpa [#allocation12], 1
    %1181 = vsyncpa [#allocation15], 1
    %1182 = vsyncpa [#allocation18], 1
    %1183 = vsyncpa [#allocation21], 1
    %1184 = vsyncpa [#allocation4], 1
    %s1185 = scalar_lea.sflag [#allocation4], 1
    %1186 = vsyncpa %s1185, 1

</llo_original>
